<compile_context>
chip_gen: v6e
topology: v6e:2x2x1
jax: 0.10.0
libtpu: 0.0.40
codegen_flags: <defaults>
</compile_context>

<pallas_src>
import functools

import numpy as np

import jax
import jax.numpy as jnp
from jax.experimental import pallas as pl
from jax.experimental.pallas import tpu as pltpu


# ----------------------------------------------------------------------------
# Kernel: one batch element, all orders + attention + fused out_nn
# ----------------------------------------------------------------------------
def _mosa_fused_kernel(x_ref, pmat_ref, wp_ref, bp_ref, wqkv_ref, bqkv_ref,
                       wo_ref, bo_ref, o_ref, *, num_orders, heads, head_dim,
                       scale):
    """Shapes seen by the kernel (full arrays; only x/o are blocked over batch):

    x_ref   : (1, L, D)                 pmat_ref : (num_orders, L, L)
    wp_ref  : (num_orders, D, d4)       bp_ref   : (num_orders, 1, d4)
    wqkv_ref: (num_orders, d4, 3*d4)    bqkv_ref : (num_orders, 1, 3*d4)
    wo_ref  : (num_orders, heads, head_dim, D)   bo_ref: (1, D)
    o_ref   : (1, L, D)
    """
    x = x_ref[0]                                   # (L, D) f32
    L = x.shape[0]
    d4 = wp_ref.shape[-1]
    D = wo_ref.shape[-1]

    acc = jnp.zeros((L, D), jnp.float32)           # fused out_nn accumulator

    for o in range(num_orders):                    # static unroll (4 orders)
        # order*_nn projection (D -> d4), then in-VMEM row permutation via an
        # exact 0/1 permutation matmul:  P @ (x @ Wp + bp) == (P @ x) @ Wp + bp
        p = jnp.dot(x, wp_ref[o], preferred_element_type=jnp.float32) + bp_ref[o]
        p = jnp.dot(pmat_ref[o], p, preferred_element_type=jnp.float32)   # (L, d4)

        # fused q|k|v projection: one matmul with N = 3*d4
        qkv = (jnp.dot(p, wqkv_ref[o], preferred_element_type=jnp.float32)
               + bqkv_ref[o])                       # (L, 3*d4)
        q = qkv[:, 0 * d4:1 * d4] * scale           # scale folded into q
        k = qkv[:, 1 * d4:2 * d4]
        v = qkv[:, 2 * d4:3 * d4]

        # head split -> (H, L, hd); heads handled by batched einsums (no
        # per-head matmul loop, no masked per-head stores).
        q3 = jnp.stack([q[:, h * head_dim:(h + 1) * head_dim]
                        for h in range(heads)], axis=0)
        k3 = jnp.stack([k[:, h * head_dim:(h + 1) * head_dim]
                        for h in range(heads)], axis=0)
        v3 = jnp.stack([v[:, h * head_dim:(h + 1) * head_dim]
                        for h in range(heads)], axis=0)

        s = jnp.einsum("hqd,hkd->hqk", q3, k3,
                       preferred_element_type=jnp.float32)        # (H, L, L)
        s = s - jnp.max(s, axis=-1, keepdims=True)
        e = jnp.exp(s)
        # NOTE: pl.reciprocal(..., approx=True) would push this divide to the
        # EUP slot; kept exact so the kernel stays within tight f32 tolerance.
        attn = e / jnp.sum(e, axis=-1, keepdims=True)
        ctx = jnp.einsum("hqk,hkd->hqd", attn, v3,
                         preferred_element_type=jnp.float32)      # (H, L, hd)

        # fused out_nn: this order's (and head's) rows of W_out, accumulated.
        for h in range(heads):
            acc = acc + jnp.dot(ctx[h], wo_ref[o, h],
                                preferred_element_type=jnp.float32)

    # one lane-dense (L, D) store per program
    o_ref[0] = (acc + bo_ref[...]).astype(o_ref.dtype)


# ----------------------------------------------------------------------------
# Wrapper
# ----------------------------------------------------------------------------
def _perm_matrices(L, num_orders):
    """(num_orders, L, L) one-hot matrices so that (P[o] @ y)[i] = y[perm_o[i]]."""
    s = int(round(L ** 0.5))
    assert s * s == L, "sequence length must be a perfect square"
    i1 = np.arange(L)
    i2 = i1[::-1]
    i3 = i1.reshape(s, s).T.reshape(-1)
    i4 = i3[::-1]
    perms = [i1, i2, i3, i4][:num_orders]
    pmat = np.zeros((num_orders, L, L), np.float32)
    for o, idx in enumerate(perms):
        pmat[o, np.arange(L), idx] = 1.0
    return jnp.asarray(pmat)


def mosa_forward(x, params, *, num_orders, num_heads):
    """MOSA forward.  `num_orders` / `num_heads` are static Python ints
    (passed via jit static_argnames), fixing the previous ConcretizationTypeError."""
    B, L, D = x.shape
    assert num_orders == 4, "MOSA defines exactly 4 sequence orders"
    assert D % num_orders == 0 and num_heads % num_orders == 0
    d4 = D // num_orders
    heads = num_heads // num_orders
    assert d4 % heads == 0
    head_dim = d4 // heads
    scale = float(d4) ** (-0.5)         # torch uses the branch dim, not head_dim

    pmat = _perm_matrices(L, num_orders)

    kernel = functools.partial(_mosa_fused_kernel, num_orders=num_orders,
                               heads=heads, head_dim=head_dim, scale=scale)

    out = pl.pallas_call(
        kernel,
        out_shape=jax.ShapeDtypeStruct((B, L, D), x.dtype),
        grid=(B,),
        in_specs=[
            pl.BlockSpec((1, L, D), lambda b: (b, 0, 0)),                   # x
            pl.BlockSpec((num_orders, L, L), lambda b: (0, 0, 0)),          # perm mats
            pl.BlockSpec((num_orders, D, d4), lambda b: (0, 0, 0)),         # wp
            pl.BlockSpec((num_orders, 1, d4), lambda b: (0, 0, 0)),         # bp
            pl.BlockSpec((num_orders, d4, 3 * d4), lambda b: (0, 0, 0)),    # wqkv
            pl.BlockSpec((num_orders, 1, 3 * d4), lambda b: (0, 0, 0)),     # bqkv
            pl.BlockSpec((num_orders, heads, head_dim, D),
                         lambda b: (0, 0, 0, 0)),                           # wo
            pl.BlockSpec((1, D), lambda b: (0, 0)),                         # b_out
        ],
        out_specs=pl.BlockSpec((1, L, D), lambda b: (b, 0, 0)),
        compiler_params=pltpu.CompilerParams(
            dimension_semantics=("parallel",)),
    )(x, pmat, params["wp"], params["bp"], params["wqkv"], params["bqkv"],
      params["wo"], params["b_out"])
    return out, 0


# ----------------------------------------------------------------------------
# Pure-JAX reference (mirrors the PyTorch MOSA math)
# ----------------------------------------------------------------------------
def mosa_reference(x, params, *, num_orders, num_heads):
    B, L, D = x.shape
    d4 = D // num_orders
    heads = num_heads // num_orders
    hd = d4 // heads
    scale = float(d4) ** (-0.5)
    hi = jax.lax.Precision.HIGHEST      # full-f32 matmuls, like the kernel

    s = int(round(L ** 0.5))
    i1 = jnp.arange(L)
    i2 = i1[::-1]
    i3 = i1.reshape(s, s).T.reshape(-1)
    i4 = i3[::-1]
    orders = [i1, i2, i3, i4]

    outs = []
    for o in range(num_orders):
        xo = x[:, orders[o]]
        p = jnp.einsum("bld,de->ble", xo, params["wp"][o],
                       precision=hi) + params["bp"][o, 0]
        qkv = jnp.einsum("ble,ef->blf", p, params["wqkv"][o],
                         precision=hi) + params["bqkv"][o, 0]
        q, k, v = jnp.split(qkv, 3, axis=-1)
        q = q.reshape(B, L, heads, hd).transpose(0, 2, 1, 3)
        k = k.reshape(B, L, heads, hd).transpose(0, 2, 1, 3)
        v = v.reshape(B, L, heads, hd).transpose(0, 2, 1, 3)
        dots = jnp.einsum("bhid,bhjd->bhij", q, k, precision=hi) * scale
        attn = jax.nn.softmax(dots, axis=-1)
        y = jnp.einsum("bhij,bhjd->bhid", attn, v, precision=hi)
        outs.append(y.transpose(0, 2, 1, 3).reshape(B, L, d4))

    cat = jnp.concatenate(outs, axis=-1)
    w_out = params["wo"].reshape(D, D)
    out = jnp.einsum("bld,de->ble", cat, w_out,
                     precision=hi) + params["b_out"][0]
    return out, 0


# ----------------------------------------------------------------------------
# Deterministic synthetic parameters (no checkpoint loading)
# ----------------------------------------------------------------------------
def _xavier_uniform(key, shape):
    fan_in, fan_out = shape[-2], shape[-1]
    bound = (6.0 / (fan_in + fan_out)) ** 0.5
    return jax.random.uniform(key, shape, jnp.float32, -bound, bound)


def init_params(key, dim, num_heads, num_orders=4):
    d4 = dim // num_orders
    heads = num_heads // num_orders
    head_dim = d4 // heads
    ks = jax.random.split(key, 8)
    bnd = 1.0 / dim ** 0.5

    wq = _xavier_uniform(ks[2], (num_orders, d4, d4))
    wk = _xavier_uniform(ks[3], (num_orders, d4, d4))
    wv = _xavier_uniform(ks[4], (num_orders, d4, d4))

    return {
        # order*_nn: weight stored input-major (D, d4), bias (1, d4)
        "wp": _xavier_uniform(ks[0], (num_orders, dim, d4)),
        "bp": jax.random.uniform(ks[1], (num_orders, 1, d4), jnp.float32,
                                 -bnd, bnd),
        # q|k|v fused along the output dim (xavier per matrix, zero biases,
        # matching MultiOrderHeadAttention.init_layers)
        "wqkv": jnp.concatenate([wq, wk, wv], axis=-1),
        "bqkv": jnp.zeros((num_orders, 1, 3 * d4), jnp.float32),
        # out_nn: (D, D) input-major, pre-split as (order, head, head_dim, D)
        # so the kernel can fuse it as a reduction over orders/heads.
        "wo": _xavier_uniform(ks[5], (dim, dim)).reshape(
            num_orders, heads, head_dim, dim),
        "b_out": jax.random.uniform(ks[6], (1, dim), jnp.float32, -bnd, bnd),
    }


# ----------------------------------------------------------------------------
if __name__ == "__main__":
    # Shapes consistent with the module: dim=32, num_heads=8, num_orders=4
    #   -> per-order dim d4=8, heads/order=2, head_dim=4; L=16 (4x4 patch grid).
    B, L, DIM, NUM_HEADS, NUM_ORDERS = 2, 16, 32, 8, 4

    key = jax.random.PRNGKey(0)
    k_x, k_p = jax.random.split(key)
    x = jax.random.normal(k_x, (B, L, DIM), jnp.float32)
    params = init_params(k_p, DIM, NUM_HEADS, NUM_ORDERS)

    fwd = jax.jit(mosa_forward, static_argnames=("num_orders", "num_heads"))
    out, _ = fwd(x, params, num_orders=NUM_ORDERS, num_heads=NUM_HEADS)
    out = jax.block_until_ready(out)

    ref, _ = mosa_reference(x, params, num_orders=NUM_ORDERS,
                            num_heads=NUM_HEADS)
    assert out.shape == (B, L, DIM)
    # tolerance covers MXU f32 multi-pass vs XLA-HIGHEST rounding differences
    assert jnp.allclose(out, ref, rtol=2e-3, atol=2e-3), "mismatch vs reference"

    print("KERNEL_OK")
</pallas_src>

<mosaic_0001>
module attributes {stable_mosaic.version = 11 : i64} {
  func.func @_mosa_fused_kernel(%arg0: i32, %arg1: memref<1x16x32xf32, #tpu.memory_space<vmem>>, %arg2: memref<4x16x16xf32, #tpu.memory_space<vmem>>, %arg3: memref<4x32x8xf32, #tpu.memory_space<vmem>>, %arg4: memref<4x1x8xf32, #tpu.memory_space<vmem>>, %arg5: memref<4x8x24xf32, #tpu.memory_space<vmem>>, %arg6: memref<4x1x24xf32, #tpu.memory_space<vmem>>, %arg7: memref<4x2x4x32xf32, #tpu.memory_space<vmem>>, %arg8: memref<1x32xf32, #tpu.memory_space<vmem>>, %arg9: memref<1x16x32xf32, #tpu.memory_space<vmem>>) attributes {dimension_semantics = [#tpu.dimension_semantics<parallel>], iteration_bounds = array<i64: 2>, scalar_prefetch = 0 : i64, scratch_operands = 0 : i64, tpu.core_type = #tpu.core_type<tc>, window_params = [{transform_indices = @transform_0, window_bounds = array<i64: 1, 16, 32>}, {pipeline_mode = #tpu.pipeline_mode<synchronous>, transform_indices = @transform_1, window_bounds = array<i64: 4, 16, 16>}, {pipeline_mode = #tpu.pipeline_mode<synchronous>, transform_indices = @transform_2, window_bounds = array<i64: 4, 32, 8>}, {pipeline_mode = #tpu.pipeline_mode<synchronous>, transform_indices = @transform_3, window_bounds = array<i64: 4, 1, 8>}, {pipeline_mode = #tpu.pipeline_mode<synchronous>, transform_indices = @transform_4, window_bounds = array<i64: 4, 8, 24>}, {pipeline_mode = #tpu.pipeline_mode<synchronous>, transform_indices = @transform_5, window_bounds = array<i64: 4, 1, 24>}, {pipeline_mode = #tpu.pipeline_mode<synchronous>, transform_indices = @transform_6, window_bounds = array<i64: 4, 2, 4, 32>}, {pipeline_mode = #tpu.pipeline_mode<synchronous>, transform_indices = @transform_7, window_bounds = array<i64: 1, 32>}, {transform_indices = @transform_8, window_bounds = array<i64: 1, 16, 32>}]} {
    %c0 = arith.constant 0 : index
    %c0_0 = arith.constant 0 : index
    %c0_1 = arith.constant 0 : index
    %0 = vector.load %arg1[%c0, %c0_0, %c0_1] : memref<1x16x32xf32, #tpu.memory_space<vmem>>, vector<1x16x32xf32>
    %1 = vector.shape_cast %0 : vector<1x16x32xf32> to vector<16x32xf32>
    %cst = arith.constant 0.000000e+00 : f32
    %2 = vector.broadcast %cst : f32 to vector<16x32xf32>
    %c0_2 = arith.constant 0 : index
    %c0_3 = arith.constant 0 : index
    %c0_4 = arith.constant 0 : index
    %3 = vector.load %arg3[%c0_2, %c0_3, %c0_4] : memref<4x32x8xf32, #tpu.memory_space<vmem>>, vector<1x32x8xf32>
    %4 = vector.shape_cast %3 : vector<1x32x8xf32> to vector<32x8xf32>
    %cst_5 = arith.constant dense<0.000000e+00> : vector<16x8xf32>
    %5 = tpu.matmul %1, %4, %cst_5 {dimension_numbers = #tpu.dot_dimension_numbers<[1], [0], [0], [1], [0, 0, 1, 1], [], []>} : vector<16x32xf32>, vector<32x8xf32>, vector<16x8xf32> -> vector<16x8xf32>
    %c0_6 = arith.constant 0 : index
    %c0_7 = arith.constant 0 : index
    %c0_8 = arith.constant 0 : index
    %6 = vector.load %arg4[%c0_6, %c0_7, %c0_8] : memref<4x1x8xf32, #tpu.memory_space<vmem>>, vector<1x1x8xf32>
    %7 = vector.shape_cast %6 : vector<1x1x8xf32> to vector<1x8xf32>
    %8 = vector.broadcast %7 : vector<1x8xf32> to vector<16x8xf32>
    %9 = arith.addf %5, %8 : vector<16x8xf32>
    %c0_9 = arith.constant 0 : index
    %c0_10 = arith.constant 0 : index
    %c0_11 = arith.constant 0 : index
    %10 = vector.load %arg2[%c0_9, %c0_10, %c0_11] : memref<4x16x16xf32, #tpu.memory_space<vmem>>, vector<1x16x16xf32>
    %11 = vector.shape_cast %10 : vector<1x16x16xf32> to vector<16x16xf32>
    %cst_12 = arith.constant dense<0.000000e+00> : vector<16x8xf32>
    %12 = tpu.matmul %11, %9, %cst_12 {dimension_numbers = #tpu.dot_dimension_numbers<[1], [0], [0], [1], [0, 0, 1, 1], [], []>} : vector<16x16xf32>, vector<16x8xf32>, vector<16x8xf32> -> vector<16x8xf32>
    %c0_13 = arith.constant 0 : index
    %c0_14 = arith.constant 0 : index
    %c0_15 = arith.constant 0 : index
    %13 = vector.load %arg5[%c0_13, %c0_14, %c0_15] : memref<4x8x24xf32, #tpu.memory_space<vmem>>, vector<1x8x24xf32>
    %14 = vector.shape_cast %13 : vector<1x8x24xf32> to vector<8x24xf32>
    %cst_16 = arith.constant dense<0.000000e+00> : vector<16x24xf32>
    %15 = tpu.matmul %12, %14, %cst_16 {dimension_numbers = #tpu.dot_dimension_numbers<[1], [0], [0], [1], [0, 0, 1, 1], [], []>} : vector<16x8xf32>, vector<8x24xf32>, vector<16x24xf32> -> vector<16x24xf32>
    %c0_17 = arith.constant 0 : index
    %c0_18 = arith.constant 0 : index
    %c0_19 = arith.constant 0 : index
    %16 = vector.load %arg6[%c0_17, %c0_18, %c0_19] : memref<4x1x24xf32, #tpu.memory_space<vmem>>, vector<1x1x24xf32>
    %17 = vector.shape_cast %16 : vector<1x1x24xf32> to vector<1x24xf32>
    %18 = vector.broadcast %17 : vector<1x24xf32> to vector<16x24xf32>
    %19 = arith.addf %15, %18 : vector<16x24xf32>
    %20 = vector.extract_strided_slice %19 {offsets = [0, 0], sizes = [16, 8], strides = [1, 1]} : vector<16x24xf32> to vector<16x8xf32>
    %cst_20 = arith.constant 0.353553385 : f32
    %21 = vector.broadcast %cst_20 : f32 to vector<16x8xf32>
    %22 = arith.mulf %20, %21 : vector<16x8xf32>
    %23 = vector.extract_strided_slice %19 {offsets = [0, 8], sizes = [16, 8], strides = [1, 1]} : vector<16x24xf32> to vector<16x8xf32>
    %24 = vector.extract_strided_slice %19 {offsets = [0, 16], sizes = [16, 8], strides = [1, 1]} : vector<16x24xf32> to vector<16x8xf32>
    %25 = vector.extract_strided_slice %22 {offsets = [0, 0], sizes = [16, 4], strides = [1, 1]} : vector<16x8xf32> to vector<16x4xf32>
    %26 = vector.extract_strided_slice %22 {offsets = [0, 4], sizes = [16, 4], strides = [1, 1]} : vector<16x8xf32> to vector<16x4xf32>
    %27 = vector.shape_cast %25 : vector<16x4xf32> to vector<1x16x4xf32>
    %28 = vector.shape_cast %26 : vector<16x4xf32> to vector<1x16x4xf32>
    %29 = tpu.concatenate %27, %28 in 0 : vector<1x16x4xf32>, vector<1x16x4xf32> -> vector<2x16x4xf32>
    %30 = vector.extract_strided_slice %23 {offsets = [0, 0], sizes = [16, 4], strides = [1, 1]} : vector<16x8xf32> to vector<16x4xf32>
    %31 = vector.extract_strided_slice %23 {offsets = [0, 4], sizes = [16, 4], strides = [1, 1]} : vector<16x8xf32> to vector<16x4xf32>
    %32 = vector.shape_cast %30 : vector<16x4xf32> to vector<1x16x4xf32>
    %33 = vector.shape_cast %31 : vector<16x4xf32> to vector<1x16x4xf32>
    %34 = tpu.concatenate %32, %33 in 0 : vector<1x16x4xf32>, vector<1x16x4xf32> -> vector<2x16x4xf32>
    %35 = vector.extract_strided_slice %24 {offsets = [0, 0], sizes = [16, 4], strides = [1, 1]} : vector<16x8xf32> to vector<16x4xf32>
    %36 = vector.extract_strided_slice %24 {offsets = [0, 4], sizes = [16, 4], strides = [1, 1]} : vector<16x8xf32> to vector<16x4xf32>
    %37 = vector.shape_cast %35 : vector<16x4xf32> to vector<1x16x4xf32>
    %38 = vector.shape_cast %36 : vector<16x4xf32> to vector<1x16x4xf32>
    %39 = tpu.concatenate %37, %38 in 0 : vector<1x16x4xf32>, vector<1x16x4xf32> -> vector<2x16x4xf32>
    "tpu.trace_start"() <{level = 10 : i32, message = "hqd,hkd->hqk"}> : () -> ()
    %cst_21 = arith.constant dense<0.000000e+00> : vector<2x16x16xf32>
    %40 = tpu.matmul %29, %34, %cst_21 {dimension_numbers = #tpu.dot_dimension_numbers<[2], [2], [1], [1], [0, 0, 0, 1, 1, 1], [0], [0]>} : vector<2x16x4xf32>, vector<2x16x4xf32>, vector<2x16x16xf32> -> vector<2x16x16xf32>
    "tpu.trace_stop"() : () -> ()
    %cst_22 = arith.constant dense<0xFF800000> : vector<2x16xf32>
    %41 = vector.multi_reduction <maximumf>, %40, %cst_22 [2] : vector<2x16x16xf32> to vector<2x16xf32>
    %42 = vector.shape_cast %41 : vector<2x16xf32> to vector<2x16x1xf32>
    %43 = vector.broadcast %42 : vector<2x16x1xf32> to vector<2x16x16xf32>
    %44 = arith.subf %40, %43 : vector<2x16x16xf32>
    %45 = math.exp %44 : vector<2x16x16xf32>
    %cst_23 = arith.constant dense<0.000000e+00> : vector<2x16xf32>
    %46 = vector.multi_reduction <add>, %45, %cst_23 [2] : vector<2x16x16xf32> to vector<2x16xf32>
    %47 = vector.shape_cast %46 : vector<2x16xf32> to vector<2x16x1xf32>
    %48 = vector.broadcast %47 : vector<2x16x1xf32> to vector<2x16x16xf32>
    %49 = arith.divf %45, %48 : vector<2x16x16xf32>
    "tpu.trace_start"() <{level = 10 : i32, message = "hqk,hkd->hqd"}> : () -> ()
    %cst_24 = arith.constant dense<0.000000e+00> : vector<2x16x4xf32>
    %50 = tpu.matmul %49, %39, %cst_24 {dimension_numbers = #tpu.dot_dimension_numbers<[2], [1], [1], [2], [0, 0, 0, 1, 1, 2], [0], [0]>} : vector<2x16x16xf32>, vector<2x16x4xf32>, vector<2x16x4xf32> -> vector<2x16x4xf32>
    "tpu.trace_stop"() : () -> ()
    %51 = vector.extract_strided_slice %50 {offsets = [0, 0, 0], sizes = [1, 16, 4], strides = [1, 1, 1]} : vector<2x16x4xf32> to vector<1x16x4xf32>
    %52 = vector.shape_cast %51 : vector<1x16x4xf32> to vector<16x4xf32>
    %c0_25 = arith.constant 0 : index
    %c0_26 = arith.constant 0 : index
    %c0_27 = arith.constant 0 : index
    %c0_28 = arith.constant 0 : index
    %53 = vector.load %arg7[%c0_25, %c0_26, %c0_27, %c0_28] : memref<4x2x4x32xf32, #tpu.memory_space<vmem>>, vector<1x1x4x32xf32>
    %54 = vector.shape_cast %53 : vector<1x1x4x32xf32> to vector<4x32xf32>
    %cst_29 = arith.constant dense<0.000000e+00> : vector<16x32xf32>
    %55 = tpu.matmul %52, %54, %cst_29 {dimension_numbers = #tpu.dot_dimension_numbers<[1], [0], [0], [1], [0, 0, 1, 1], [], []>} : vector<16x4xf32>, vector<4x32xf32>, vector<16x32xf32> -> vector<16x32xf32>
    %56 = arith.addf %2, %55 : vector<16x32xf32>
    %57 = vector.extract_strided_slice %50 {offsets = [1, 0, 0], sizes = [1, 16, 4], strides = [1, 1, 1]} : vector<2x16x4xf32> to vector<1x16x4xf32>
    %58 = vector.shape_cast %57 : vector<1x16x4xf32> to vector<16x4xf32>
    %c0_30 = arith.constant 0 : index
    %c1 = arith.constant 1 : index
    %c0_31 = arith.constant 0 : index
    %c0_32 = arith.constant 0 : index
    %59 = vector.load %arg7[%c0_30, %c1, %c0_31, %c0_32] : memref<4x2x4x32xf32, #tpu.memory_space<vmem>>, vector<1x1x4x32xf32>
    %60 = vector.shape_cast %59 : vector<1x1x4x32xf32> to vector<4x32xf32>
    %cst_33 = arith.constant dense<0.000000e+00> : vector<16x32xf32>
    %61 = tpu.matmul %58, %60, %cst_33 {dimension_numbers = #tpu.dot_dimension_numbers<[1], [0], [0], [1], [0, 0, 1, 1], [], []>} : vector<16x4xf32>, vector<4x32xf32>, vector<16x32xf32> -> vector<16x32xf32>
    %62 = arith.addf %56, %61 : vector<16x32xf32>
    %c1_34 = arith.constant 1 : index
    %c0_35 = arith.constant 0 : index
    %c0_36 = arith.constant 0 : index
    %63 = vector.load %arg3[%c1_34, %c0_35, %c0_36] : memref<4x32x8xf32, #tpu.memory_space<vmem>>, vector<1x32x8xf32>
    %64 = vector.shape_cast %63 : vector<1x32x8xf32> to vector<32x8xf32>
    %cst_37 = arith.constant dense<0.000000e+00> : vector<16x8xf32>
    %65 = tpu.matmul %1, %64, %cst_37 {dimension_numbers = #tpu.dot_dimension_numbers<[1], [0], [0], [1], [0, 0, 1, 1], [], []>} : vector<16x32xf32>, vector<32x8xf32>, vector<16x8xf32> -> vector<16x8xf32>
    %c1_38 = arith.constant 1 : index
    %c0_39 = arith.constant 0 : index
    %c0_40 = arith.constant 0 : index
    %66 = vector.load %arg4[%c1_38, %c0_39, %c0_40] : memref<4x1x8xf32, #tpu.memory_space<vmem>>, vector<1x1x8xf32>
    %67 = vector.shape_cast %66 : vector<1x1x8xf32> to vector<1x8xf32>
    %68 = vector.broadcast %67 : vector<1x8xf32> to vector<16x8xf32>
    %69 = arith.addf %65, %68 : vector<16x8xf32>
    %c1_41 = arith.constant 1 : index
    %c0_42 = arith.constant 0 : index
    %c0_43 = arith.constant 0 : index
    %70 = vector.load %arg2[%c1_41, %c0_42, %c0_43] : memref<4x16x16xf32, #tpu.memory_space<vmem>>, vector<1x16x16xf32>
    %71 = vector.shape_cast %70 : vector<1x16x16xf32> to vector<16x16xf32>
    %cst_44 = arith.constant dense<0.000000e+00> : vector<16x8xf32>
    %72 = tpu.matmul %71, %69, %cst_44 {dimension_numbers = #tpu.dot_dimension_numbers<[1], [0], [0], [1], [0, 0, 1, 1], [], []>} : vector<16x16xf32>, vector<16x8xf32>, vector<16x8xf32> -> vector<16x8xf32>
    %c1_45 = arith.constant 1 : index
    %c0_46 = arith.constant 0 : index
    %c0_47 = arith.constant 0 : index
    %73 = vector.load %arg5[%c1_45, %c0_46, %c0_47] : memref<4x8x24xf32, #tpu.memory_space<vmem>>, vector<1x8x24xf32>
    %74 = vector.shape_cast %73 : vector<1x8x24xf32> to vector<8x24xf32>
    %cst_48 = arith.constant dense<0.000000e+00> : vector<16x24xf32>
    %75 = tpu.matmul %72, %74, %cst_48 {dimension_numbers = #tpu.dot_dimension_numbers<[1], [0], [0], [1], [0, 0, 1, 1], [], []>} : vector<16x8xf32>, vector<8x24xf32>, vector<16x24xf32> -> vector<16x24xf32>
    %c1_49 = arith.constant 1 : index
    %c0_50 = arith.constant 0 : index
    %c0_51 = arith.constant 0 : index
    %76 = vector.load %arg6[%c1_49, %c0_50, %c0_51] : memref<4x1x24xf32, #tpu.memory_space<vmem>>, vector<1x1x24xf32>
    %77 = vector.shape_cast %76 : vector<1x1x24xf32> to vector<1x24xf32>
    %78 = vector.broadcast %77 : vector<1x24xf32> to vector<16x24xf32>
    %79 = arith.addf %75, %78 : vector<16x24xf32>
    %80 = vector.extract_strided_slice %79 {offsets = [0, 0], sizes = [16, 8], strides = [1, 1]} : vector<16x24xf32> to vector<16x8xf32>
    %cst_52 = arith.constant 0.353553385 : f32
    %81 = vector.broadcast %cst_52 : f32 to vector<16x8xf32>
    %82 = arith.mulf %80, %81 : vector<16x8xf32>
    %83 = vector.extract_strided_slice %79 {offsets = [0, 8], sizes = [16, 8], strides = [1, 1]} : vector<16x24xf32> to vector<16x8xf32>
    %84 = vector.extract_strided_slice %79 {offsets = [0, 16], sizes = [16, 8], strides = [1, 1]} : vector<16x24xf32> to vector<16x8xf32>
    %85 = vector.extract_strided_slice %82 {offsets = [0, 0], sizes = [16, 4], strides = [1, 1]} : vector<16x8xf32> to vector<16x4xf32>
    %86 = vector.extract_strided_slice %82 {offsets = [0, 4], sizes = [16, 4], strides = [1, 1]} : vector<16x8xf32> to vector<16x4xf32>
    %87 = vector.shape_cast %85 : vector<16x4xf32> to vector<1x16x4xf32>
    %88 = vector.shape_cast %86 : vector<16x4xf32> to vector<1x16x4xf32>
    %89 = tpu.concatenate %87, %88 in 0 : vector<1x16x4xf32>, vector<1x16x4xf32> -> vector<2x16x4xf32>
    %90 = vector.extract_strided_slice %83 {offsets = [0, 0], sizes = [16, 4], strides = [1, 1]} : vector<16x8xf32> to vector<16x4xf32>
    %91 = vector.extract_strided_slice %83 {offsets = [0, 4], sizes = [16, 4], strides = [1, 1]} : vector<16x8xf32> to vector<16x4xf32>
    %92 = vector.shape_cast %90 : vector<16x4xf32> to vector<1x16x4xf32>
    %93 = vector.shape_cast %91 : vector<16x4xf32> to vector<1x16x4xf32>
    %94 = tpu.concatenate %92, %93 in 0 : vector<1x16x4xf32>, vector<1x16x4xf32> -> vector<2x16x4xf32>
    %95 = vector.extract_strided_slice %84 {offsets = [0, 0], sizes = [16, 4], strides = [1, 1]} : vector<16x8xf32> to vector<16x4xf32>
    %96 = vector.extract_strided_slice %84 {offsets = [0, 4], sizes = [16, 4], strides = [1, 1]} : vector<16x8xf32> to vector<16x4xf32>
    %97 = vector.shape_cast %95 : vector<16x4xf32> to vector<1x16x4xf32>
    %98 = vector.shape_cast %96 : vector<16x4xf32> to vector<1x16x4xf32>
    %99 = tpu.concatenate %97, %98 in 0 : vector<1x16x4xf32>, vector<1x16x4xf32> -> vector<2x16x4xf32>
    "tpu.trace_start"() <{level = 10 : i32, message = "hqd,hkd->hqk"}> : () -> ()
    %cst_53 = arith.constant dense<0.000000e+00> : vector<2x16x16xf32>
    %100 = tpu.matmul %89, %94, %cst_53 {dimension_numbers = #tpu.dot_dimension_numbers<[2], [2], [1], [1], [0, 0, 0, 1, 1, 1], [0], [0]>} : vector<2x16x4xf32>, vector<2x16x4xf32>, vector<2x16x16xf32> -> vector<2x16x16xf32>
    "tpu.trace_stop"() : () -> ()
    %cst_54 = arith.constant dense<0xFF800000> : vector<2x16xf32>
    %101 = vector.multi_reduction <maximumf>, %100, %cst_54 [2] : vector<2x16x16xf32> to vector<2x16xf32>
    %102 = vector.shape_cast %101 : vector<2x16xf32> to vector<2x16x1xf32>
    %103 = vector.broadcast %102 : vector<2x16x1xf32> to vector<2x16x16xf32>
    %104 = arith.subf %100, %103 : vector<2x16x16xf32>
    %105 = math.exp %104 : vector<2x16x16xf32>
    %cst_55 = arith.constant dense<0.000000e+00> : vector<2x16xf32>
    %106 = vector.multi_reduction <add>, %105, %cst_55 [2] : vector<2x16x16xf32> to vector<2x16xf32>
    %107 = vector.shape_cast %106 : vector<2x16xf32> to vector<2x16x1xf32>
    %108 = vector.broadcast %107 : vector<2x16x1xf32> to vector<2x16x16xf32>
    %109 = arith.divf %105, %108 : vector<2x16x16xf32>
    "tpu.trace_start"() <{level = 10 : i32, message = "hqk,hkd->hqd"}> : () -> ()
    %cst_56 = arith.constant dense<0.000000e+00> : vector<2x16x4xf32>
    %110 = tpu.matmul %109, %99, %cst_56 {dimension_numbers = #tpu.dot_dimension_numbers<[2], [1], [1], [2], [0, 0, 0, 1, 1, 2], [0], [0]>} : vector<2x16x16xf32>, vector<2x16x4xf32>, vector<2x16x4xf32> -> vector<2x16x4xf32>
    "tpu.trace_stop"() : () -> ()
    %111 = vector.extract_strided_slice %110 {offsets = [0, 0, 0], sizes = [1, 16, 4], strides = [1, 1, 1]} : vector<2x16x4xf32> to vector<1x16x4xf32>
    %112 = vector.shape_cast %111 : vector<1x16x4xf32> to vector<16x4xf32>
    %c1_57 = arith.constant 1 : index
    %c0_58 = arith.constant 0 : index
    %c0_59 = arith.constant 0 : index
    %c0_60 = arith.constant 0 : index
    %113 = vector.load %arg7[%c1_57, %c0_58, %c0_59, %c0_60] : memref<4x2x4x32xf32, #tpu.memory_space<vmem>>, vector<1x1x4x32xf32>
    %114 = vector.shape_cast %113 : vector<1x1x4x32xf32> to vector<4x32xf32>
    %cst_61 = arith.constant dense<0.000000e+00> : vector<16x32xf32>
    %115 = tpu.matmul %112, %114, %cst_61 {dimension_numbers = #tpu.dot_dimension_numbers<[1], [0], [0], [1], [0, 0, 1, 1], [], []>} : vector<16x4xf32>, vector<4x32xf32>, vector<16x32xf32> -> vector<16x32xf32>
    %116 = arith.addf %62, %115 : vector<16x32xf32>
    %117 = vector.extract_strided_slice %110 {offsets = [1, 0, 0], sizes = [1, 16, 4], strides = [1, 1, 1]} : vector<2x16x4xf32> to vector<1x16x4xf32>
    %118 = vector.shape_cast %117 : vector<1x16x4xf32> to vector<16x4xf32>
    %c1_62 = arith.constant 1 : index
    %c1_63 = arith.constant 1 : index
    %c0_64 = arith.constant 0 : index
    %c0_65 = arith.constant 0 : index
    %119 = vector.load %arg7[%c1_62, %c1_63, %c0_64, %c0_65] : memref<4x2x4x32xf32, #tpu.memory_space<vmem>>, vector<1x1x4x32xf32>
    %120 = vector.shape_cast %119 : vector<1x1x4x32xf32> to vector<4x32xf32>
    %cst_66 = arith.constant dense<0.000000e+00> : vector<16x32xf32>
    %121 = tpu.matmul %118, %120, %cst_66 {dimension_numbers = #tpu.dot_dimension_numbers<[1], [0], [0], [1], [0, 0, 1, 1], [], []>} : vector<16x4xf32>, vector<4x32xf32>, vector<16x32xf32> -> vector<16x32xf32>
    %122 = arith.addf %116, %121 : vector<16x32xf32>
    %c2 = arith.constant 2 : index
    %c0_67 = arith.constant 0 : index
    %c0_68 = arith.constant 0 : index
    %123 = vector.load %arg3[%c2, %c0_67, %c0_68] : memref<4x32x8xf32, #tpu.memory_space<vmem>>, vector<1x32x8xf32>
    %124 = vector.shape_cast %123 : vector<1x32x8xf32> to vector<32x8xf32>
    %cst_69 = arith.constant dense<0.000000e+00> : vector<16x8xf32>
    %125 = tpu.matmul %1, %124, %cst_69 {dimension_numbers = #tpu.dot_dimension_numbers<[1], [0], [0], [1], [0, 0, 1, 1], [], []>} : vector<16x32xf32>, vector<32x8xf32>, vector<16x8xf32> -> vector<16x8xf32>
    %c2_70 = arith.constant 2 : index
    %c0_71 = arith.constant 0 : index
    %c0_72 = arith.constant 0 : index
    %126 = vector.load %arg4[%c2_70, %c0_71, %c0_72] : memref<4x1x8xf32, #tpu.memory_space<vmem>>, vector<1x1x8xf32>
    %127 = vector.shape_cast %126 : vector<1x1x8xf32> to vector<1x8xf32>
    %128 = vector.broadcast %127 : vector<1x8xf32> to vector<16x8xf32>
    %129 = arith.addf %125, %128 : vector<16x8xf32>
    %c2_73 = arith.constant 2 : index
    %c0_74 = arith.constant 0 : index
    %c0_75 = arith.constant 0 : index
    %130 = vector.load %arg2[%c2_73, %c0_74, %c0_75] : memref<4x16x16xf32, #tpu.memory_space<vmem>>, vector<1x16x16xf32>
    %131 = vector.shape_cast %130 : vector<1x16x16xf32> to vector<16x16xf32>
    %cst_76 = arith.constant dense<0.000000e+00> : vector<16x8xf32>
    %132 = tpu.matmul %131, %129, %cst_76 {dimension_numbers = #tpu.dot_dimension_numbers<[1], [0], [0], [1], [0, 0, 1, 1], [], []>} : vector<16x16xf32>, vector<16x8xf32>, vector<16x8xf32> -> vector<16x8xf32>
    %c2_77 = arith.constant 2 : index
    %c0_78 = arith.constant 0 : index
    %c0_79 = arith.constant 0 : index
    %133 = vector.load %arg5[%c2_77, %c0_78, %c0_79] : memref<4x8x24xf32, #tpu.memory_space<vmem>>, vector<1x8x24xf32>
    %134 = vector.shape_cast %133 : vector<1x8x24xf32> to vector<8x24xf32>
    %cst_80 = arith.constant dense<0.000000e+00> : vector<16x24xf32>
    %135 = tpu.matmul %132, %134, %cst_80 {dimension_numbers = #tpu.dot_dimension_numbers<[1], [0], [0], [1], [0, 0, 1, 1], [], []>} : vector<16x8xf32>, vector<8x24xf32>, vector<16x24xf32> -> vector<16x24xf32>
    %c2_81 = arith.constant 2 : index
    %c0_82 = arith.constant 0 : index
    %c0_83 = arith.constant 0 : index
    %136 = vector.load %arg6[%c2_81, %c0_82, %c0_83] : memref<4x1x24xf32, #tpu.memory_space<vmem>>, vector<1x1x24xf32>
    %137 = vector.shape_cast %136 : vector<1x1x24xf32> to vector<1x24xf32>
    %138 = vector.broadcast %137 : vector<1x24xf32> to vector<16x24xf32>
    %139 = arith.addf %135, %138 : vector<16x24xf32>
    %140 = vector.extract_strided_slice %139 {offsets = [0, 0], sizes = [16, 8], strides = [1, 1]} : vector<16x24xf32> to vector<16x8xf32>
    %cst_84 = arith.constant 0.353553385 : f32
    %141 = vector.broadcast %cst_84 : f32 to vector<16x8xf32>
    %142 = arith.mulf %140, %141 : vector<16x8xf32>
    %143 = vector.extract_strided_slice %139 {offsets = [0, 8], sizes = [16, 8], strides = [1, 1]} : vector<16x24xf32> to vector<16x8xf32>
    %144 = vector.extract_strided_slice %139 {offsets = [0, 16], sizes = [16, 8], strides = [1, 1]} : vector<16x24xf32> to vector<16x8xf32>
    %145 = vector.extract_strided_slice %142 {offsets = [0, 0], sizes = [16, 4], strides = [1, 1]} : vector<16x8xf32> to vector<16x4xf32>
    %146 = vector.extract_strided_slice %142 {offsets = [0, 4], sizes = [16, 4], strides = [1, 1]} : vector<16x8xf32> to vector<16x4xf32>
    %147 = vector.shape_cast %145 : vector<16x4xf32> to vector<1x16x4xf32>
    %148 = vector.shape_cast %146 : vector<16x4xf32> to vector<1x16x4xf32>
    %149 = tpu.concatenate %147, %148 in 0 : vector<1x16x4xf32>, vector<1x16x4xf32> -> vector<2x16x4xf32>
    %150 = vector.extract_strided_slice %143 {offsets = [0, 0], sizes = [16, 4], strides = [1, 1]} : vector<16x8xf32> to vector<16x4xf32>
    %151 = vector.extract_strided_slice %143 {offsets = [0, 4], sizes = [16, 4], strides = [1, 1]} : vector<16x8xf32> to vector<16x4xf32>
    %152 = vector.shape_cast %150 : vector<16x4xf32> to vector<1x16x4xf32>
    %153 = vector.shape_cast %151 : vector<16x4xf32> to vector<1x16x4xf32>
    %154 = tpu.concatenate %152, %153 in 0 : vector<1x16x4xf32>, vector<1x16x4xf32> -> vector<2x16x4xf32>
    %155 = vector.extract_strided_slice %144 {offsets = [0, 0], sizes = [16, 4], strides = [1, 1]} : vector<16x8xf32> to vector<16x4xf32>
    %156 = vector.extract_strided_slice %144 {offsets = [0, 4], sizes = [16, 4], strides = [1, 1]} : vector<16x8xf32> to vector<16x4xf32>
    %157 = vector.shape_cast %155 : vector<16x4xf32> to vector<1x16x4xf32>
    %158 = vector.shape_cast %156 : vector<16x4xf32> to vector<1x16x4xf32>
    %159 = tpu.concatenate %157, %158 in 0 : vector<1x16x4xf32>, vector<1x16x4xf32> -> vector<2x16x4xf32>
    "tpu.trace_start"() <{level = 10 : i32, message = "hqd,hkd->hqk"}> : () -> ()
    %cst_85 = arith.constant dense<0.000000e+00> : vector<2x16x16xf32>
    %160 = tpu.matmul %149, %154, %cst_85 {dimension_numbers = #tpu.dot_dimension_numbers<[2], [2], [1], [1], [0, 0, 0, 1, 1, 1], [0], [0]>} : vector<2x16x4xf32>, vector<2x16x4xf32>, vector<2x16x16xf32> -> vector<2x16x16xf32>
    "tpu.trace_stop"() : () -> ()
    %cst_86 = arith.constant dense<0xFF800000> : vector<2x16xf32>
    %161 = vector.multi_reduction <maximumf>, %160, %cst_86 [2] : vector<2x16x16xf32> to vector<2x16xf32>
    %162 = vector.shape_cast %161 : vector<2x16xf32> to vector<2x16x1xf32>
    %163 = vector.broadcast %162 : vector<2x16x1xf32> to vector<2x16x16xf32>
    %164 = arith.subf %160, %163 : vector<2x16x16xf32>
    %165 = math.exp %164 : vector<2x16x16xf32>
    %cst_87 = arith.constant dense<0.000000e+00> : vector<2x16xf32>
    %166 = vector.multi_reduction <add>, %165, %cst_87 [2] : vector<2x16x16xf32> to vector<2x16xf32>
    %167 = vector.shape_cast %166 : vector<2x16xf32> to vector<2x16x1xf32>
    %168 = vector.broadcast %167 : vector<2x16x1xf32> to vector<2x16x16xf32>
    %169 = arith.divf %165, %168 : vector<2x16x16xf32>
    "tpu.trace_start"() <{level = 10 : i32, message = "hqk,hkd->hqd"}> : () -> ()
    %cst_88 = arith.constant dense<0.000000e+00> : vector<2x16x4xf32>
    %170 = tpu.matmul %169, %159, %cst_88 {dimension_numbers = #tpu.dot_dimension_numbers<[2], [1], [1], [2], [0, 0, 0, 1, 1, 2], [0], [0]>} : vector<2x16x16xf32>, vector<2x16x4xf32>, vector<2x16x4xf32> -> vector<2x16x4xf32>
    "tpu.trace_stop"() : () -> ()
    %171 = vector.extract_strided_slice %170 {offsets = [0, 0, 0], sizes = [1, 16, 4], strides = [1, 1, 1]} : vector<2x16x4xf32> to vector<1x16x4xf32>
    %172 = vector.shape_cast %171 : vector<1x16x4xf32> to vector<16x4xf32>
    %c2_89 = arith.constant 2 : index
    %c0_90 = arith.constant 0 : index
    %c0_91 = arith.constant 0 : index
    %c0_92 = arith.constant 0 : index
    %173 = vector.load %arg7[%c2_89, %c0_90, %c0_91, %c0_92] : memref<4x2x4x32xf32, #tpu.memory_space<vmem>>, vector<1x1x4x32xf32>
    %174 = vector.shape_cast %173 : vector<1x1x4x32xf32> to vector<4x32xf32>
    %cst_93 = arith.constant dense<0.000000e+00> : vector<16x32xf32>
    %175 = tpu.matmul %172, %174, %cst_93 {dimension_numbers = #tpu.dot_dimension_numbers<[1], [0], [0], [1], [0, 0, 1, 1], [], []>} : vector<16x4xf32>, vector<4x32xf32>, vector<16x32xf32> -> vector<16x32xf32>
    %176 = arith.addf %122, %175 : vector<16x32xf32>
    %177 = vector.extract_strided_slice %170 {offsets = [1, 0, 0], sizes = [1, 16, 4], strides = [1, 1, 1]} : vector<2x16x4xf32> to vector<1x16x4xf32>
    %178 = vector.shape_cast %177 : vector<1x16x4xf32> to vector<16x4xf32>
    %c2_94 = arith.constant 2 : index
    %c1_95 = arith.constant 1 : index
    %c0_96 = arith.constant 0 : index
    %c0_97 = arith.constant 0 : index
    %179 = vector.load %arg7[%c2_94, %c1_95, %c0_96, %c0_97] : memref<4x2x4x32xf32, #tpu.memory_space<vmem>>, vector<1x1x4x32xf32>
    %180 = vector.shape_cast %179 : vector<1x1x4x32xf32> to vector<4x32xf32>
    %cst_98 = arith.constant dense<0.000000e+00> : vector<16x32xf32>
    %181 = tpu.matmul %178, %180, %cst_98 {dimension_numbers = #tpu.dot_dimension_numbers<[1], [0], [0], [1], [0, 0, 1, 1], [], []>} : vector<16x4xf32>, vector<4x32xf32>, vector<16x32xf32> -> vector<16x32xf32>
    %182 = arith.addf %176, %181 : vector<16x32xf32>
    %c3 = arith.constant 3 : index
    %c0_99 = arith.constant 0 : index
    %c0_100 = arith.constant 0 : index
    %183 = vector.load %arg3[%c3, %c0_99, %c0_100] : memref<4x32x8xf32, #tpu.memory_space<vmem>>, vector<1x32x8xf32>
    %184 = vector.shape_cast %183 : vector<1x32x8xf32> to vector<32x8xf32>
    %cst_101 = arith.constant dense<0.000000e+00> : vector<16x8xf32>
    %185 = tpu.matmul %1, %184, %cst_101 {dimension_numbers = #tpu.dot_dimension_numbers<[1], [0], [0], [1], [0, 0, 1, 1], [], []>} : vector<16x32xf32>, vector<32x8xf32>, vector<16x8xf32> -> vector<16x8xf32>
    %c3_102 = arith.constant 3 : index
    %c0_103 = arith.constant 0 : index
    %c0_104 = arith.constant 0 : index
    %186 = vector.load %arg4[%c3_102, %c0_103, %c0_104] : memref<4x1x8xf32, #tpu.memory_space<vmem>>, vector<1x1x8xf32>
    %187 = vector.shape_cast %186 : vector<1x1x8xf32> to vector<1x8xf32>
    %188 = vector.broadcast %187 : vector<1x8xf32> to vector<16x8xf32>
    %189 = arith.addf %185, %188 : vector<16x8xf32>
    %c3_105 = arith.constant 3 : index
    %c0_106 = arith.constant 0 : index
    %c0_107 = arith.constant 0 : index
    %190 = vector.load %arg2[%c3_105, %c0_106, %c0_107] : memref<4x16x16xf32, #tpu.memory_space<vmem>>, vector<1x16x16xf32>
    %191 = vector.shape_cast %190 : vector<1x16x16xf32> to vector<16x16xf32>
    %cst_108 = arith.constant dense<0.000000e+00> : vector<16x8xf32>
    %192 = tpu.matmul %191, %189, %cst_108 {dimension_numbers = #tpu.dot_dimension_numbers<[1], [0], [0], [1], [0, 0, 1, 1], [], []>} : vector<16x16xf32>, vector<16x8xf32>, vector<16x8xf32> -> vector<16x8xf32>
    %c3_109 = arith.constant 3 : index
    %c0_110 = arith.constant 0 : index
    %c0_111 = arith.constant 0 : index
    %193 = vector.load %arg5[%c3_109, %c0_110, %c0_111] : memref<4x8x24xf32, #tpu.memory_space<vmem>>, vector<1x8x24xf32>
    %194 = vector.shape_cast %193 : vector<1x8x24xf32> to vector<8x24xf32>
    %cst_112 = arith.constant dense<0.000000e+00> : vector<16x24xf32>
    %195 = tpu.matmul %192, %194, %cst_112 {dimension_numbers = #tpu.dot_dimension_numbers<[1], [0], [0], [1], [0, 0, 1, 1], [], []>} : vector<16x8xf32>, vector<8x24xf32>, vector<16x24xf32> -> vector<16x24xf32>
    %c3_113 = arith.constant 3 : index
    %c0_114 = arith.constant 0 : index
    %c0_115 = arith.constant 0 : index
    %196 = vector.load %arg6[%c3_113, %c0_114, %c0_115] : memref<4x1x24xf32, #tpu.memory_space<vmem>>, vector<1x1x24xf32>
    %197 = vector.shape_cast %196 : vector<1x1x24xf32> to vector<1x24xf32>
    %198 = vector.broadcast %197 : vector<1x24xf32> to vector<16x24xf32>
    %199 = arith.addf %195, %198 : vector<16x24xf32>
    %200 = vector.extract_strided_slice %199 {offsets = [0, 0], sizes = [16, 8], strides = [1, 1]} : vector<16x24xf32> to vector<16x8xf32>
    %cst_116 = arith.constant 0.353553385 : f32
    %201 = vector.broadcast %cst_116 : f32 to vector<16x8xf32>
    %202 = arith.mulf %200, %201 : vector<16x8xf32>
    %203 = vector.extract_strided_slice %199 {offsets = [0, 8], sizes = [16, 8], strides = [1, 1]} : vector<16x24xf32> to vector<16x8xf32>
    %204 = vector.extract_strided_slice %199 {offsets = [0, 16], sizes = [16, 8], strides = [1, 1]} : vector<16x24xf32> to vector<16x8xf32>
    %205 = vector.extract_strided_slice %202 {offsets = [0, 0], sizes = [16, 4], strides = [1, 1]} : vector<16x8xf32> to vector<16x4xf32>
    %206 = vector.extract_strided_slice %202 {offsets = [0, 4], sizes = [16, 4], strides = [1, 1]} : vector<16x8xf32> to vector<16x4xf32>
    %207 = vector.shape_cast %205 : vector<16x4xf32> to vector<1x16x4xf32>
    %208 = vector.shape_cast %206 : vector<16x4xf32> to vector<1x16x4xf32>
    %209 = tpu.concatenate %207, %208 in 0 : vector<1x16x4xf32>, vector<1x16x4xf32> -> vector<2x16x4xf32>
    %210 = vector.extract_strided_slice %203 {offsets = [0, 0], sizes = [16, 4], strides = [1, 1]} : vector<16x8xf32> to vector<16x4xf32>
    %211 = vector.extract_strided_slice %203 {offsets = [0, 4], sizes = [16, 4], strides = [1, 1]} : vector<16x8xf32> to vector<16x4xf32>
    %212 = vector.shape_cast %210 : vector<16x4xf32> to vector<1x16x4xf32>
    %213 = vector.shape_cast %211 : vector<16x4xf32> to vector<1x16x4xf32>
    %214 = tpu.concatenate %212, %213 in 0 : vector<1x16x4xf32>, vector<1x16x4xf32> -> vector<2x16x4xf32>
    %215 = vector.extract_strided_slice %204 {offsets = [0, 0], sizes = [16, 4], strides = [1, 1]} : vector<16x8xf32> to vector<16x4xf32>
    %216 = vector.extract_strided_slice %204 {offsets = [0, 4], sizes = [16, 4], strides = [1, 1]} : vector<16x8xf32> to vector<16x4xf32>
    %217 = vector.shape_cast %215 : vector<16x4xf32> to vector<1x16x4xf32>
    %218 = vector.shape_cast %216 : vector<16x4xf32> to vector<1x16x4xf32>
    %219 = tpu.concatenate %217, %218 in 0 : vector<1x16x4xf32>, vector<1x16x4xf32> -> vector<2x16x4xf32>
    "tpu.trace_start"() <{level = 10 : i32, message = "hqd,hkd->hqk"}> : () -> ()
    %cst_117 = arith.constant dense<0.000000e+00> : vector<2x16x16xf32>
    %220 = tpu.matmul %209, %214, %cst_117 {dimension_numbers = #tpu.dot_dimension_numbers<[2], [2], [1], [1], [0, 0, 0, 1, 1, 1], [0], [0]>} : vector<2x16x4xf32>, vector<2x16x4xf32>, vector<2x16x16xf32> -> vector<2x16x16xf32>
    "tpu.trace_stop"() : () -> ()
    %cst_118 = arith.constant dense<0xFF800000> : vector<2x16xf32>
    %221 = vector.multi_reduction <maximumf>, %220, %cst_118 [2] : vector<2x16x16xf32> to vector<2x16xf32>
    %222 = vector.shape_cast %221 : vector<2x16xf32> to vector<2x16x1xf32>
    %223 = vector.broadcast %222 : vector<2x16x1xf32> to vector<2x16x16xf32>
    %224 = arith.subf %220, %223 : vector<2x16x16xf32>
    %225 = math.exp %224 : vector<2x16x16xf32>
    %cst_119 = arith.constant dense<0.000000e+00> : vector<2x16xf32>
    %226 = vector.multi_reduction <add>, %225, %cst_119 [2] : vector<2x16x16xf32> to vector<2x16xf32>
    %227 = vector.shape_cast %226 : vector<2x16xf32> to vector<2x16x1xf32>
    %228 = vector.broadcast %227 : vector<2x16x1xf32> to vector<2x16x16xf32>
    %229 = arith.divf %225, %228 : vector<2x16x16xf32>
    "tpu.trace_start"() <{level = 10 : i32, message = "hqk,hkd->hqd"}> : () -> ()
    %cst_120 = arith.constant dense<0.000000e+00> : vector<2x16x4xf32>
    %230 = tpu.matmul %229, %219, %cst_120 {dimension_numbers = #tpu.dot_dimension_numbers<[2], [1], [1], [2], [0, 0, 0, 1, 1, 2], [0], [0]>} : vector<2x16x16xf32>, vector<2x16x4xf32>, vector<2x16x4xf32> -> vector<2x16x4xf32>
    "tpu.trace_stop"() : () -> ()
    %231 = vector.extract_strided_slice %230 {offsets = [0, 0, 0], sizes = [1, 16, 4], strides = [1, 1, 1]} : vector<2x16x4xf32> to vector<1x16x4xf32>
    %232 = vector.shape_cast %231 : vector<1x16x4xf32> to vector<16x4xf32>
    %c3_121 = arith.constant 3 : index
    %c0_122 = arith.constant 0 : index
    %c0_123 = arith.constant 0 : index
    %c0_124 = arith.constant 0 : index
    %233 = vector.load %arg7[%c3_121, %c0_122, %c0_123, %c0_124] : memref<4x2x4x32xf32, #tpu.memory_space<vmem>>, vector<1x1x4x32xf32>
    %234 = vector.shape_cast %233 : vector<1x1x4x32xf32> to vector<4x32xf32>
    %cst_125 = arith.constant dense<0.000000e+00> : vector<16x32xf32>
    %235 = tpu.matmul %232, %234, %cst_125 {dimension_numbers = #tpu.dot_dimension_numbers<[1], [0], [0], [1], [0, 0, 1, 1], [], []>} : vector<16x4xf32>, vector<4x32xf32>, vector<16x32xf32> -> vector<16x32xf32>
    %236 = arith.addf %182, %235 : vector<16x32xf32>
    %237 = vector.extract_strided_slice %230 {offsets = [1, 0, 0], sizes = [1, 16, 4], strides = [1, 1, 1]} : vector<2x16x4xf32> to vector<1x16x4xf32>
    %238 = vector.shape_cast %237 : vector<1x16x4xf32> to vector<16x4xf32>
    %c3_126 = arith.constant 3 : index
    %c1_127 = arith.constant 1 : index
    %c0_128 = arith.constant 0 : index
    %c0_129 = arith.constant 0 : index
    %239 = vector.load %arg7[%c3_126, %c1_127, %c0_128, %c0_129] : memref<4x2x4x32xf32, #tpu.memory_space<vmem>>, vector<1x1x4x32xf32>
    %240 = vector.shape_cast %239 : vector<1x1x4x32xf32> to vector<4x32xf32>
    %cst_130 = arith.constant dense<0.000000e+00> : vector<16x32xf32>
    %241 = tpu.matmul %238, %240, %cst_130 {dimension_numbers = #tpu.dot_dimension_numbers<[1], [0], [0], [1], [0, 0, 1, 1], [], []>} : vector<16x4xf32>, vector<4x32xf32>, vector<16x32xf32> -> vector<16x32xf32>
    %242 = arith.addf %236, %241 : vector<16x32xf32>
    %c0_131 = arith.constant 0 : index
    %c0_132 = arith.constant 0 : index
    %243 = vector.load %arg8[%c0_131, %c0_132] : memref<1x32xf32, #tpu.memory_space<vmem>>, vector<1x32xf32>
    %244 = vector.broadcast %243 : vector<1x32xf32> to vector<16x32xf32>
    %245 = arith.addf %242, %244 : vector<16x32xf32>
    %c0_133 = arith.constant 0 : index
    %c0_134 = arith.constant 0 : index
    %c0_135 = arith.constant 0 : index
    %246 = vector.load %arg9[%c0_133, %c0_134, %c0_135] : memref<1x16x32xf32, #tpu.memory_space<vmem>>, vector<1x16x32xf32>
    %247 = vector.shape_cast %246 : vector<1x16x32xf32> to vector<16x32xf32>
    %248 = vector.shape_cast %245 : vector<16x32xf32> to vector<1x16x32xf32>
    tpu.vector_store %arg9[%c0_133, %c0_134, %c0_135], %248 {strides = array<i32>} : memref<1x16x32xf32, #tpu.memory_space<vmem>>, vector<1x16x32xf32>,
    return
  }
  func.func @transform_0(%arg0: i32) -> (i32, i32, i32) {
    %c0_i32 = arith.constant 0 : i32
    %c0_i32_0 = arith.constant 0 : i32
    %c0_i32_1 = arith.constant 0 : i32
    return %arg0, %c0_i32, %c0_i32_0 : i32, i32, i32
  }
  func.func @transform_1(%arg0: i32) -> (i32, i32, i32) {
    %c0_i32 = arith.constant 0 : i32
    %c0_i32_0 = arith.constant 0 : i32
    %c0_i32_1 = arith.constant 0 : i32
    %c0_i32_2 = arith.constant 0 : i32
    return %c0_i32, %c0_i32_0, %c0_i32_1 : i32, i32, i32
  }
  func.func @transform_2(%arg0: i32) -> (i32, i32, i32) {
    %c0_i32 = arith.constant 0 : i32
    %c0_i32_0 = arith.constant 0 : i32
    %c0_i32_1 = arith.constant 0 : i32
    %c0_i32_2 = arith.constant 0 : i32
    return %c0_i32, %c0_i32_0, %c0_i32_1 : i32, i32, i32
  }
  func.func @transform_3(%arg0: i32) -> (i32, i32, i32) {
    %c0_i32 = arith.constant 0 : i32
    %c0_i32_0 = arith.constant 0 : i32
    %c0_i32_1 = arith.constant 0 : i32
    %c0_i32_2 = arith.constant 0 : i32
    return %c0_i32, %c0_i32_0, %c0_i32_1 : i32, i32, i32
  }
  func.func @transform_4(%arg0: i32) -> (i32, i32, i32) {
    %c0_i32 = arith.constant 0 : i32
    %c0_i32_0 = arith.constant 0 : i32
    %c0_i32_1 = arith.constant 0 : i32
    %c0_i32_2 = arith.constant 0 : i32
    return %c0_i32, %c0_i32_0, %c0_i32_1 : i32, i32, i32
  }
  func.func @transform_5(%arg0: i32) -> (i32, i32, i32) {
    %c0_i32 = arith.constant 0 : i32
    %c0_i32_0 = arith.constant 0 : i32
    %c0_i32_1 = arith.constant 0 : i32
    %c0_i32_2 = arith.constant 0 : i32
    return %c0_i32, %c0_i32_0, %c0_i32_1 : i32, i32, i32
  }
  func.func @transform_6(%arg0: i32) -> (i32, i32, i32, i32) {
    %c0_i32 = arith.constant 0 : i32
    %c0_i32_0 = arith.constant 0 : i32
    %c0_i32_1 = arith.constant 0 : i32
    %c0_i32_2 = arith.constant 0 : i32
    %c0_i32_3 = arith.constant 0 : i32
    return %c0_i32, %c0_i32_0, %c0_i32_1, %c0_i32_2 : i32, i32, i32, i32
  }
  func.func @transform_7(%arg0: i32) -> (i32, i32) {
    %c0_i32 = arith.constant 0 : i32
    %c0_i32_0 = arith.constant 0 : i32
    %c0_i32_1 = arith.constant 0 : i32
    return %c0_i32, %c0_i32_0 : i32, i32
  }
  func.func @transform_8(%arg0: i32) -> (i32, i32, i32) {
    %c0_i32 = arith.constant 0 : i32
    %c0_i32_0 = arith.constant 0 : i32
    %c0_i32_1 = arith.constant 0 : i32
    return %arg0, %c0_i32, %c0_i32_0 : i32, i32, i32
  }
}

</mosaic_0001>

<llo_original>
// kernel: mosa_forward.1
$region0: #{mosa_forward.1}
  #allocation0 [shape = 'u32[]', space=smem, size = 0x4, offset = 0x4, fixed_abs, tag = 'smem constant byte address 0x4 - core index']
  #allocation1 [shape = 'u32[144,128]{1,0:T(1,128)}', space=vmem, size = 0x12000, scoped, tag = 'internal scratch']
  %s0 = inlined_call_operand.vmem [shape: f32[2,16,32], index: 0, kind: input, shape index: {}]
  %s1 = inlined_call_operand.vmem [shape: f32[4,16,16], index: 1, kind: input, shape index: {}]
  %s2 = inlined_call_operand.vmem [shape: f32[4,32,8], index: 2, kind: input, shape index: {}]
  %s3 = inlined_call_operand.vmem [shape: f32[4,1,8], index: 3, kind: input, shape index: {}]
  %s4 = inlined_call_operand.vmem [shape: f32[4,8,24], index: 4, kind: input, shape index: {}]
  %s5 = inlined_call_operand.hbm [shape: f32[4,1,24], index: 5, kind: input, shape index: {}]
  %s6 = inlined_call_operand.vmem [shape: f32[4,2,4,32], index: 6, kind: input, shape index: {}]
  %s7 = inlined_call_operand.vmem [shape: f32[1,32], index: 7, kind: input, shape index: {}]
  %s8 = inlined_call_operand.hbm [shape: f32[2,16,32], index: 8, kind: output, shape index: {}]
  %s9 = sld [smem:[#allocation0]]
  $region69: #{mosa_forward.1} parent=0
    _
  %s11 = ssub.s32 1, %s9
  %s12 = scalar_select 0, %s11, %s9
  $region1: #{mosa_forward.1} parent=0
    #allocation2 [shape = 'u8[2048]{0}', space=vmem, size = 0x800, scoped, tag = 'input window, operand 5, single buffered']
    #allocation3 [shape = 's32[2]{0}', space=sflag, size = 0x8, scoped, tag = 'scoped memory for mosa_forward.1']
    #allocation4 [shape = 's32[2]{0}', space=sflag, size = 0x8, scoped, tag = 'scoped memory for mosa_forward.1']
    #allocation5 [shape = 'u8[16384]{0}', space=vmem, size = 0x4000, scoped, tag = 'output window, operand 0']
    %13 = vsyncpa [#allocation3], 0
    %14 = vsyncpa [#allocation4], 0
    %s15 = scalar_lea.sflag [#allocation4], 1
    %16 = vsyncpa %s15, 0
    loop: start=0, step=1, limit=4
    $region2: #{mosa_forward.1} parent=1 // loop_pre_header
      _
    $region3: #{mosa_forward.1} parent=1 // loop_header
      %s18 = sphi 0, %s22
      %p19 = scmp.ge.s32.totalorder %s18, 4
      %s28 = sphi 0, %s30
      %s31 = sphi 0, %s28
      %s32 = sphi 0, %s31
      %s48 = sphi 0, %s32
      %s52 = sphi 0, %s52
      %s54 = sphi 0, %s52
      %s55 = sphi 0, %s54
      %s69 = sphi 0, %s55
      %s73 = sphi 0, %s73
      %s75 = sphi 0, %s73
      %s76 = sphi 0, %s75
      %s90 = sphi 0, %s76
      %s94 = sphi 0, %s94
      %s96 = sphi 0, %s94
      %s97 = sphi 0, %s96
      %s111 = sphi 0, %s97
      %s115 = sphi 0, %s115
      %s117 = sphi 0, %s115
      %s118 = sphi 0, %s117
      %s132 = sphi 0, %s118
      %s136 = sphi 0, %s136
      %s138 = sphi 0, %s136
      %s139 = sphi 0, %s138
      %s153 = sphi 0, %s139
      %s157 = sphi 0, %s157
      %s159 = sphi 0, %s157
      %s160 = sphi 0, %s159
      %s174 = sphi 0, %s160
      %s178 = sphi 0, %s178
      %s180 = sphi 0, %s178
      %s181 = sphi 0, %s180
      %s195 = sphi 0, %s181
      %s201 = sphi 0, %s203
      %s204 = sphi 0, %s201
      %s205 = sphi 0, %s204
      %s221 = sphi 0, %s205
    $region4: #{mosa_forward.1} parent=1 // loop_header_branch
      %21 = sbr.rel (%p19) target = $region8
    $region5: #{mosa_forward.1} parent=1 // loop_body
      %s23 = ssub.s32 %s18, 1
      %s24 = ssub.s32 %s18, 2
      %s25 = sadd.s32 %s18, 1
      %s26 = ssub.s32 %s18, %s25
      %p27 = scmp.eq.s32.totalorder %s26, 0
      %s29 = sadd.s32 %s28, 1
      %s30 = scalar_select %p27, %s28, %s29
      %p33 = pneg %p27
      %p34 = scmp.eq.s32.totalorder %s18, 1
      %p35 = por %p33, %p34
      %p36 = scmp.ne.s32.totalorder %s28, %s31
      %p37 = scmp.eq.s32.totalorder %s18, 0
      %p38 = por %p36, %p37
      %p39 = scmp.ne.s32.totalorder %s28, %s31
      %p40 = scmp.eq.s32.totalorder %s23, 1
      %p41 = por %p39, %p40
      %p42 = scmp.ne.s32.totalorder %s31, %s32
      %p43 = scmp.eq.s32.totalorder %s23, 0
      %p44 = por %p42, %p43
      %p45 = scmp.ne.s32.totalorder %s31, %s32
      %p46 = scmp.eq.s32.totalorder %s24, 1
      %p47 = por %p45, %p46
      %p49 = scmp.ne.s32.totalorder %s32, %s48
      %p50 = scmp.eq.s32.totalorder %s24, 0
      %p51 = por %p49, %p50
      %s53 = sadd.s32 %s52, 1
      %p56 = scmp.eq.s32.totalorder %s18, 1
      %p57 = scmp.ne.s32.totalorder %s52, %s54
      %p58 = scmp.eq.s32.totalorder %s18, 0
      %p59 = por %p57, %p58
      %p60 = scmp.ne.s32.totalorder %s52, %s54
      %p61 = scmp.eq.s32.totalorder %s23, 1
      %p62 = por %p60, %p61
      %p63 = scmp.ne.s32.totalorder %s54, %s55
      %p64 = scmp.eq.s32.totalorder %s23, 0
      %p65 = por %p63, %p64
      %p66 = scmp.ne.s32.totalorder %s54, %s55
      %p67 = scmp.eq.s32.totalorder %s24, 1
      %p68 = por %p66, %p67
      %p70 = scmp.ne.s32.totalorder %s55, %s69
      %p71 = scmp.eq.s32.totalorder %s24, 0
      %p72 = por %p70, %p71
      %s74 = sadd.s32 %s73, 1
      %p77 = scmp.eq.s32.totalorder %s18, 1
      %p78 = scmp.ne.s32.totalorder %s73, %s75
      %p79 = scmp.eq.s32.totalorder %s18, 0
      %p80 = por %p78, %p79
      %p81 = scmp.ne.s32.totalorder %s73, %s75
      %p82 = scmp.eq.s32.totalorder %s23, 1
      %p83 = por %p81, %p82
      %p84 = scmp.ne.s32.totalorder %s75, %s76
      %p85 = scmp.eq.s32.totalorder %s23, 0
      %p86 = por %p84, %p85
      %p87 = scmp.ne.s32.totalorder %s75, %s76
      %p88 = scmp.eq.s32.totalorder %s24, 1
      %p89 = por %p87, %p88
      %p91 = scmp.ne.s32.totalorder %s76, %s90
      %p92 = scmp.eq.s32.totalorder %s24, 0
      %p93 = por %p91, %p92
      %s95 = sadd.s32 %s94, 1
      %p98 = scmp.eq.s32.totalorder %s18, 1
      %p99 = scmp.ne.s32.totalorder %s94, %s96
      %p100 = scmp.eq.s32.totalorder %s18, 0
      %p101 = por %p99, %p100
      %p102 = scmp.ne.s32.totalorder %s94, %s96
      %p103 = scmp.eq.s32.totalorder %s23, 1
      %p104 = por %p102, %p103
      %p105 = scmp.ne.s32.totalorder %s96, %s97
      %p106 = scmp.eq.s32.totalorder %s23, 0
      %p107 = por %p105, %p106
      %p108 = scmp.ne.s32.totalorder %s96, %s97
      %p109 = scmp.eq.s32.totalorder %s24, 1
      %p110 = por %p108, %p109
      %p112 = scmp.ne.s32.totalorder %s97, %s111
      %p113 = scmp.eq.s32.totalorder %s24, 0
      %p114 = por %p112, %p113
      %s116 = sadd.s32 %s115, 1
      %p119 = scmp.eq.s32.totalorder %s18, 1
      %p120 = scmp.ne.s32.totalorder %s115, %s117
      %p121 = scmp.eq.s32.totalorder %s18, 0
      %p122 = por %p120, %p121
      %p123 = scmp.ne.s32.totalorder %s115, %s117
      %p124 = scmp.eq.s32.totalorder %s23, 1
      %p125 = por %p123, %p124
      %p126 = scmp.ne.s32.totalorder %s117, %s118
      %p127 = scmp.eq.s32.totalorder %s23, 0
      %p128 = por %p126, %p127
      %p129 = scmp.ne.s32.totalorder %s117, %s118
      %p130 = scmp.eq.s32.totalorder %s24, 1
      %p131 = por %p129, %p130
      %p133 = scmp.ne.s32.totalorder %s118, %s132
      %p134 = scmp.eq.s32.totalorder %s24, 0
      %p135 = por %p133, %p134
      %s137 = sadd.s32 %s136, 1
      %p140 = scmp.eq.s32.totalorder %s18, 1
      %p141 = scmp.ne.s32.totalorder %s136, %s138
      %p142 = scmp.eq.s32.totalorder %s18, 0
      %p143 = por %p141, %p142
      %p144 = scmp.ne.s32.totalorder %s136, %s138
      %p145 = scmp.eq.s32.totalorder %s23, 1
      %p146 = por %p144, %p145
      %p147 = scmp.ne.s32.totalorder %s138, %s139
      %p148 = scmp.eq.s32.totalorder %s23, 0
      %p149 = por %p147, %p148
      %p150 = scmp.ne.s32.totalorder %s138, %s139
      %p151 = scmp.eq.s32.totalorder %s24, 1
      %p152 = por %p150, %p151
      %p154 = scmp.ne.s32.totalorder %s139, %s153
      %p155 = scmp.eq.s32.totalorder %s24, 0
      %p156 = por %p154, %p155
      %s158 = sadd.s32 %s157, 1
      %p161 = scmp.eq.s32.totalorder %s18, 1
      %p162 = scmp.ne.s32.totalorder %s157, %s159
      %p163 = scmp.eq.s32.totalorder %s18, 0
      %p164 = por %p162, %p163
      %p165 = scmp.ne.s32.totalorder %s157, %s159
      %p166 = scmp.eq.s32.totalorder %s23, 1
      %p167 = por %p165, %p166
      %p168 = scmp.ne.s32.totalorder %s159, %s160
      %p169 = scmp.eq.s32.totalorder %s23, 0
      %p170 = por %p168, %p169
      %p171 = scmp.ne.s32.totalorder %s159, %s160
      %p172 = scmp.eq.s32.totalorder %s24, 1
      %p173 = por %p171, %p172
      %p175 = scmp.ne.s32.totalorder %s160, %s174
      %p176 = scmp.eq.s32.totalorder %s24, 0
      %p177 = por %p175, %p176
      %s179 = sadd.s32 %s178, 1
      %p182 = scmp.eq.s32.totalorder %s18, 1
      %p183 = scmp.ne.s32.totalorder %s178, %s180
      %p184 = scmp.eq.s32.totalorder %s18, 0
      %p185 = por %p183, %p184
      %p186 = scmp.ne.s32.totalorder %s178, %s180
      %p187 = scmp.eq.s32.totalorder %s23, 1
      %p188 = por %p186, %p187
      %p189 = scmp.ne.s32.totalorder %s180, %s181
      %p190 = scmp.eq.s32.totalorder %s23, 0
      %p191 = por %p189, %p190
      %p192 = scmp.ne.s32.totalorder %s180, %s181
      %p193 = scmp.eq.s32.totalorder %s24, 1
      %p194 = por %p192, %p193
      %p196 = scmp.ne.s32.totalorder %s181, %s195
      %p197 = scmp.eq.s32.totalorder %s24, 0
      %p198 = por %p196, %p197
      %s199 = ssub.s32 %s18, %s25
      %p200 = scmp.eq.s32.totalorder %s199, 0
      %s202 = sadd.s32 %s201, 1
      %s203 = scalar_select %p200, %s201, %s202
      %p206 = pneg %p200
      %p207 = scmp.eq.s32.totalorder %s18, 1
      %p208 = por %p206, %p207
      %p209 = scmp.ne.s32.totalorder %s201, %s204
      %p210 = scmp.eq.s32.totalorder %s18, 0
      %p211 = por %p209, %p210
      %p212 = scmp.ne.s32.totalorder %s201, %s204
      %p213 = scmp.eq.s32.totalorder %s23, 1
      %p214 = por %p212, %p213
      %p215 = scmp.ne.s32.totalorder %s204, %s205
      %p216 = scmp.eq.s32.totalorder %s23, 0
      %p217 = por %p215, %p216
      %p218 = scmp.ne.s32.totalorder %s204, %s205
      %p219 = scmp.eq.s32.totalorder %s24, 1
      %p220 = por %p218, %p219
      %p222 = scmp.ne.s32.totalorder %s205, %s221
      %p223 = scmp.eq.s32.totalorder %s24, 0
      %p224 = por %p222, %p223
      %p225 = scmp.le.s32.totalorder 1, %s18
      %p226 = scmp.lt.s32.totalorder %s18, 3
      %p227 = pnand %p225, %p226
      %p228 = pneg %p227
      // Predicated region
      $region9: #{mosa_forward.1} parent=5 // pred_check
        _
      $region10: #{mosa_forward.1} parent=5 // pred_check_branch
        %230 = sbr.rel (%p227) target = $region12
      $region11: #{mosa_forward.1} parent=5 // pred_region
        %s231 = ssub.s32 %s18, 1
        // Predicated region
        $region13: #{mosa_forward.1} parent=11 // pred_check
          %p232 = pneg %p65
        $region14: #{mosa_forward.1} parent=11 // pred_check_branch
          %234 = sbr.rel (%p232) target = $region16
        $region15: #{mosa_forward.1} parent=11 // pred_region
          _
        $region16: #{mosa_forward.1} parent=11 // pred_fallthru
          _
        // Predicated region
        $region17: #{mosa_forward.1} parent=11 // pred_check
          %p235 = pneg %p86
        $region18: #{mosa_forward.1} parent=11 // pred_check_branch
          %237 = sbr.rel (%p235) target = $region20
        $region19: #{mosa_forward.1} parent=11 // pred_region
          _
        $region20: #{mosa_forward.1} parent=11 // pred_fallthru
          _
        // Predicated region
        $region21: #{mosa_forward.1} parent=11 // pred_check
          %p238 = pneg %p107
        $region22: #{mosa_forward.1} parent=11 // pred_check_branch
          %240 = sbr.rel (%p238) target = $region24
        $region23: #{mosa_forward.1} parent=11 // pred_region
          _
        $region24: #{mosa_forward.1} parent=11 // pred_fallthru
          _
        // Predicated region
        $region25: #{mosa_forward.1} parent=11 // pred_check
          %p241 = pneg %p128
        $region26: #{mosa_forward.1} parent=11 // pred_check_branch
          %243 = sbr.rel (%p241) target = $region28
        $region27: #{mosa_forward.1} parent=11 // pred_region
          _
        $region28: #{mosa_forward.1} parent=11 // pred_fallthru
          _
        // Predicated region
        $region29: #{mosa_forward.1} parent=11 // pred_check
          %p244 = pneg %p149
        $region30: #{mosa_forward.1} parent=11 // pred_check_branch
          %246 = sbr.rel (%p244) target = $region32
        $region31: #{mosa_forward.1} parent=11 // pred_region
          %s248 = ssub.s32 64, 64
          %249 = vsyncadd [#allocation3], %s248
          %s250 = sshll.u32 [#allocation2], 4
          %s251 = int_to_ptr.vmem [resolvable:$true] %s250
          %256 = dma.hbm_to_vmem [thread:$0]  %s5, 64, %s251, [#allocation3], 16, 16, 1
        $region32: #{mosa_forward.1} parent=11 // pred_fallthru
          _
        // Predicated region
        $region33: #{mosa_forward.1} parent=11 // pred_check
          %p257 = pneg %p170
        $region34: #{mosa_forward.1} parent=11 // pred_check_branch
          %259 = sbr.rel (%p257) target = $region36
        $region35: #{mosa_forward.1} parent=11 // pred_region
          _
        $region36: #{mosa_forward.1} parent=11 // pred_fallthru
          _
        // Predicated region
        $region37: #{mosa_forward.1} parent=11 // pred_check
          %p260 = pneg %p191
        $region38: #{mosa_forward.1} parent=11 // pred_check_branch
          %262 = sbr.rel (%p260) target = $region40
        $region39: #{mosa_forward.1} parent=11 // pred_region
          _
        $region40: #{mosa_forward.1} parent=11 // pred_fallthru
          _
      $region12: #{mosa_forward.1} parent=5 // pred_fallthru
        _
      %p263 = scmp.lt.s32.totalorder %s18, 2
      // Predicated region
      $region41: #{mosa_forward.1} parent=5 // pred_check
        %p264 = pneg %p263
      $region42: #{mosa_forward.1} parent=5 // pred_check_branch
        %266 = sbr.rel (%p264) target = $region44
      $region43: #{mosa_forward.1} parent=5 // pred_region
        // Predicated region
        $region45: #{mosa_forward.1} parent=43 // pred_check
          %p267 = pneg %p38
        $region46: #{mosa_forward.1} parent=43 // pred_check_branch
          %269 = sbr.rel (%p267) target = $region48
        $region47: #{mosa_forward.1} parent=43 // pred_region
          %p270 = scmp.lt.s32.totalorder %s18, 1
          %s271 = scalar_select %p270, %s18, 1
          %s272 = smul.addr %s271, 2
          %s273 = smul.addr %s272, 8
          %s274 = scalar_lea.vmem %s0, %s273
        $region48: #{mosa_forward.1} parent=43 // pred_fallthru
          _
      $region44: #{mosa_forward.1} parent=5 // pred_fallthru
        _
      %p275 = scmp.le.s32.totalorder 1, %s18
      %p276 = scmp.lt.s32.totalorder %s18, 3
      %p277 = pnand %p275, %p276
      %p278 = pneg %p277
      // Predicated region
      $region49: #{mosa_forward.1} parent=5 // pred_check
        _
      $region50: #{mosa_forward.1} parent=5 // pred_check_branch
        %280 = sbr.rel (%p277) target = $region52
      $region51: #{mosa_forward.1} parent=5 // pred_region
        %s281 = ssub.s32 %s18, 1
        // Predicated region
        $region53: #{mosa_forward.1} parent=51 // pred_check
          %p282 = pneg %p149
        $region54: #{mosa_forward.1} parent=51 // pred_check_branch
          %284 = sbr.rel (%p282) target = $region56
        $region55: #{mosa_forward.1} parent=51 // pred_region
          %285 = dma.done [#allocation3], 64
        $region56: #{mosa_forward.1} parent=51 // pred_fallthru
          _
        %p286 = scmp.lt.s32.totalorder %s23, 1
        %s287 = scalar_select %p286, %s23, 1
        %s288 = smul.addr %s287, 2
        %s289 = smul.addr %s288, 8
        %s290 = scalar_lea.vmem %s0, %s289
        %p291 = pneg %p44
        %p292 = pneg %p41
        %p293 = pneg %p65
        %p294 = pneg %p62
        %p295 = pneg %p86
        %p296 = pneg %p83
        %p297 = pneg %p107
        %p298 = pneg %p104
        %p299 = pneg %p128
        %p300 = pneg %p125
        %p301 = pneg %p149
        %p302 = pneg %p146
        %p303 = pneg %p170
        %p304 = pneg %p167
        %p305 = pneg %p191
        %p306 = pneg %p188
        %p307 = pneg %p217
        %p308 = pneg %p214
        %s309 = sand.u32 %s204, 1
        %s310 = scalar_lea.sflag [#allocation4], %s309
        %s311 = sand.u32 %s204, 1
        %s312 = smul.addr %s311, 16
        %s313 = scalar_lea.vmem [#allocation5], %s312
        %p314 = scmp.lt.s32.totalorder %s23, 1
        %s315 = scalar_select %p314, %s23, 1
        %s316 = smul.addr %s315, 2
        %s317 = smul.addr %s316, 8
        %s318 = scalar_lea.vmem %s0, %s317
        %v319 = vld [vmem:[%s318] sm:$0xff]
        %v320 = vld [vmem:[%s318 + $0x8] sm:$0xff]
        %v321 = vld [vmem:[%s2] sm:$0xff]
        %v322 = vld [vmem:[%s2 + $0x8] sm:$0xff]
        %v323 = vld [vmem:[%s2 + $0x10] sm:$0xff]
        %v324 = vld [vmem:[%s2 + $0x18] sm:$0xff]
        %v325 = vld [vmem:[%s3] sm:$0x1]
        %v327 = vlaneseq
        %v328 = vshrl.u32 %v327, 7
        %v329 = vsub.s32 0, %v328
        %v330 = vrot.slane %v325, %v329
        %vm332 = vcmask 261120
        %v334 = vsel %vm332, %v319, 0
        %v337 = vsel %vm332, %v320, 0
        %339 = vmatprep.subr.mxu0 0.0
        %340 = vmatpush1.msra.mxu0 0.0
        %341 = vmatprep.subr.mxu0 0.0
        %342 = vmatpush1.msra.mxu0 0.0
        %343 = vmatprep.subr.mxu0 0.0
        %344 = vmatpush1.msra.mxu0 0.0
        %345 = vmatprep.subr.mxu0 0.0
        %346 = vmatpush1.msra.mxu0 0.0
        %347 = vmatprep.subr.mxu0 0.0
        %348 = vmatpush1.msra.mxu0 0.0
        %349 = vmatprep.subr.mxu0 0.0
        %350 = vmatpush1.msra.mxu0 0.0
        %351 = vmatprep.subr.mxu0 0.0
        %352 = vmatpush1.msra.mxu0 0.0
        %353 = vmatprep.subr.mxu0 0.0
        %354 = vmatpush1.msra.mxu0 0.0
        %355 = vmatprep.subr.mxu0 0.0
        %356 = vmatpush1.msra.mxu0 0.0
        %357 = vmatprep.subr.mxu0 0.0
        %358 = vmatpush1.msra.mxu0 0.0
        %359 = vmatprep.subr.mxu0 0.0
        %360 = vmatpush1.msra.mxu0 0.0
        %361 = vmatprep.subr.mxu0 0.0
        %362 = vmatpush1.msra.mxu0 0.0
        %363 = vmatprep.subr.mxu0 0.0
        %364 = vmatpush1.msra.mxu0 %v324
        %365 = vmatprep.subr.mxu0 0.0
        %366 = vmatpush1.msra.mxu0 %v323
        %367 = vmatprep.subr.mxu0 0.0
        %368 = vmatpush1.msra.mxu0 %v322
        %369 = vmatprep.subr.mxu0 0.0
        %370 = vmatpush1.msra.mxu0 %v321
        %371 = vmatprep.subr.mxu0 0.0
        %372 = vmatpush2.msra.mxu0 0.0
        %373 = vmatprep.subr.mxu0 0.0
        %374 = vmatpush2.msra.mxu0 0.0
        %375 = vmatprep.subr.mxu0 0.0
        %376 = vmatpush2.msra.mxu0 0.0
        %377 = vmatprep.subr.mxu0 0.0
        %378 = vmatpush2.msra.mxu0 0.0
        %379 = vmatprep.subr.mxu0 0.0
        %380 = vmatpush2.msra.mxu0 0.0
        %381 = vmatprep.subr.mxu0 0.0
        %382 = vmatpush2.msra.mxu0 0.0
        %383 = vmatprep.subr.mxu0 0.0
        %384 = vmatpush2.msra.mxu0 0.0
        %385 = vmatprep.subr.mxu0 0.0
        %386 = vmatpush2.msra.mxu0 0.0
        %387 = vmatprep.subr.mxu0 0.0
        %388 = vmatpush2.msra.mxu0 0.0
        %389 = vmatprep.subr.mxu0 0.0
        %390 = vmatpush2.msra.mxu0 0.0
        %391 = vmatprep.subr.mxu0 0.0
        %392 = vmatpush2.msra.mxu0 0.0
        %393 = vmatprep.subr.mxu0 0.0
        %394 = vmatpush2.msra.mxu0 0.0
        %395 = vmatprep.subr.mxu0 0.0
        %396 = vmatpush2.msra.mxu0 0.0
        %397 = vmatprep.subr.mxu0 0.0
        %398 = vmatpush2.msra.mxu0 0.0
        %399 = vmatprep.subr.mxu0 0.0
        %400 = vmatpush2.msra.mxu0 0.0
        %401 = vmatprep.subr.mxu0 0.0
        %402 = vmatpush2.msra.mxu0 0.0
        %403 = vmatprep.mubr.f32.mxu0 0.0
        %404 = vmatmul.mubr.f32.gmra.mxu0 %v334
        %v405 = vpop.f32.mrf.mxu0
        %v406 = vadd.f32 %v330, %v405
        %v407 = vpop.f32.mrf.mxu0
        %408 = vmatprep.mubr.f32.mxu0 0.0
        %409 = vmatmul.mubr.f32.gmra.mxu0 %v337
        %v410 = vpop.f32.mrf.mxu0
        %v411 = vadd.f32 %v330, %v410
        %v412 = vpop.f32.mrf.mxu0
        %413 = vdwg.mxu0
        %v414 = vld [vmem:[%s1] sm:$0xff]
        %v415 = vld [vmem:[%s1 + $0x8] sm:$0xff]
        %vm416 = vcmask 130048
        %v418 = vsel %vm416, %v414, 0
        %v421 = vsel %vm416, %v415, 0
        %423 = vmatprep.subr.mxu0 0.0
        %424 = vmatpush1.msra.mxu0 0.0
        %425 = vmatprep.subr.mxu0 0.0
        %426 = vmatpush1.msra.mxu0 0.0
        %427 = vmatprep.subr.mxu0 0.0
        %428 = vmatpush1.msra.mxu0 0.0
        %429 = vmatprep.subr.mxu0 0.0
        %430 = vmatpush1.msra.mxu0 0.0
        %431 = vmatprep.subr.mxu0 0.0
        %432 = vmatpush1.msra.mxu0 0.0
        %433 = vmatprep.subr.mxu0 0.0
        %434 = vmatpush1.msra.mxu0 0.0
        %435 = vmatprep.subr.mxu0 0.0
        %436 = vmatpush1.msra.mxu0 0.0
        %437 = vmatprep.subr.mxu0 0.0
        %438 = vmatpush1.msra.mxu0 0.0
        %439 = vmatprep.subr.mxu0 0.0
        %440 = vmatpush1.msra.mxu0 0.0
        %441 = vmatprep.subr.mxu0 0.0
        %442 = vmatpush1.msra.mxu0 0.0
        %443 = vmatprep.subr.mxu0 0.0
        %444 = vmatpush1.msra.mxu0 0.0
        %445 = vmatprep.subr.mxu0 0.0
        %446 = vmatpush1.msra.mxu0 0.0
        %447 = vmatprep.subr.mxu0 0.0
        %448 = vmatpush1.msra.mxu0 0.0
        %449 = vmatprep.subr.mxu0 0.0
        %450 = vmatpush1.msra.mxu0 0.0
        %451 = vmatprep.subr.mxu0 0.0
        %452 = vmatpush1.msra.mxu0 %v411
        %453 = vmatprep.subr.mxu0 0.0
        %454 = vmatpush1.msra.mxu0 %v406
        %455 = vmatprep.subr.mxu0 0.0
        %456 = vmatpush2.msra.mxu0 0.0
        %457 = vmatprep.subr.mxu0 0.0
        %458 = vmatpush2.msra.mxu0 0.0
        %459 = vmatprep.subr.mxu0 0.0
        %460 = vmatpush2.msra.mxu0 0.0
        %461 = vmatprep.subr.mxu0 0.0
        %462 = vmatpush2.msra.mxu0 0.0
        %463 = vmatprep.subr.mxu0 0.0
        %464 = vmatpush2.msra.mxu0 0.0
        %465 = vmatprep.subr.mxu0 0.0
        %466 = vmatpush2.msra.mxu0 0.0
        %467 = vmatprep.subr.mxu0 0.0
        %468 = vmatpush2.msra.mxu0 0.0
        %469 = vmatprep.subr.mxu0 0.0
        %470 = vmatpush2.msra.mxu0 0.0
        %471 = vmatprep.subr.mxu0 0.0
        %472 = vmatpush2.msra.mxu0 0.0
        %473 = vmatprep.subr.mxu0 0.0
        %474 = vmatpush2.msra.mxu0 0.0
        %475 = vmatprep.subr.mxu0 0.0
        %476 = vmatpush2.msra.mxu0 0.0
        %477 = vmatprep.subr.mxu0 0.0
        %478 = vmatpush2.msra.mxu0 0.0
        %479 = vmatprep.subr.mxu0 0.0
        %480 = vmatpush2.msra.mxu0 0.0
        %481 = vmatprep.subr.mxu0 0.0
        %482 = vmatpush2.msra.mxu0 0.0
        %483 = vmatprep.subr.mxu0 0.0
        %484 = vmatpush2.msra.mxu0 0.0
        %485 = vmatprep.subr.mxu0 0.0
        %486 = vmatpush2.msra.mxu0 0.0
        %487 = vmatprep.mubr.f32.mxu0 0.0
        %488 = vmatmul.mubr.f32.gmra.mxu0 %v418
        %v489 = vpop.f32.mrf.mxu0
        %v490 = vadd.f32 0.0, %v489
        %v491 = vpop.f32.mrf.mxu0
        %492 = vmatprep.mubr.f32.mxu0 0.0
        %493 = vmatmul.mubr.f32.gmra.mxu0 %v421
        %v494 = vpop.f32.mrf.mxu0
        %v495 = vadd.f32 0.0, %v494
        %v496 = vpop.f32.mrf.mxu0
        %497 = vdwg.mxu0
        %v498 = vld [vmem:[%s4] sm:$0xff]
        %v499 = vld [vmem:[#allocation2] sm:$0x1]
        %v501 = vlaneseq
        %v502 = vshrl.u32 %v501, 7
        %v503 = vsub.s32 0, %v502
        %v504 = vrot.slane %v499, %v503
        %vm506 = vcmask 64512
        %v508 = vsel %vm506, %v490, 0
        %v511 = vsel %vm506, %v495, 0
        %513 = vmatprep.subr.mxu0 0.0
        %514 = vmatpush1.msra.mxu0 0.0
        %515 = vmatprep.subr.mxu0 0.0
        %516 = vmatpush1.msra.mxu0 0.0
        %517 = vmatprep.subr.mxu0 0.0
        %518 = vmatpush1.msra.mxu0 0.0
        %519 = vmatprep.subr.mxu0 0.0
        %520 = vmatpush1.msra.mxu0 0.0
        %521 = vmatprep.subr.mxu0 0.0
        %522 = vmatpush1.msra.mxu0 0.0
        %523 = vmatprep.subr.mxu0 0.0
        %524 = vmatpush1.msra.mxu0 0.0
        %525 = vmatprep.subr.mxu0 0.0
        %526 = vmatpush1.msra.mxu0 0.0
        %527 = vmatprep.subr.mxu0 0.0
        %528 = vmatpush1.msra.mxu0 0.0
        %529 = vmatprep.subr.mxu0 0.0
        %530 = vmatpush1.msra.mxu0 0.0
        %531 = vmatprep.subr.mxu0 0.0
        %532 = vmatpush1.msra.mxu0 0.0
        %533 = vmatprep.subr.mxu0 0.0
        %534 = vmatpush1.msra.mxu0 0.0
        %535 = vmatprep.subr.mxu0 0.0
        %536 = vmatpush1.msra.mxu0 0.0
        %537 = vmatprep.subr.mxu0 0.0
        %538 = vmatpush1.msra.mxu0 0.0
        %539 = vmatprep.subr.mxu0 0.0
        %540 = vmatpush1.msra.mxu0 0.0
        %541 = vmatprep.subr.mxu0 0.0
        %542 = vmatpush1.msra.mxu0 0.0
        %543 = vmatprep.subr.mxu0 0.0
        %544 = vmatpush1.msra.mxu0 %v498
        %545 = vmatprep.subr.mxu0 0.0
        %546 = vmatpush2.msra.mxu0 0.0
        %547 = vmatprep.subr.mxu0 0.0
        %548 = vmatpush2.msra.mxu0 0.0
        %549 = vmatprep.subr.mxu0 0.0
        %550 = vmatpush2.msra.mxu0 0.0
        %551 = vmatprep.subr.mxu0 0.0
        %552 = vmatpush2.msra.mxu0 0.0
        %553 = vmatprep.subr.mxu0 0.0
        %554 = vmatpush2.msra.mxu0 0.0
        %555 = vmatprep.subr.mxu0 0.0
        %556 = vmatpush2.msra.mxu0 0.0
        %557 = vmatprep.subr.mxu0 0.0
        %558 = vmatpush2.msra.mxu0 0.0
        %559 = vmatprep.subr.mxu0 0.0
        %560 = vmatpush2.msra.mxu0 0.0
        %561 = vmatprep.subr.mxu0 0.0
        %562 = vmatpush2.msra.mxu0 0.0
        %563 = vmatprep.subr.mxu0 0.0
        %564 = vmatpush2.msra.mxu0 0.0
        %565 = vmatprep.subr.mxu0 0.0
        %566 = vmatpush2.msra.mxu0 0.0
        %567 = vmatprep.subr.mxu0 0.0
        %568 = vmatpush2.msra.mxu0 0.0
        %569 = vmatprep.subr.mxu0 0.0
        %570 = vmatpush2.msra.mxu0 0.0
        %571 = vmatprep.subr.mxu0 0.0
        %572 = vmatpush2.msra.mxu0 0.0
        %573 = vmatprep.subr.mxu0 0.0
        %574 = vmatpush2.msra.mxu0 0.0
        %575 = vmatprep.subr.mxu0 0.0
        %576 = vmatpush2.msra.mxu0 0.0
        %577 = vmatprep.mubr.f32.mxu0 0.0
        %578 = vmatmul.mubr.f32.gmra.mxu0 %v508
        %v579 = vpop.f32.mrf.mxu0
        %v580 = vadd.f32 %v504, %v579
        %v581 = vpop.f32.mrf.mxu0
        %582 = vmatprep.mubr.f32.mxu0 0.0
        %583 = vmatmul.mubr.f32.gmra.mxu0 %v511
        %v584 = vpop.f32.mrf.mxu0
        %v585 = vadd.f32 %v504, %v584
        %v586 = vpop.f32.mrf.mxu0
        %587 = vdwg.mxu0
        %v588 = vmul.f32 %v580, 0.35355338
        %v589 = vmul.f32 %v585, 0.35355338
        %592 = vrot.lane.b32.xlu0 %v588, 124
        %v593 = vpop.permute.xlu0 %592
        %594 = vrot.lane.b32.xlu0 %v589, 124
        %v595 = vpop.permute.xlu0 %594
        %598 = vrot.lane.b32.xlu0 %v580, 124
        %v599 = vpop.permute.xlu0 %598
        %600 = vrot.lane.b32.xlu0 %v585, 124
        %v601 = vpop.permute.xlu0 %600
        %602 = vrot.lane.b32.xlu0 %v580, 120
        %v603 = vpop.permute.xlu0 %602
        %604 = vrot.lane.b32.xlu0 %v585, 120
        %v605 = vpop.permute.xlu0 %604
        %vm606 = vcmask 31744
        %v607 = vsel %vm606, %v588, 0
        %v609 = vsel %vm606, %v589, 0
        %v611 = vsel %vm606, %v603, 0
        %v613 = vsel %vm606, %v605, 0
        %615 = vmatprep.subr.mxu0 0.0
        %616 = vmatpush1.xpose.msra.mxu0 0.0
        %617 = vmatprep.subr.mxu0 0.0
        %618 = vmatpush1.xpose.msra.mxu0 0.0
        %619 = vmatprep.subr.mxu0 0.0
        %620 = vmatpush1.xpose.msra.mxu0 0.0
        %621 = vmatprep.subr.mxu0 0.0
        %622 = vmatpush1.xpose.msra.mxu0 0.0
        %623 = vmatprep.subr.mxu0 0.0
        %624 = vmatpush1.xpose.msra.mxu0 0.0
        %625 = vmatprep.subr.mxu0 0.0
        %626 = vmatpush1.xpose.msra.mxu0 0.0
        %627 = vmatprep.subr.mxu0 0.0
        %628 = vmatpush1.xpose.msra.mxu0 0.0
        %629 = vmatprep.subr.mxu0 0.0
        %630 = vmatpush1.xpose.msra.mxu0 0.0
        %631 = vmatprep.subr.mxu0 0.0
        %632 = vmatpush1.xpose.msra.mxu0 0.0
        %633 = vmatprep.subr.mxu0 0.0
        %634 = vmatpush1.xpose.msra.mxu0 0.0
        %635 = vmatprep.subr.mxu0 0.0
        %636 = vmatpush1.xpose.msra.mxu0 0.0
        %637 = vmatprep.subr.mxu0 0.0
        %638 = vmatpush1.xpose.msra.mxu0 0.0
        %639 = vmatprep.subr.mxu0 0.0
        %640 = vmatpush1.xpose.msra.mxu0 0.0
        %641 = vmatprep.subr.mxu0 0.0
        %642 = vmatpush1.xpose.msra.mxu0 0.0
        %643 = vmatprep.subr.mxu0 0.0
        %644 = vmatpush1.xpose.msra.mxu0 %v613
        %645 = vmatprep.subr.mxu0 0.0
        %646 = vmatpush1.xpose.msra.mxu0 %v611
        %647 = vmatprep.subr.mxu0 0.0
        %648 = vmatpush2.xpose.msra.mxu0 0.0
        %649 = vmatprep.subr.mxu0 0.0
        %650 = vmatpush2.xpose.msra.mxu0 0.0
        %651 = vmatprep.subr.mxu0 0.0
        %652 = vmatpush2.xpose.msra.mxu0 0.0
        %653 = vmatprep.subr.mxu0 0.0
        %654 = vmatpush2.xpose.msra.mxu0 0.0
        %655 = vmatprep.subr.mxu0 0.0
        %656 = vmatpush2.xpose.msra.mxu0 0.0
        %657 = vmatprep.subr.mxu0 0.0
        %658 = vmatpush2.xpose.msra.mxu0 0.0
        %659 = vmatprep.subr.mxu0 0.0
        %660 = vmatpush2.xpose.msra.mxu0 0.0
        %661 = vmatprep.subr.mxu0 0.0
        %662 = vmatpush2.xpose.msra.mxu0 0.0
        %663 = vmatprep.subr.mxu0 0.0
        %664 = vmatpush2.xpose.msra.mxu0 0.0
        %665 = vmatprep.subr.mxu0 0.0
        %666 = vmatpush2.xpose.msra.mxu0 0.0
        %667 = vmatprep.subr.mxu0 0.0
        %668 = vmatpush2.xpose.msra.mxu0 0.0
        %669 = vmatprep.subr.mxu0 0.0
        %670 = vmatpush2.xpose.msra.mxu0 0.0
        %671 = vmatprep.subr.mxu0 0.0
        %672 = vmatpush2.xpose.msra.mxu0 0.0
        %673 = vmatprep.subr.mxu0 0.0
        %674 = vmatpush2.xpose.msra.mxu0 0.0
        %675 = vmatprep.subr.mxu0 0.0
        %676 = vmatpush2.xpose.msra.mxu0 0.0
        %677 = vmatprep.subr.mxu0 0.0
        %678 = vmatpush2.xpose.msra.mxu0 0.0
        %679 = vmatprep.mubr.f32.mxu0 0.0
        %680 = vmatmul.mubr.f32.gmra.mxu0 %v607
        %v681 = vpop.f32.mrf.mxu0
        %v682 = vadd.f32 0.0, %v681
        %v683 = vpop.f32.mrf.mxu0
        %684 = vmatprep.mubr.f32.mxu0 0.0
        %685 = vmatmul.mubr.f32.gmra.mxu0 %v609
        %v686 = vpop.f32.mrf.mxu0
        %v687 = vadd.f32 0.0, %v686
        %v688 = vpop.f32.mrf.mxu0
        %689 = vdwg.mxu0
        %690 = vrot.lane.b32.xlu0 %v599, 120
        %v691 = vpop.permute.xlu0 %690
        %692 = vrot.lane.b32.xlu0 %v601, 120
        %v693 = vpop.permute.xlu0 %692
        %v694 = vsel %vm606, %v593, 0
        %v696 = vsel %vm606, %v595, 0
        %v698 = vsel %vm606, %v691, 0
        %v700 = vsel %vm606, %v693, 0
        %702 = vmatprep.subr.mxu0 0.0
        %703 = vmatpush1.xpose.msra.mxu0 0.0
        %704 = vmatprep.subr.mxu0 0.0
        %705 = vmatpush1.xpose.msra.mxu0 0.0
        %706 = vmatprep.subr.mxu0 0.0
        %707 = vmatpush1.xpose.msra.mxu0 0.0
        %708 = vmatprep.subr.mxu0 0.0
        %709 = vmatpush1.xpose.msra.mxu0 0.0
        %710 = vmatprep.subr.mxu0 0.0
        %711 = vmatpush1.xpose.msra.mxu0 0.0
        %712 = vmatprep.subr.mxu0 0.0
        %713 = vmatpush1.xpose.msra.mxu0 0.0
        %714 = vmatprep.subr.mxu0 0.0
        %715 = vmatpush1.xpose.msra.mxu0 0.0
        %716 = vmatprep.subr.mxu0 0.0
        %717 = vmatpush1.xpose.msra.mxu0 0.0
        %718 = vmatprep.subr.mxu0 0.0
        %719 = vmatpush1.xpose.msra.mxu0 0.0
        %720 = vmatprep.subr.mxu0 0.0
        %721 = vmatpush1.xpose.msra.mxu0 0.0
        %722 = vmatprep.subr.mxu0 0.0
        %723 = vmatpush1.xpose.msra.mxu0 0.0
        %724 = vmatprep.subr.mxu0 0.0
        %725 = vmatpush1.xpose.msra.mxu0 0.0
        %726 = vmatprep.subr.mxu0 0.0
        %727 = vmatpush1.xpose.msra.mxu0 0.0
        %728 = vmatprep.subr.mxu0 0.0
        %729 = vmatpush1.xpose.msra.mxu0 0.0
        %730 = vmatprep.subr.mxu0 0.0
        %731 = vmatpush1.xpose.msra.mxu0 %v700
        %732 = vmatprep.subr.mxu0 0.0
        %733 = vmatpush1.xpose.msra.mxu0 %v698
        %734 = vmatprep.subr.mxu0 0.0
        %735 = vmatpush2.xpose.msra.mxu0 0.0
        %736 = vmatprep.subr.mxu0 0.0
        %737 = vmatpush2.xpose.msra.mxu0 0.0
        %738 = vmatprep.subr.mxu0 0.0
        %739 = vmatpush2.xpose.msra.mxu0 0.0
        %740 = vmatprep.subr.mxu0 0.0
        %741 = vmatpush2.xpose.msra.mxu0 0.0
        %742 = vmatprep.subr.mxu0 0.0
        %743 = vmatpush2.xpose.msra.mxu0 0.0
        %744 = vmatprep.subr.mxu0 0.0
        %745 = vmatpush2.xpose.msra.mxu0 0.0
        %746 = vmatprep.subr.mxu0 0.0
        %747 = vmatpush2.xpose.msra.mxu0 0.0
        %748 = vmatprep.subr.mxu0 0.0
        %749 = vmatpush2.xpose.msra.mxu0 0.0
        %750 = vmatprep.subr.mxu0 0.0
        %751 = vmatpush2.xpose.msra.mxu0 0.0
        %752 = vmatprep.subr.mxu0 0.0
        %753 = vmatpush2.xpose.msra.mxu0 0.0
        %754 = vmatprep.subr.mxu0 0.0
        %755 = vmatpush2.xpose.msra.mxu0 0.0
        %756 = vmatprep.subr.mxu0 0.0
        %757 = vmatpush2.xpose.msra.mxu0 0.0
        %758 = vmatprep.subr.mxu0 0.0
        %759 = vmatpush2.xpose.msra.mxu0 0.0
        %760 = vmatprep.subr.mxu0 0.0
        %761 = vmatpush2.xpose.msra.mxu0 0.0
        %762 = vmatprep.subr.mxu0 0.0
        %763 = vmatpush2.xpose.msra.mxu0 0.0
        %764 = vmatprep.subr.mxu0 0.0
        %765 = vmatpush2.xpose.msra.mxu0 0.0
        %766 = vmatprep.mubr.f32.mxu0 0.0
        %767 = vmatmul.mubr.f32.gmra.mxu0 %v694
        %v768 = vpop.f32.mrf.mxu0
        %v769 = vadd.f32 0.0, %v768
        %v770 = vpop.f32.mrf.mxu0
        %771 = vmatprep.mubr.f32.mxu0 0.0
        %772 = vmatmul.mubr.f32.gmra.mxu0 %v696
        %v773 = vpop.f32.mrf.mxu0
        %v774 = vadd.f32 0.0, %v773
        %v775 = vpop.f32.mrf.mxu0
        %776 = vdwg.mxu0
        %v777 = vsel %vm416, %v682, -inf
        %778 = vmax.xlane.f32.xlu0 %v777
        %v779 = vpop.xlane.xlu0 %778
        %v780 = vsel %vm416, %v687, -inf
        %781 = vmax.xlane.f32.xlu0 %v780
        %v782 = vpop.xlane.xlu0 %781
        %v783 = vsel %vm416, %v769, -inf
        %784 = vmax.xlane.f32.xlu0 %v783
        %v785 = vpop.xlane.xlu0 %784
        %v786 = vsel %vm416, %v774, -inf
        %787 = vmax.xlane.f32.xlu0 %v786
        %v788 = vpop.xlane.xlu0 %787
        %v789 = vsub.f32 %v682, %v779
        %v790 = vsub.f32 %v687, %v782
        %v791 = vsub.f32 %v769, %v785
        %v792 = vsub.f32 %v774, %v788
        %v793 = vmul.f32 %v789, 1.442695
        %v794 = vpow.pop %v793
        %v795 = vmul.f32 %v790, 1.442695
        %v796 = vpow.pop %v795
        %v797 = vmul.f32 %v791, 1.442695
        %v798 = vpow.pop %v797
        %v799 = vmul.f32 %v792, 1.442695
        %v800 = vpow.pop %v799
        %v801 = vsel %vm416, %v794, 0.0
        %802 = vadd.xlane.f32.xlu0 %v801
        %v803 = vpop.xlane.xlu0 %802
        %v804 = vsel %vm416, %v796, 0.0
        %805 = vadd.xlane.f32.xlu0 %v804
        %v806 = vpop.xlane.xlu0 %805
        %v807 = vsel %vm416, %v798, 0.0
        %808 = vadd.xlane.f32.xlu0 %v807
        %v809 = vpop.xlane.xlu0 %808
        %v810 = vsel %vm416, %v800, 0.0
        %811 = vadd.xlane.f32.xlu0 %v810
        %v812 = vpop.xlane.xlu0 %811
        %v813 = vrcp.pop %v803
        %v814 = vmul.f32 %v794, %v813
        %v815 = vrcp.pop %v806
        %v816 = vmul.f32 %v796, %v815
        %v817 = vrcp.pop %v809
        %v818 = vmul.f32 %v798, %v817
        %v819 = vrcp.pop %v812
        %v820 = vmul.f32 %v800, %v819
        %821 = vrot.lane.b32.xlu0 %v580, 112
        %v822 = vpop.permute.xlu0 %821
        %823 = vrot.lane.b32.xlu0 %v585, 112
        %v824 = vpop.permute.xlu0 %823
        %v828 = vsel %vm416, %v814, 0
        %v831 = vsel %vm416, %v816, 0
        %833 = vmatprep.subr.mxu0 0.0
        %834 = vmatpush1.msra.mxu0 0.0
        %835 = vmatprep.subr.mxu0 0.0
        %836 = vmatpush1.msra.mxu0 0.0
        %837 = vmatprep.subr.mxu0 0.0
        %838 = vmatpush1.msra.mxu0 0.0
        %839 = vmatprep.subr.mxu0 0.0
        %840 = vmatpush1.msra.mxu0 0.0
        %841 = vmatprep.subr.mxu0 0.0
        %842 = vmatpush1.msra.mxu0 0.0
        %843 = vmatprep.subr.mxu0 0.0
        %844 = vmatpush1.msra.mxu0 0.0
        %845 = vmatprep.subr.mxu0 0.0
        %846 = vmatpush1.msra.mxu0 0.0
        %847 = vmatprep.subr.mxu0 0.0
        %848 = vmatpush1.msra.mxu0 0.0
        %849 = vmatprep.subr.mxu0 0.0
        %850 = vmatpush1.msra.mxu0 0.0
        %851 = vmatprep.subr.mxu0 0.0
        %852 = vmatpush1.msra.mxu0 0.0
        %853 = vmatprep.subr.mxu0 0.0
        %854 = vmatpush1.msra.mxu0 0.0
        %855 = vmatprep.subr.mxu0 0.0
        %856 = vmatpush1.msra.mxu0 0.0
        %857 = vmatprep.subr.mxu0 0.0
        %858 = vmatpush1.msra.mxu0 0.0
        %859 = vmatprep.subr.mxu0 0.0
        %860 = vmatpush1.msra.mxu0 0.0
        %861 = vmatprep.subr.mxu0 0.0
        %862 = vmatpush1.msra.mxu0 %v824
        %863 = vmatprep.subr.mxu0 0.0
        %864 = vmatpush1.msra.mxu0 %v822
        %865 = vmatprep.subr.mxu0 0.0
        %866 = vmatpush2.msra.mxu0 0.0
        %867 = vmatprep.subr.mxu0 0.0
        %868 = vmatpush2.msra.mxu0 0.0
        %869 = vmatprep.subr.mxu0 0.0
        %870 = vmatpush2.msra.mxu0 0.0
        %871 = vmatprep.subr.mxu0 0.0
        %872 = vmatpush2.msra.mxu0 0.0
        %873 = vmatprep.subr.mxu0 0.0
        %874 = vmatpush2.msra.mxu0 0.0
        %875 = vmatprep.subr.mxu0 0.0
        %876 = vmatpush2.msra.mxu0 0.0
        %877 = vmatprep.subr.mxu0 0.0
        %878 = vmatpush2.msra.mxu0 0.0
        %879 = vmatprep.subr.mxu0 0.0
        %880 = vmatpush2.msra.mxu0 0.0
        %881 = vmatprep.subr.mxu0 0.0
        %882 = vmatpush2.msra.mxu0 0.0
        %883 = vmatprep.subr.mxu0 0.0
        %884 = vmatpush2.msra.mxu0 0.0
        %885 = vmatprep.subr.mxu0 0.0
        %886 = vmatpush2.msra.mxu0 0.0
        %887 = vmatprep.subr.mxu0 0.0
        %888 = vmatpush2.msra.mxu0 0.0
        %889 = vmatprep.subr.mxu0 0.0
        %890 = vmatpush2.msra.mxu0 0.0
        %891 = vmatprep.subr.mxu0 0.0
        %892 = vmatpush2.msra.mxu0 0.0
        %893 = vmatprep.subr.mxu0 0.0
        %894 = vmatpush2.msra.mxu0 0.0
        %895 = vmatprep.subr.mxu0 0.0
        %896 = vmatpush2.msra.mxu0 0.0
        %897 = vmatprep.mubr.f32.mxu0 0.0
        %898 = vmatmul.mubr.f32.gmra.mxu0 %v828
        %v899 = vpop.f32.mrf.mxu0
        %v900 = vadd.f32 0.0, %v899
        %v901 = vpop.f32.mrf.mxu0
        %902 = vmatprep.mubr.f32.mxu0 0.0
        %903 = vmatmul.mubr.f32.gmra.mxu0 %v831
        %v904 = vpop.f32.mrf.mxu0
        %v905 = vadd.f32 0.0, %v904
        %v906 = vpop.f32.mrf.mxu0
        %907 = vdwg.mxu0
        %908 = vrot.lane.b32.xlu0 %v599, 112
        %v909 = vpop.permute.xlu0 %908
        %910 = vrot.lane.b32.xlu0 %v601, 112
        %v911 = vpop.permute.xlu0 %910
        %v915 = vsel %vm416, %v818, 0
        %v918 = vsel %vm416, %v820, 0
        %920 = vmatprep.subr.mxu0 0.0
        %921 = vmatpush1.msra.mxu0 0.0
        %922 = vmatprep.subr.mxu0 0.0
        %923 = vmatpush1.msra.mxu0 0.0
        %924 = vmatprep.subr.mxu0 0.0
        %925 = vmatpush1.msra.mxu0 0.0
        %926 = vmatprep.subr.mxu0 0.0
        %927 = vmatpush1.msra.mxu0 0.0
        %928 = vmatprep.subr.mxu0 0.0
        %929 = vmatpush1.msra.mxu0 0.0
        %930 = vmatprep.subr.mxu0 0.0
        %931 = vmatpush1.msra.mxu0 0.0
        %932 = vmatprep.subr.mxu0 0.0
        %933 = vmatpush1.msra.mxu0 0.0
        %934 = vmatprep.subr.mxu0 0.0
        %935 = vmatpush1.msra.mxu0 0.0
        %936 = vmatprep.subr.mxu0 0.0
        %937 = vmatpush1.msra.mxu0 0.0
        %938 = vmatprep.subr.mxu0 0.0
        %939 = vmatpush1.msra.mxu0 0.0
        %940 = vmatprep.subr.mxu0 0.0
        %941 = vmatpush1.msra.mxu0 0.0
        %942 = vmatprep.subr.mxu0 0.0
        %943 = vmatpush1.msra.mxu0 0.0
        %944 = vmatprep.subr.mxu0 0.0
        %945 = vmatpush1.msra.mxu0 0.0
        %946 = vmatprep.subr.mxu0 0.0
        %947 = vmatpush1.msra.mxu0 0.0
        %948 = vmatprep.subr.mxu0 0.0
        %949 = vmatpush1.msra.mxu0 %v911
        %950 = vmatprep.subr.mxu0 0.0
        %951 = vmatpush1.msra.mxu0 %v909
        %952 = vmatprep.subr.mxu0 0.0
        %953 = vmatpush2.msra.mxu0 0.0
        %954 = vmatprep.subr.mxu0 0.0
        %955 = vmatpush2.msra.mxu0 0.0
        %956 = vmatprep.subr.mxu0 0.0
        %957 = vmatpush2.msra.mxu0 0.0
        %958 = vmatprep.subr.mxu0 0.0
        %959 = vmatpush2.msra.mxu0 0.0
        %960 = vmatprep.subr.mxu0 0.0
        %961 = vmatpush2.msra.mxu0 0.0
        %962 = vmatprep.subr.mxu0 0.0
        %963 = vmatpush2.msra.mxu0 0.0
        %964 = vmatprep.subr.mxu0 0.0
        %965 = vmatpush2.msra.mxu0 0.0
        %966 = vmatprep.subr.mxu0 0.0
        %967 = vmatpush2.msra.mxu0 0.0
        %968 = vmatprep.subr.mxu0 0.0
        %969 = vmatpush2.msra.mxu0 0.0
        %970 = vmatprep.subr.mxu0 0.0
        %971 = vmatpush2.msra.mxu0 0.0
        %972 = vmatprep.subr.mxu0 0.0
        %973 = vmatpush2.msra.mxu0 0.0
        %974 = vmatprep.subr.mxu0 0.0
        %975 = vmatpush2.msra.mxu0 0.0
        %976 = vmatprep.subr.mxu0 0.0
        %977 = vmatpush2.msra.mxu0 0.0
        %978 = vmatprep.subr.mxu0 0.0
        %979 = vmatpush2.msra.mxu0 0.0
        %980 = vmatprep.subr.mxu0 0.0
        %981 = vmatpush2.msra.mxu0 0.0
        %982 = vmatprep.subr.mxu0 0.0
        %983 = vmatpush2.msra.mxu0 0.0
        %984 = vmatprep.mubr.f32.mxu0 0.0
        %985 = vmatmul.mubr.f32.gmra.mxu0 %v915
        %v986 = vpop.f32.mrf.mxu0
        %v987 = vadd.f32 0.0, %v986
        %v988 = vpop.f32.mrf.mxu0
        %989 = vmatprep.mubr.f32.mxu0 0.0
        %990 = vmatmul.mubr.f32.gmra.mxu0 %v918
        %v991 = vpop.f32.mrf.mxu0
        %v992 = vadd.f32 0.0, %v991
        %v993 = vpop.f32.mrf.mxu0
        %994 = vdwg.mxu0
        %v995 = vld [vmem:[%s6] sm:$0xf]
        %s996 = scalar_lea.vmem %s6, 4
        %v997 = vld [vmem:[%s996] sm:$0xf]
        %v999 = vsel %vm606, %v987, 0
        %v1002 = vsel %vm606, %v992, 0
        %vm1004 = vcmask 1043456
        %v1006 = vsel %vm1004, %v997, 0
        %1008 = vmatprep.subr.mxu0 0.0
        %1009 = vmatpush1.msra.mxu0 0.0
        %1010 = vmatprep.subr.mxu0 0.0
        %1011 = vmatpush1.msra.mxu0 0.0
        %1012 = vmatprep.subr.mxu0 0.0
        %1013 = vmatpush1.msra.mxu0 0.0
        %1014 = vmatprep.subr.mxu0 0.0
        %1015 = vmatpush1.msra.mxu0 0.0
        %1016 = vmatprep.subr.mxu0 0.0
        %1017 = vmatpush1.msra.mxu0 0.0
        %1018 = vmatprep.subr.mxu0 0.0
        %1019 = vmatpush1.msra.mxu0 0.0
        %1020 = vmatprep.subr.mxu0 0.0
        %1021 = vmatpush1.msra.mxu0 0.0
        %1022 = vmatprep.subr.mxu0 0.0
        %1023 = vmatpush1.msra.mxu0 0.0
        %1024 = vmatprep.subr.mxu0 0.0
        %1025 = vmatpush1.msra.mxu0 0.0
        %1026 = vmatprep.subr.mxu0 0.0
        %1027 = vmatpush1.msra.mxu0 0.0
        %1028 = vmatprep.subr.mxu0 0.0
        %1029 = vmatpush1.msra.mxu0 0.0
        %1030 = vmatprep.subr.mxu0 0.0
        %1031 = vmatpush1.msra.mxu0 0.0
        %1032 = vmatprep.subr.mxu0 0.0
        %1033 = vmatpush1.msra.mxu0 0.0
        %1034 = vmatprep.subr.mxu0 0.0
        %1035 = vmatpush1.msra.mxu0 0.0
        %1036 = vmatprep.subr.mxu0 0.0
        %1037 = vmatpush1.msra.mxu0 0.0
        %1038 = vmatprep.subr.mxu0 0.0
        %1039 = vmatpush1.msra.mxu0 %v1006
        %1040 = vmatprep.subr.mxu0 0.0
        %1041 = vmatpush2.msra.mxu0 0.0
        %1042 = vmatprep.subr.mxu0 0.0
        %1043 = vmatpush2.msra.mxu0 0.0
        %1044 = vmatprep.subr.mxu0 0.0
        %1045 = vmatpush2.msra.mxu0 0.0
        %1046 = vmatprep.subr.mxu0 0.0
        %1047 = vmatpush2.msra.mxu0 0.0
        %1048 = vmatprep.subr.mxu0 0.0
        %1049 = vmatpush2.msra.mxu0 0.0
        %1050 = vmatprep.subr.mxu0 0.0
        %1051 = vmatpush2.msra.mxu0 0.0
        %1052 = vmatprep.subr.mxu0 0.0
        %1053 = vmatpush2.msra.mxu0 0.0
        %1054 = vmatprep.subr.mxu0 0.0
        %1055 = vmatpush2.msra.mxu0 0.0
        %1056 = vmatprep.subr.mxu0 0.0
        %1057 = vmatpush2.msra.mxu0 0.0
        %1058 = vmatprep.subr.mxu0 0.0
        %1059 = vmatpush2.msra.mxu0 0.0
        %1060 = vmatprep.subr.mxu0 0.0
        %1061 = vmatpush2.msra.mxu0 0.0
        %1062 = vmatprep.subr.mxu0 0.0
        %1063 = vmatpush2.msra.mxu0 0.0
        %1064 = vmatprep.subr.mxu0 0.0
        %1065 = vmatpush2.msra.mxu0 0.0
        %1066 = vmatprep.subr.mxu0 0.0
        %1067 = vmatpush2.msra.mxu0 0.0
        %1068 = vmatprep.subr.mxu0 0.0
        %1069 = vmatpush2.msra.mxu0 0.0
        %1070 = vmatprep.subr.mxu0 0.0
        %1071 = vmatpush2.msra.mxu0 0.0
        %1072 = vmatprep.mubr.f32.mxu0 0.0
        %1073 = vmatmul.mubr.f32.gmra.mxu0 %v999
        %v1074 = vpop.f32.mrf.mxu0
        %v1075 = vadd.f32 0.0, %v1074
        %v1076 = vpop.f32.mrf.mxu0
        %1077 = vmatprep.mubr.f32.mxu0 0.0
        %1078 = vmatmul.mubr.f32.gmra.mxu0 %v1002
        %v1079 = vpop.f32.mrf.mxu0
        %v1080 = vadd.f32 0.0, %v1079
        %v1081 = vpop.f32.mrf.mxu0
        %1082 = vdwg.mxu0
        %v1084 = vsel %vm606, %v900, 0
        %v1087 = vsel %vm606, %v905, 0
        %v1090 = vsel %vm1004, %v995, 0
        %1092 = vmatprep.subr.mxu0 0.0
        %1093 = vmatpush1.msra.mxu0 0.0
        %1094 = vmatprep.subr.mxu0 0.0
        %1095 = vmatpush1.msra.mxu0 0.0
        %1096 = vmatprep.subr.mxu0 0.0
        %1097 = vmatpush1.msra.mxu0 0.0
        %1098 = vmatprep.subr.mxu0 0.0
        %1099 = vmatpush1.msra.mxu0 0.0
        %1100 = vmatprep.subr.mxu0 0.0
        %1101 = vmatpush1.msra.mxu0 0.0
        %1102 = vmatprep.subr.mxu0 0.0
        %1103 = vmatpush1.msra.mxu0 0.0
        %1104 = vmatprep.subr.mxu0 0.0
        %1105 = vmatpush1.msra.mxu0 0.0
        %1106 = vmatprep.subr.mxu0 0.0
        %1107 = vmatpush1.msra.mxu0 0.0
        %1108 = vmatprep.subr.mxu0 0.0
        %1109 = vmatpush1.msra.mxu0 0.0
        %1110 = vmatprep.subr.mxu0 0.0
        %1111 = vmatpush1.msra.mxu0 0.0
        %1112 = vmatprep.subr.mxu0 0.0
        %1113 = vmatpush1.msra.mxu0 0.0
        %1114 = vmatprep.subr.mxu0 0.0
        %1115 = vmatpush1.msra.mxu0 0.0
        %1116 = vmatprep.subr.mxu0 0.0
        %1117 = vmatpush1.msra.mxu0 0.0
        %1118 = vmatprep.subr.mxu0 0.0
        %1119 = vmatpush1.msra.mxu0 0.0
        %1120 = vmatprep.subr.mxu0 0.0
        %1121 = vmatpush1.msra.mxu0 0.0
        %1122 = vmatprep.subr.mxu0 0.0
        %1123 = vmatpush1.msra.mxu0 %v1090
        %1124 = vmatprep.subr.mxu0 0.0
        %1125 = vmatpush2.msra.mxu0 0.0
        %1126 = vmatprep.subr.mxu0 0.0
        %1127 = vmatpush2.msra.mxu0 0.0
        %1128 = vmatprep.subr.mxu0 0.0
        %1129 = vmatpush2.msra.mxu0 0.0
        %1130 = vmatprep.subr.mxu0 0.0
        %1131 = vmatpush2.msra.mxu0 0.0
        %1132 = vmatprep.subr.mxu0 0.0
        %1133 = vmatpush2.msra.mxu0 0.0
        %1134 = vmatprep.subr.mxu0 0.0
        %1135 = vmatpush2.msra.mxu0 0.0
        %1136 = vmatprep.subr.mxu0 0.0
        %1137 = vmatpush2.msra.mxu0 0.0
        %1138 = vmatprep.subr.mxu0 0.0
        %1139 = vmatpush2.msra.mxu0 0.0
        %1140 = vmatprep.subr.mxu0 0.0
        %1141 = vmatpush2.msra.mxu0 0.0
        %1142 = vmatprep.subr.mxu0 0.0
        %1143 = vmatpush2.msra.mxu0 0.0
        %1144 = vmatprep.subr.mxu0 0.0
        %1145 = vmatpush2.msra.mxu0 0.0
        %1146 = vmatprep.subr.mxu0 0.0
        %1147 = vmatpush2.msra.mxu0 0.0
        %1148 = vmatprep.subr.mxu0 0.0
        %1149 = vmatpush2.msra.mxu0 0.0
        %1150 = vmatprep.subr.mxu0 0.0
        %1151 = vmatpush2.msra.mxu0 0.0
        %1152 = vmatprep.subr.mxu0 0.0
        %1153 = vmatpush2.msra.mxu0 0.0
        %1154 = vmatprep.subr.mxu0 0.0
        %1155 = vmatpush2.msra.mxu0 0.0
        %1156 = vmatprep.mubr.f32.mxu0 0.0
        %1157 = vmatmul.mubr.f32.gmra.mxu0 %v1084
        %v1158 = vpop.f32.mrf.mxu0
        %v1159 = vadd.f32 %v1075, %v1158
        %v1160 = vpop.f32.mrf.mxu0
        %1161 = vmatprep.mubr.f32.mxu0 0.0
        %1162 = vmatmul.mubr.f32.gmra.mxu0 %v1087
        %v1163 = vpop.f32.mrf.mxu0
        %v1164 = vadd.f32 %v1080, %v1163
        %v1165 = vpop.f32.mrf.mxu0
        %1166 = vdwg.mxu0
        %s1167 = scalar_lea.vmem %s2, 32
        %v1168 = vld [vmem:[%s1167] sm:$0xff]
        %v1169 = vld [vmem:[%s1167 + $0x8] sm:$0xff]
        %v1170 = vld [vmem:[%s1167 + $0x10] sm:$0xff]
        %v1171 = vld [vmem:[%s1167 + $0x18] sm:$0xff]
        %s1172 = scalar_lea.vmem %s3, 1
        %v1173 = vld [vmem:[%s1172] sm:$0x1]
        %v1175 = vlaneseq
        %v1176 = vshrl.u32 %v1175, 7
        %v1177 = vsub.s32 0, %v1176
        %v1178 = vrot.slane %v1173, %v1177
        %1180 = vmatprep.subr.mxu0 0.0
        %1181 = vmatpush1.msra.mxu0 0.0
        %1182 = vmatprep.subr.mxu0 0.0
        %1183 = vmatpush1.msra.mxu0 0.0
        %1184 = vmatprep.subr.mxu0 0.0
        %1185 = vmatpush1.msra.mxu0 0.0
        %1186 = vmatprep.subr.mxu0 0.0
        %1187 = vmatpush1.msra.mxu0 0.0
        %1188 = vmatprep.subr.mxu0 0.0
        %1189 = vmatpush1.msra.mxu0 0.0
        %1190 = vmatprep.subr.mxu0 0.0
        %1191 = vmatpush1.msra.mxu0 0.0
        %1192 = vmatprep.subr.mxu0 0.0
        %1193 = vmatpush1.msra.mxu0 0.0
        %1194 = vmatprep.subr.mxu0 0.0
        %1195 = vmatpush1.msra.mxu0 0.0
        %1196 = vmatprep.subr.mxu0 0.0
        %1197 = vmatpush1.msra.mxu0 0.0
        %1198 = vmatprep.subr.mxu0 0.0
        %1199 = vmatpush1.msra.mxu0 0.0
        %1200 = vmatprep.subr.mxu0 0.0
        %1201 = vmatpush1.msra.mxu0 0.0
        %1202 = vmatprep.subr.mxu0 0.0
        %1203 = vmatpush1.msra.mxu0 0.0
        %1204 = vmatprep.subr.mxu0 0.0
        %1205 = vmatpush1.msra.mxu0 %v1171
        %1206 = vmatprep.subr.mxu0 0.0
        %1207 = vmatpush1.msra.mxu0 %v1170
        %1208 = vmatprep.subr.mxu0 0.0
        %1209 = vmatpush1.msra.mxu0 %v1169
        %1210 = vmatprep.subr.mxu0 0.0
        %1211 = vmatpush1.msra.mxu0 %v1168
        %1212 = vmatprep.subr.mxu0 0.0
        %1213 = vmatpush2.msra.mxu0 0.0
        %1214 = vmatprep.subr.mxu0 0.0
        %1215 = vmatpush2.msra.mxu0 0.0
        %1216 = vmatprep.subr.mxu0 0.0
        %1217 = vmatpush2.msra.mxu0 0.0
        %1218 = vmatprep.subr.mxu0 0.0
        %1219 = vmatpush2.msra.mxu0 0.0
        %1220 = vmatprep.subr.mxu0 0.0
        %1221 = vmatpush2.msra.mxu0 0.0
        %1222 = vmatprep.subr.mxu0 0.0
        %1223 = vmatpush2.msra.mxu0 0.0
        %1224 = vmatprep.subr.mxu0 0.0
        %1225 = vmatpush2.msra.mxu0 0.0
        %1226 = vmatprep.subr.mxu0 0.0
        %1227 = vmatpush2.msra.mxu0 0.0
        %1228 = vmatprep.subr.mxu0 0.0
        %1229 = vmatpush2.msra.mxu0 0.0
        %1230 = vmatprep.subr.mxu0 0.0
        %1231 = vmatpush2.msra.mxu0 0.0
        %1232 = vmatprep.subr.mxu0 0.0
        %1233 = vmatpush2.msra.mxu0 0.0
        %1234 = vmatprep.subr.mxu0 0.0
        %1235 = vmatpush2.msra.mxu0 0.0
        %1236 = vmatprep.subr.mxu0 0.0
        %1237 = vmatpush2.msra.mxu0 0.0
        %1238 = vmatprep.subr.mxu0 0.0
        %1239 = vmatpush2.msra.mxu0 0.0
        %1240 = vmatprep.subr.mxu0 0.0
        %1241 = vmatpush2.msra.mxu0 0.0
        %1242 = vmatprep.subr.mxu0 0.0
        %1243 = vmatpush2.msra.mxu0 0.0
        %1244 = vmatprep.mubr.f32.mxu0 0.0
        %1245 = vmatmul.mubr.f32.gmra.mxu0 %v334
        %v1246 = vpop.f32.mrf.mxu0
        %v1247 = vadd.f32 %v1178, %v1246
        %v1248 = vpop.f32.mrf.mxu0
        %1249 = vmatprep.mubr.f32.mxu0 0.0
        %1250 = vmatmul.mubr.f32.gmra.mxu0 %v337
        %v1251 = vpop.f32.mrf.mxu0
        %v1252 = vadd.f32 %v1178, %v1251
        %v1253 = vpop.f32.mrf.mxu0
        %1254 = vdwg.mxu0
        %s1255 = scalar_lea.vmem %s1, 16
        %v1256 = vld [vmem:[%s1255] sm:$0xff]
        %v1257 = vld [vmem:[%s1255 + $0x8] sm:$0xff]
        %v1259 = vsel %vm416, %v1256, 0
        %v1262 = vsel %vm416, %v1257, 0
        %1264 = vmatprep.subr.mxu0 0.0
        %1265 = vmatpush1.msra.mxu0 0.0
        %1266 = vmatprep.subr.mxu0 0.0
        %1267 = vmatpush1.msra.mxu0 0.0
        %1268 = vmatprep.subr.mxu0 0.0
        %1269 = vmatpush1.msra.mxu0 0.0
        %1270 = vmatprep.subr.mxu0 0.0
        %1271 = vmatpush1.msra.mxu0 0.0
        %1272 = vmatprep.subr.mxu0 0.0
        %1273 = vmatpush1.msra.mxu0 0.0
        %1274 = vmatprep.subr.mxu0 0.0
        %1275 = vmatpush1.msra.mxu0 0.0
        %1276 = vmatprep.subr.mxu0 0.0
        %1277 = vmatpush1.msra.mxu0 0.0
        %1278 = vmatprep.subr.mxu0 0.0
        %1279 = vmatpush1.msra.mxu0 0.0
        %1280 = vmatprep.subr.mxu0 0.0
        %1281 = vmatpush1.msra.mxu0 0.0
        %1282 = vmatprep.subr.mxu0 0.0
        %1283 = vmatpush1.msra.mxu0 0.0
        %1284 = vmatprep.subr.mxu0 0.0
        %1285 = vmatpush1.msra.mxu0 0.0
        %1286 = vmatprep.subr.mxu0 0.0
        %1287 = vmatpush1.msra.mxu0 0.0
        %1288 = vmatprep.subr.mxu0 0.0
        %1289 = vmatpush1.msra.mxu0 0.0
        %1290 = vmatprep.subr.mxu0 0.0
        %1291 = vmatpush1.msra.mxu0 0.0
        %1292 = vmatprep.subr.mxu0 0.0
        %1293 = vmatpush1.msra.mxu0 %v1252
        %1294 = vmatprep.subr.mxu0 0.0
        %1295 = vmatpush1.msra.mxu0 %v1247
        %1296 = vmatprep.subr.mxu0 0.0
        %1297 = vmatpush2.msra.mxu0 0.0
        %1298 = vmatprep.subr.mxu0 0.0
        %1299 = vmatpush2.msra.mxu0 0.0
        %1300 = vmatprep.subr.mxu0 0.0
        %1301 = vmatpush2.msra.mxu0 0.0
        %1302 = vmatprep.subr.mxu0 0.0
        %1303 = vmatpush2.msra.mxu0 0.0
        %1304 = vmatprep.subr.mxu0 0.0
        %1305 = vmatpush2.msra.mxu0 0.0
        %1306 = vmatprep.subr.mxu0 0.0
        %1307 = vmatpush2.msra.mxu0 0.0
        %1308 = vmatprep.subr.mxu0 0.0
        %1309 = vmatpush2.msra.mxu0 0.0
        %1310 = vmatprep.subr.mxu0 0.0
        %1311 = vmatpush2.msra.mxu0 0.0
        %1312 = vmatprep.subr.mxu0 0.0
        %1313 = vmatpush2.msra.mxu0 0.0
        %1314 = vmatprep.subr.mxu0 0.0
        %1315 = vmatpush2.msra.mxu0 0.0
        %1316 = vmatprep.subr.mxu0 0.0
        %1317 = vmatpush2.msra.mxu0 0.0
        %1318 = vmatprep.subr.mxu0 0.0
        %1319 = vmatpush2.msra.mxu0 0.0
        %1320 = vmatprep.subr.mxu0 0.0
        %1321 = vmatpush2.msra.mxu0 0.0
        %1322 = vmatprep.subr.mxu0 0.0
        %1323 = vmatpush2.msra.mxu0 0.0
        %1324 = vmatprep.subr.mxu0 0.0
        %1325 = vmatpush2.msra.mxu0 0.0
        %1326 = vmatprep.subr.mxu0 0.0
        %1327 = vmatpush2.msra.mxu0 0.0
        %1328 = vmatprep.mubr.f32.mxu0 0.0
        %1329 = vmatmul.mubr.f32.gmra.mxu0 %v1259
        %v1330 = vpop.f32.mrf.mxu0
        %v1331 = vadd.f32 0.0, %v1330
        %v1332 = vpop.f32.mrf.mxu0
        %1333 = vmatprep.mubr.f32.mxu0 0.0
        %1334 = vmatmul.mubr.f32.gmra.mxu0 %v1262
        %v1335 = vpop.f32.mrf.mxu0
        %v1336 = vadd.f32 0.0, %v1335
        %v1337 = vpop.f32.mrf.mxu0
        %1338 = vdwg.mxu0
        %s1339 = scalar_lea.vmem %s4, 8
        %v1340 = vld [vmem:[%s1339] sm:$0xff]
        %s1341 = scalar_lea.vmem [#allocation2], 1
        %v1342 = vld [vmem:[%s1341] sm:$0x1]
        %v1344 = vlaneseq
        %v1345 = vshrl.u32 %v1344, 7
        %v1346 = vsub.s32 0, %v1345
        %v1347 = vrot.slane %v1342, %v1346
        %v1350 = vsel %vm506, %v1331, 0
        %v1353 = vsel %vm506, %v1336, 0
        %1355 = vmatprep.subr.mxu0 0.0
        %1356 = vmatpush1.msra.mxu0 0.0
        %1357 = vmatprep.subr.mxu0 0.0
        %1358 = vmatpush1.msra.mxu0 0.0
        %1359 = vmatprep.subr.mxu0 0.0
        %1360 = vmatpush1.msra.mxu0 0.0
        %1361 = vmatprep.subr.mxu0 0.0
        %1362 = vmatpush1.msra.mxu0 0.0
        %1363 = vmatprep.subr.mxu0 0.0
        %1364 = vmatpush1.msra.mxu0 0.0
        %1365 = vmatprep.subr.mxu0 0.0
        %1366 = vmatpush1.msra.mxu0 0.0
        %1367 = vmatprep.subr.mxu0 0.0
        %1368 = vmatpush1.msra.mxu0 0.0
        %1369 = vmatprep.subr.mxu0 0.0
        %1370 = vmatpush1.msra.mxu0 0.0
        %1371 = vmatprep.subr.mxu0 0.0
        %1372 = vmatpush1.msra.mxu0 0.0
        %1373 = vmatprep.subr.mxu0 0.0
        %1374 = vmatpush1.msra.mxu0 0.0
        %1375 = vmatprep.subr.mxu0 0.0
        %1376 = vmatpush1.msra.mxu0 0.0
        %1377 = vmatprep.subr.mxu0 0.0
        %1378 = vmatpush1.msra.mxu0 0.0
        %1379 = vmatprep.subr.mxu0 0.0
        %1380 = vmatpush1.msra.mxu0 0.0
        %1381 = vmatprep.subr.mxu0 0.0
        %1382 = vmatpush1.msra.mxu0 0.0
        %1383 = vmatprep.subr.mxu0 0.0
        %1384 = vmatpush1.msra.mxu0 0.0
        %1385 = vmatprep.subr.mxu0 0.0
        %1386 = vmatpush1.msra.mxu0 %v1340
        %1387 = vmatprep.subr.mxu0 0.0
        %1388 = vmatpush2.msra.mxu0 0.0
        %1389 = vmatprep.subr.mxu0 0.0
        %1390 = vmatpush2.msra.mxu0 0.0
        %1391 = vmatprep.subr.mxu0 0.0
        %1392 = vmatpush2.msra.mxu0 0.0
        %1393 = vmatprep.subr.mxu0 0.0
        %1394 = vmatpush2.msra.mxu0 0.0
        %1395 = vmatprep.subr.mxu0 0.0
        %1396 = vmatpush2.msra.mxu0 0.0
        %1397 = vmatprep.subr.mxu0 0.0
        %1398 = vmatpush2.msra.mxu0 0.0
        %1399 = vmatprep.subr.mxu0 0.0
        %1400 = vmatpush2.msra.mxu0 0.0
        %1401 = vmatprep.subr.mxu0 0.0
        %1402 = vmatpush2.msra.mxu0 0.0
        %1403 = vmatprep.subr.mxu0 0.0
        %1404 = vmatpush2.msra.mxu0 0.0
        %1405 = vmatprep.subr.mxu0 0.0
        %1406 = vmatpush2.msra.mxu0 0.0
        %1407 = vmatprep.subr.mxu0 0.0
        %1408 = vmatpush2.msra.mxu0 0.0
        %1409 = vmatprep.subr.mxu0 0.0
        %1410 = vmatpush2.msra.mxu0 0.0
        %1411 = vmatprep.subr.mxu0 0.0
        %1412 = vmatpush2.msra.mxu0 0.0
        %1413 = vmatprep.subr.mxu0 0.0
        %1414 = vmatpush2.msra.mxu0 0.0
        %1415 = vmatprep.subr.mxu0 0.0
        %1416 = vmatpush2.msra.mxu0 0.0
        %1417 = vmatprep.subr.mxu0 0.0
        %1418 = vmatpush2.msra.mxu0 0.0
        %1419 = vmatprep.mubr.f32.mxu0 0.0
        %1420 = vmatmul.mubr.f32.gmra.mxu0 %v1350
        %v1421 = vpop.f32.mrf.mxu0
        %v1422 = vadd.f32 %v1347, %v1421
        %v1423 = vpop.f32.mrf.mxu0
        %1424 = vmatprep.mubr.f32.mxu0 0.0
        %1425 = vmatmul.mubr.f32.gmra.mxu0 %v1353
        %v1426 = vpop.f32.mrf.mxu0
        %v1427 = vadd.f32 %v1347, %v1426
        %v1428 = vpop.f32.mrf.mxu0
        %1429 = vdwg.mxu0
        %v1430 = vmul.f32 %v1422, 0.35355338
        %v1431 = vmul.f32 %v1427, 0.35355338
        %1434 = vrot.lane.b32.xlu0 %v1430, 124
        %v1435 = vpop.permute.xlu0 %1434
        %1436 = vrot.lane.b32.xlu0 %v1431, 124
        %v1437 = vpop.permute.xlu0 %1436
        %1440 = vrot.lane.b32.xlu0 %v1422, 124
        %v1441 = vpop.permute.xlu0 %1440
        %1442 = vrot.lane.b32.xlu0 %v1427, 124
        %v1443 = vpop.permute.xlu0 %1442
        %1444 = vrot.lane.b32.xlu0 %v1422, 120
        %v1445 = vpop.permute.xlu0 %1444
        %1446 = vrot.lane.b32.xlu0 %v1427, 120
        %v1447 = vpop.permute.xlu0 %1446
        %v1448 = vsel %vm606, %v1430, 0
        %v1450 = vsel %vm606, %v1431, 0
        %v1452 = vsel %vm606, %v1445, 0
        %v1454 = vsel %vm606, %v1447, 0
        %1456 = vmatprep.subr.mxu0 0.0
        %1457 = vmatpush1.xpose.msra.mxu0 0.0
        %1458 = vmatprep.subr.mxu0 0.0
        %1459 = vmatpush1.xpose.msra.mxu0 0.0
        %1460 = vmatprep.subr.mxu0 0.0
        %1461 = vmatpush1.xpose.msra.mxu0 0.0
        %1462 = vmatprep.subr.mxu0 0.0
        %1463 = vmatpush1.xpose.msra.mxu0 0.0
        %1464 = vmatprep.subr.mxu0 0.0
        %1465 = vmatpush1.xpose.msra.mxu0 0.0
        %1466 = vmatprep.subr.mxu0 0.0
        %1467 = vmatpush1.xpose.msra.mxu0 0.0
        %1468 = vmatprep.subr.mxu0 0.0
        %1469 = vmatpush1.xpose.msra.mxu0 0.0
        %1470 = vmatprep.subr.mxu0 0.0
        %1471 = vmatpush1.xpose.msra.mxu0 0.0
        %1472 = vmatprep.subr.mxu0 0.0
        %1473 = vmatpush1.xpose.msra.mxu0 0.0
        %1474 = vmatprep.subr.mxu0 0.0
        %1475 = vmatpush1.xpose.msra.mxu0 0.0
        %1476 = vmatprep.subr.mxu0 0.0
        %1477 = vmatpush1.xpose.msra.mxu0 0.0
        %1478 = vmatprep.subr.mxu0 0.0
        %1479 = vmatpush1.xpose.msra.mxu0 0.0
        %1480 = vmatprep.subr.mxu0 0.0
        %1481 = vmatpush1.xpose.msra.mxu0 0.0
        %1482 = vmatprep.subr.mxu0 0.0
        %1483 = vmatpush1.xpose.msra.mxu0 0.0
        %1484 = vmatprep.subr.mxu0 0.0
        %1485 = vmatpush1.xpose.msra.mxu0 %v1454
        %1486 = vmatprep.subr.mxu0 0.0
        %1487 = vmatpush1.xpose.msra.mxu0 %v1452
        %1488 = vmatprep.subr.mxu0 0.0
        %1489 = vmatpush2.xpose.msra.mxu0 0.0
        %1490 = vmatprep.subr.mxu0 0.0
        %1491 = vmatpush2.xpose.msra.mxu0 0.0
        %1492 = vmatprep.subr.mxu0 0.0
        %1493 = vmatpush2.xpose.msra.mxu0 0.0
        %1494 = vmatprep.subr.mxu0 0.0
        %1495 = vmatpush2.xpose.msra.mxu0 0.0
        %1496 = vmatprep.subr.mxu0 0.0
        %1497 = vmatpush2.xpose.msra.mxu0 0.0
        %1498 = vmatprep.subr.mxu0 0.0
        %1499 = vmatpush2.xpose.msra.mxu0 0.0
        %1500 = vmatprep.subr.mxu0 0.0
        %1501 = vmatpush2.xpose.msra.mxu0 0.0
        %1502 = vmatprep.subr.mxu0 0.0
        %1503 = vmatpush2.xpose.msra.mxu0 0.0
        %1504 = vmatprep.subr.mxu0 0.0
        %1505 = vmatpush2.xpose.msra.mxu0 0.0
        %1506 = vmatprep.subr.mxu0 0.0
        %1507 = vmatpush2.xpose.msra.mxu0 0.0
        %1508 = vmatprep.subr.mxu0 0.0
        %1509 = vmatpush2.xpose.msra.mxu0 0.0
        %1510 = vmatprep.subr.mxu0 0.0
        %1511 = vmatpush2.xpose.msra.mxu0 0.0
        %1512 = vmatprep.subr.mxu0 0.0
        %1513 = vmatpush2.xpose.msra.mxu0 0.0
        %1514 = vmatprep.subr.mxu0 0.0
        %1515 = vmatpush2.xpose.msra.mxu0 0.0
        %1516 = vmatprep.subr.mxu0 0.0
        %1517 = vmatpush2.xpose.msra.mxu0 0.0
        %1518 = vmatprep.subr.mxu0 0.0
        %1519 = vmatpush2.xpose.msra.mxu0 0.0
        %1520 = vmatprep.mubr.f32.mxu0 0.0
        %1521 = vmatmul.mubr.f32.gmra.mxu0 %v1448
        %v1522 = vpop.f32.mrf.mxu0
        %v1523 = vadd.f32 0.0, %v1522
        %v1524 = vpop.f32.mrf.mxu0
        %1525 = vmatprep.mubr.f32.mxu0 0.0
        %1526 = vmatmul.mubr.f32.gmra.mxu0 %v1450
        %v1527 = vpop.f32.mrf.mxu0
        %v1528 = vadd.f32 0.0, %v1527
        %v1529 = vpop.f32.mrf.mxu0
        %1530 = vdwg.mxu0
        %1531 = vrot.lane.b32.xlu0 %v1441, 120
        %v1532 = vpop.permute.xlu0 %1531
        %1533 = vrot.lane.b32.xlu0 %v1443, 120
        %v1534 = vpop.permute.xlu0 %1533
        %v1535 = vsel %vm606, %v1435, 0
        %v1537 = vsel %vm606, %v1437, 0
        %v1539 = vsel %vm606, %v1532, 0
        %v1541 = vsel %vm606, %v1534, 0
        %1543 = vmatprep.subr.mxu0 0.0
        %1544 = vmatpush1.xpose.msra.mxu0 0.0
        %1545 = vmatprep.subr.mxu0 0.0
        %1546 = vmatpush1.xpose.msra.mxu0 0.0
        %1547 = vmatprep.subr.mxu0 0.0
        %1548 = vmatpush1.xpose.msra.mxu0 0.0
        %1549 = vmatprep.subr.mxu0 0.0
        %1550 = vmatpush1.xpose.msra.mxu0 0.0
        %1551 = vmatprep.subr.mxu0 0.0
        %1552 = vmatpush1.xpose.msra.mxu0 0.0
        %1553 = vmatprep.subr.mxu0 0.0
        %1554 = vmatpush1.xpose.msra.mxu0 0.0
        %1555 = vmatprep.subr.mxu0 0.0
        %1556 = vmatpush1.xpose.msra.mxu0 0.0
        %1557 = vmatprep.subr.mxu0 0.0
        %1558 = vmatpush1.xpose.msra.mxu0 0.0
        %1559 = vmatprep.subr.mxu0 0.0
        %1560 = vmatpush1.xpose.msra.mxu0 0.0
        %1561 = vmatprep.subr.mxu0 0.0
        %1562 = vmatpush1.xpose.msra.mxu0 0.0
        %1563 = vmatprep.subr.mxu0 0.0
        %1564 = vmatpush1.xpose.msra.mxu0 0.0
        %1565 = vmatprep.subr.mxu0 0.0
        %1566 = vmatpush1.xpose.msra.mxu0 0.0
        %1567 = vmatprep.subr.mxu0 0.0
        %1568 = vmatpush1.xpose.msra.mxu0 0.0
        %1569 = vmatprep.subr.mxu0 0.0
        %1570 = vmatpush1.xpose.msra.mxu0 0.0
        %1571 = vmatprep.subr.mxu0 0.0
        %1572 = vmatpush1.xpose.msra.mxu0 %v1541
        %1573 = vmatprep.subr.mxu0 0.0
        %1574 = vmatpush1.xpose.msra.mxu0 %v1539
        %1575 = vmatprep.subr.mxu0 0.0
        %1576 = vmatpush2.xpose.msra.mxu0 0.0
        %1577 = vmatprep.subr.mxu0 0.0
        %1578 = vmatpush2.xpose.msra.mxu0 0.0
        %1579 = vmatprep.subr.mxu0 0.0
        %1580 = vmatpush2.xpose.msra.mxu0 0.0
        %1581 = vmatprep.subr.mxu0 0.0
        %1582 = vmatpush2.xpose.msra.mxu0 0.0
        %1583 = vmatprep.subr.mxu0 0.0
        %1584 = vmatpush2.xpose.msra.mxu0 0.0
        %1585 = vmatprep.subr.mxu0 0.0
        %1586 = vmatpush2.xpose.msra.mxu0 0.0
        %1587 = vmatprep.subr.mxu0 0.0
        %1588 = vmatpush2.xpose.msra.mxu0 0.0
        %1589 = vmatprep.subr.mxu0 0.0
        %1590 = vmatpush2.xpose.msra.mxu0 0.0
        %1591 = vmatprep.subr.mxu0 0.0
        %1592 = vmatpush2.xpose.msra.mxu0 0.0
        %1593 = vmatprep.subr.mxu0 0.0
        %1594 = vmatpush2.xpose.msra.mxu0 0.0
        %1595 = vmatprep.subr.mxu0 0.0
        %1596 = vmatpush2.xpose.msra.mxu0 0.0
        %1597 = vmatprep.subr.mxu0 0.0
        %1598 = vmatpush2.xpose.msra.mxu0 0.0
        %1599 = vmatprep.subr.mxu0 0.0
        %1600 = vmatpush2.xpose.msra.mxu0 0.0
        %1601 = vmatprep.subr.mxu0 0.0
        %1602 = vmatpush2.xpose.msra.mxu0 0.0
        %1603 = vmatprep.subr.mxu0 0.0
        %1604 = vmatpush2.xpose.msra.mxu0 0.0
        %1605 = vmatprep.subr.mxu0 0.0
        %1606 = vmatpush2.xpose.msra.mxu0 0.0
        %1607 = vmatprep.mubr.f32.mxu0 0.0
        %1608 = vmatmul.mubr.f32.gmra.mxu0 %v1535
        %v1609 = vpop.f32.mrf.mxu0
        %v1610 = vadd.f32 0.0, %v1609
        %v1611 = vpop.f32.mrf.mxu0
        %1612 = vmatprep.mubr.f32.mxu0 0.0
        %1613 = vmatmul.mubr.f32.gmra.mxu0 %v1537
        %v1614 = vpop.f32.mrf.mxu0
        %v1615 = vadd.f32 0.0, %v1614
        %v1616 = vpop.f32.mrf.mxu0
        %1617 = vdwg.mxu0
        %v1618 = vsel %vm416, %v1523, -inf
        %1619 = vmax.xlane.f32.xlu0 %v1618
        %v1620 = vpop.xlane.xlu0 %1619
        %v1621 = vsel %vm416, %v1528, -inf
        %1622 = vmax.xlane.f32.xlu0 %v1621
        %v1623 = vpop.xlane.xlu0 %1622
        %v1624 = vsel %vm416, %v1610, -inf
        %1625 = vmax.xlane.f32.xlu0 %v1624
        %v1626 = vpop.xlane.xlu0 %1625
        %v1627 = vsel %vm416, %v1615, -inf
        %1628 = vmax.xlane.f32.xlu0 %v1627
        %v1629 = vpop.xlane.xlu0 %1628
        %v1630 = vsub.f32 %v1523, %v1620
        %v1631 = vsub.f32 %v1528, %v1623
        %v1632 = vsub.f32 %v1610, %v1626
        %v1633 = vsub.f32 %v1615, %v1629
        %v1634 = vmul.f32 %v1630, 1.442695
        %v1635 = vpow.pop %v1634
        %v1636 = vmul.f32 %v1631, 1.442695
        %v1637 = vpow.pop %v1636
        %v1638 = vmul.f32 %v1632, 1.442695
        %v1639 = vpow.pop %v1638
        %v1640 = vmul.f32 %v1633, 1.442695
        %v1641 = vpow.pop %v1640
        %v1642 = vsel %vm416, %v1635, 0.0
        %1643 = vadd.xlane.f32.xlu0 %v1642
        %v1644 = vpop.xlane.xlu0 %1643
        %v1645 = vsel %vm416, %v1637, 0.0
        %1646 = vadd.xlane.f32.xlu0 %v1645
        %v1647 = vpop.xlane.xlu0 %1646
        %v1648 = vsel %vm416, %v1639, 0.0
        %1649 = vadd.xlane.f32.xlu0 %v1648
        %v1650 = vpop.xlane.xlu0 %1649
        %v1651 = vsel %vm416, %v1641, 0.0
        %1652 = vadd.xlane.f32.xlu0 %v1651
        %v1653 = vpop.xlane.xlu0 %1652
        %v1654 = vrcp.pop %v1644
        %v1655 = vmul.f32 %v1635, %v1654
        %v1656 = vrcp.pop %v1647
        %v1657 = vmul.f32 %v1637, %v1656
        %v1658 = vrcp.pop %v1650
        %v1659 = vmul.f32 %v1639, %v1658
        %v1660 = vrcp.pop %v1653
        %v1661 = vmul.f32 %v1641, %v1660
        %1662 = vrot.lane.b32.xlu0 %v1422, 112
        %v1663 = vpop.permute.xlu0 %1662
        %1664 = vrot.lane.b32.xlu0 %v1427, 112
        %v1665 = vpop.permute.xlu0 %1664
        %v1669 = vsel %vm416, %v1655, 0
        %v1672 = vsel %vm416, %v1657, 0
        %1674 = vmatprep.subr.mxu0 0.0
        %1675 = vmatpush1.msra.mxu0 0.0
        %1676 = vmatprep.subr.mxu0 0.0
        %1677 = vmatpush1.msra.mxu0 0.0
        %1678 = vmatprep.subr.mxu0 0.0
        %1679 = vmatpush1.msra.mxu0 0.0
        %1680 = vmatprep.subr.mxu0 0.0
        %1681 = vmatpush1.msra.mxu0 0.0
        %1682 = vmatprep.subr.mxu0 0.0
        %1683 = vmatpush1.msra.mxu0 0.0
        %1684 = vmatprep.subr.mxu0 0.0
        %1685 = vmatpush1.msra.mxu0 0.0
        %1686 = vmatprep.subr.mxu0 0.0
        %1687 = vmatpush1.msra.mxu0 0.0
        %1688 = vmatprep.subr.mxu0 0.0
        %1689 = vmatpush1.msra.mxu0 0.0
        %1690 = vmatprep.subr.mxu0 0.0
        %1691 = vmatpush1.msra.mxu0 0.0
        %1692 = vmatprep.subr.mxu0 0.0
        %1693 = vmatpush1.msra.mxu0 0.0
        %1694 = vmatprep.subr.mxu0 0.0
        %1695 = vmatpush1.msra.mxu0 0.0
        %1696 = vmatprep.subr.mxu0 0.0
        %1697 = vmatpush1.msra.mxu0 0.0
        %1698 = vmatprep.subr.mxu0 0.0
        %1699 = vmatpush1.msra.mxu0 0.0
        %1700 = vmatprep.subr.mxu0 0.0
        %1701 = vmatpush1.msra.mxu0 0.0
        %1702 = vmatprep.subr.mxu0 0.0
        %1703 = vmatpush1.msra.mxu0 %v1665
        %1704 = vmatprep.subr.mxu0 0.0
        %1705 = vmatpush1.msra.mxu0 %v1663
        %1706 = vmatprep.subr.mxu0 0.0
        %1707 = vmatpush2.msra.mxu0 0.0
        %1708 = vmatprep.subr.mxu0 0.0
        %1709 = vmatpush2.msra.mxu0 0.0
        %1710 = vmatprep.subr.mxu0 0.0
        %1711 = vmatpush2.msra.mxu0 0.0
        %1712 = vmatprep.subr.mxu0 0.0
        %1713 = vmatpush2.msra.mxu0 0.0
        %1714 = vmatprep.subr.mxu0 0.0
        %1715 = vmatpush2.msra.mxu0 0.0
        %1716 = vmatprep.subr.mxu0 0.0
        %1717 = vmatpush2.msra.mxu0 0.0
        %1718 = vmatprep.subr.mxu0 0.0
        %1719 = vmatpush2.msra.mxu0 0.0
        %1720 = vmatprep.subr.mxu0 0.0
        %1721 = vmatpush2.msra.mxu0 0.0
        %1722 = vmatprep.subr.mxu0 0.0
        %1723 = vmatpush2.msra.mxu0 0.0
        %1724 = vmatprep.subr.mxu0 0.0
        %1725 = vmatpush2.msra.mxu0 0.0
        %1726 = vmatprep.subr.mxu0 0.0
        %1727 = vmatpush2.msra.mxu0 0.0
        %1728 = vmatprep.subr.mxu0 0.0
        %1729 = vmatpush2.msra.mxu0 0.0
        %1730 = vmatprep.subr.mxu0 0.0
        %1731 = vmatpush2.msra.mxu0 0.0
        %1732 = vmatprep.subr.mxu0 0.0
        %1733 = vmatpush2.msra.mxu0 0.0
        %1734 = vmatprep.subr.mxu0 0.0
        %1735 = vmatpush2.msra.mxu0 0.0
        %1736 = vmatprep.subr.mxu0 0.0
        %1737 = vmatpush2.msra.mxu0 0.0
        %1738 = vmatprep.mubr.f32.mxu0 0.0
        %1739 = vmatmul.mubr.f32.gmra.mxu0 %v1669
        %v1740 = vpop.f32.mrf.mxu0
        %v1741 = vadd.f32 0.0, %v1740
        %v1742 = vpop.f32.mrf.mxu0
        %1743 = vmatprep.mubr.f32.mxu0 0.0
        %1744 = vmatmul.mubr.f32.gmra.mxu0 %v1672
        %v1745 = vpop.f32.mrf.mxu0
        %v1746 = vadd.f32 0.0, %v1745
        %v1747 = vpop.f32.mrf.mxu0
        %1748 = vdwg.mxu0
        %1749 = vrot.lane.b32.xlu0 %v1441, 112
        %v1750 = vpop.permute.xlu0 %1749
        %1751 = vrot.lane.b32.xlu0 %v1443, 112
        %v1752 = vpop.permute.xlu0 %1751
        %v1756 = vsel %vm416, %v1659, 0
        %v1759 = vsel %vm416, %v1661, 0
        %1761 = vmatprep.subr.mxu0 0.0
        %1762 = vmatpush1.msra.mxu0 0.0
        %1763 = vmatprep.subr.mxu0 0.0
        %1764 = vmatpush1.msra.mxu0 0.0
        %1765 = vmatprep.subr.mxu0 0.0
        %1766 = vmatpush1.msra.mxu0 0.0
        %1767 = vmatprep.subr.mxu0 0.0
        %1768 = vmatpush1.msra.mxu0 0.0
        %1769 = vmatprep.subr.mxu0 0.0
        %1770 = vmatpush1.msra.mxu0 0.0
        %1771 = vmatprep.subr.mxu0 0.0
        %1772 = vmatpush1.msra.mxu0 0.0
        %1773 = vmatprep.subr.mxu0 0.0
        %1774 = vmatpush1.msra.mxu0 0.0
        %1775 = vmatprep.subr.mxu0 0.0
        %1776 = vmatpush1.msra.mxu0 0.0
        %1777 = vmatprep.subr.mxu0 0.0
        %1778 = vmatpush1.msra.mxu0 0.0
        %1779 = vmatprep.subr.mxu0 0.0
        %1780 = vmatpush1.msra.mxu0 0.0
        %1781 = vmatprep.subr.mxu0 0.0
        %1782 = vmatpush1.msra.mxu0 0.0
        %1783 = vmatprep.subr.mxu0 0.0
        %1784 = vmatpush1.msra.mxu0 0.0
        %1785 = vmatprep.subr.mxu0 0.0
        %1786 = vmatpush1.msra.mxu0 0.0
        %1787 = vmatprep.subr.mxu0 0.0
        %1788 = vmatpush1.msra.mxu0 0.0
        %1789 = vmatprep.subr.mxu0 0.0
        %1790 = vmatpush1.msra.mxu0 %v1752
        %1791 = vmatprep.subr.mxu0 0.0
        %1792 = vmatpush1.msra.mxu0 %v1750
        %1793 = vmatprep.subr.mxu0 0.0
        %1794 = vmatpush2.msra.mxu0 0.0
        %1795 = vmatprep.subr.mxu0 0.0
        %1796 = vmatpush2.msra.mxu0 0.0
        %1797 = vmatprep.subr.mxu0 0.0
        %1798 = vmatpush2.msra.mxu0 0.0
        %1799 = vmatprep.subr.mxu0 0.0
        %1800 = vmatpush2.msra.mxu0 0.0
        %1801 = vmatprep.subr.mxu0 0.0
        %1802 = vmatpush2.msra.mxu0 0.0
        %1803 = vmatprep.subr.mxu0 0.0
        %1804 = vmatpush2.msra.mxu0 0.0
        %1805 = vmatprep.subr.mxu0 0.0
        %1806 = vmatpush2.msra.mxu0 0.0
        %1807 = vmatprep.subr.mxu0 0.0
        %1808 = vmatpush2.msra.mxu0 0.0
        %1809 = vmatprep.subr.mxu0 0.0
        %1810 = vmatpush2.msra.mxu0 0.0
        %1811 = vmatprep.subr.mxu0 0.0
        %1812 = vmatpush2.msra.mxu0 0.0
        %1813 = vmatprep.subr.mxu0 0.0
        %1814 = vmatpush2.msra.mxu0 0.0
        %1815 = vmatprep.subr.mxu0 0.0
        %1816 = vmatpush2.msra.mxu0 0.0
        %1817 = vmatprep.subr.mxu0 0.0
        %1818 = vmatpush2.msra.mxu0 0.0
        %1819 = vmatprep.subr.mxu0 0.0
        %1820 = vmatpush2.msra.mxu0 0.0
        %1821 = vmatprep.subr.mxu0 0.0
        %1822 = vmatpush2.msra.mxu0 0.0
        %1823 = vmatprep.subr.mxu0 0.0
        %1824 = vmatpush2.msra.mxu0 0.0
        %1825 = vmatprep.mubr.f32.mxu0 0.0
        %1826 = vmatmul.mubr.f32.gmra.mxu0 %v1756
        %v1827 = vpop.f32.mrf.mxu0
        %v1828 = vadd.f32 0.0, %v1827
        %v1829 = vpop.f32.mrf.mxu0
        %1830 = vmatprep.mubr.f32.mxu0 0.0
        %1831 = vmatmul.mubr.f32.gmra.mxu0 %v1759
        %v1832 = vpop.f32.mrf.mxu0
        %v1833 = vadd.f32 0.0, %v1832
        %v1834 = vpop.f32.mrf.mxu0
        %1835 = vdwg.mxu0
        %s1836 = scalar_lea.vmem %s6, 8
        %v1837 = vld [vmem:[%s1836] sm:$0xf]
        %v1839 = vsel %vm606, %v1741, 0
        %v1842 = vsel %vm606, %v1746, 0
        %v1845 = vsel %vm1004, %v1837, 0
        %1847 = vmatprep.subr.mxu0 0.0
        %1848 = vmatpush1.msra.mxu0 0.0
        %1849 = vmatprep.subr.mxu0 0.0
        %1850 = vmatpush1.msra.mxu0 0.0
        %1851 = vmatprep.subr.mxu0 0.0
        %1852 = vmatpush1.msra.mxu0 0.0
        %1853 = vmatprep.subr.mxu0 0.0
        %1854 = vmatpush1.msra.mxu0 0.0
        %1855 = vmatprep.subr.mxu0 0.0
        %1856 = vmatpush1.msra.mxu0 0.0
        %1857 = vmatprep.subr.mxu0 0.0
        %1858 = vmatpush1.msra.mxu0 0.0
        %1859 = vmatprep.subr.mxu0 0.0
        %1860 = vmatpush1.msra.mxu0 0.0
        %1861 = vmatprep.subr.mxu0 0.0
        %1862 = vmatpush1.msra.mxu0 0.0
        %1863 = vmatprep.subr.mxu0 0.0
        %1864 = vmatpush1.msra.mxu0 0.0
        %1865 = vmatprep.subr.mxu0 0.0
        %1866 = vmatpush1.msra.mxu0 0.0
        %1867 = vmatprep.subr.mxu0 0.0
        %1868 = vmatpush1.msra.mxu0 0.0
        %1869 = vmatprep.subr.mxu0 0.0
        %1870 = vmatpush1.msra.mxu0 0.0
        %1871 = vmatprep.subr.mxu0 0.0
        %1872 = vmatpush1.msra.mxu0 0.0
        %1873 = vmatprep.subr.mxu0 0.0
        %1874 = vmatpush1.msra.mxu0 0.0
        %1875 = vmatprep.subr.mxu0 0.0
        %1876 = vmatpush1.msra.mxu0 0.0
        %1877 = vmatprep.subr.mxu0 0.0
        %1878 = vmatpush1.msra.mxu0 %v1845
        %1879 = vmatprep.subr.mxu0 0.0
        %1880 = vmatpush2.msra.mxu0 0.0
        %1881 = vmatprep.subr.mxu0 0.0
        %1882 = vmatpush2.msra.mxu0 0.0
        %1883 = vmatprep.subr.mxu0 0.0
        %1884 = vmatpush2.msra.mxu0 0.0
        %1885 = vmatprep.subr.mxu0 0.0
        %1886 = vmatpush2.msra.mxu0 0.0
        %1887 = vmatprep.subr.mxu0 0.0
        %1888 = vmatpush2.msra.mxu0 0.0
        %1889 = vmatprep.subr.mxu0 0.0
        %1890 = vmatpush2.msra.mxu0 0.0
        %1891 = vmatprep.subr.mxu0 0.0
        %1892 = vmatpush2.msra.mxu0 0.0
        %1893 = vmatprep.subr.mxu0 0.0
        %1894 = vmatpush2.msra.mxu0 0.0
        %1895 = vmatprep.subr.mxu0 0.0
        %1896 = vmatpush2.msra.mxu0 0.0
        %1897 = vmatprep.subr.mxu0 0.0
        %1898 = vmatpush2.msra.mxu0 0.0
        %1899 = vmatprep.subr.mxu0 0.0
        %1900 = vmatpush2.msra.mxu0 0.0
        %1901 = vmatprep.subr.mxu0 0.0
        %1902 = vmatpush2.msra.mxu0 0.0
        %1903 = vmatprep.subr.mxu0 0.0
        %1904 = vmatpush2.msra.mxu0 0.0
        %1905 = vmatprep.subr.mxu0 0.0
        %1906 = vmatpush2.msra.mxu0 0.0
        %1907 = vmatprep.subr.mxu0 0.0
        %1908 = vmatpush2.msra.mxu0 0.0
        %1909 = vmatprep.subr.mxu0 0.0
        %1910 = vmatpush2.msra.mxu0 0.0
        %1911 = vmatprep.mubr.f32.mxu0 0.0
        %1912 = vmatmul.mubr.f32.gmra.mxu0 %v1839
        %v1913 = vpop.f32.mrf.mxu0
        %v1914 = vadd.f32 0.0, %v1913
        %v1915 = vpop.f32.mrf.mxu0
        %1916 = vmatprep.mubr.f32.mxu0 0.0
        %1917 = vmatmul.mubr.f32.gmra.mxu0 %v1842
        %v1918 = vpop.f32.mrf.mxu0
        %v1919 = vadd.f32 0.0, %v1918
        %v1920 = vpop.f32.mrf.mxu0
        %1921 = vdwg.mxu0
        %v1922 = vadd.f32 %v1159, %v1914
        %v1923 = vadd.f32 %v1164, %v1919
        %s1924 = scalar_lea.vmem %s6, 12
        %v1925 = vld [vmem:[%s1924] sm:$0xf]
        %v1927 = vsel %vm606, %v1828, 0
        %v1930 = vsel %vm606, %v1833, 0
        %v1933 = vsel %vm1004, %v1925, 0
        %1935 = vmatprep.subr.mxu0 0.0
        %1936 = vmatpush1.msra.mxu0 0.0
        %1937 = vmatprep.subr.mxu0 0.0
        %1938 = vmatpush1.msra.mxu0 0.0
        %1939 = vmatprep.subr.mxu0 0.0
        %1940 = vmatpush1.msra.mxu0 0.0
        %1941 = vmatprep.subr.mxu0 0.0
        %1942 = vmatpush1.msra.mxu0 0.0
        %1943 = vmatprep.subr.mxu0 0.0
        %1944 = vmatpush1.msra.mxu0 0.0
        %1945 = vmatprep.subr.mxu0 0.0
        %1946 = vmatpush1.msra.mxu0 0.0
        %1947 = vmatprep.subr.mxu0 0.0
        %1948 = vmatpush1.msra.mxu0 0.0
        %1949 = vmatprep.subr.mxu0 0.0
        %1950 = vmatpush1.msra.mxu0 0.0
        %1951 = vmatprep.subr.mxu0 0.0
        %1952 = vmatpush1.msra.mxu0 0.0
        %1953 = vmatprep.subr.mxu0 0.0
        %1954 = vmatpush1.msra.mxu0 0.0
        %1955 = vmatprep.subr.mxu0 0.0
        %1956 = vmatpush1.msra.mxu0 0.0
        %1957 = vmatprep.subr.mxu0 0.0
        %1958 = vmatpush1.msra.mxu0 0.0
        %1959 = vmatprep.subr.mxu0 0.0
        %1960 = vmatpush1.msra.mxu0 0.0
        %1961 = vmatprep.subr.mxu0 0.0
        %1962 = vmatpush1.msra.mxu0 0.0
        %1963 = vmatprep.subr.mxu0 0.0
        %1964 = vmatpush1.msra.mxu0 0.0
        %1965 = vmatprep.subr.mxu0 0.0
        %1966 = vmatpush1.msra.mxu0 %v1933
        %1967 = vmatprep.subr.mxu0 0.0
        %1968 = vmatpush2.msra.mxu0 0.0
        %1969 = vmatprep.subr.mxu0 0.0
        %1970 = vmatpush2.msra.mxu0 0.0
        %1971 = vmatprep.subr.mxu0 0.0
        %1972 = vmatpush2.msra.mxu0 0.0
        %1973 = vmatprep.subr.mxu0 0.0
        %1974 = vmatpush2.msra.mxu0 0.0
        %1975 = vmatprep.subr.mxu0 0.0
        %1976 = vmatpush2.msra.mxu0 0.0
        %1977 = vmatprep.subr.mxu0 0.0
        %1978 = vmatpush2.msra.mxu0 0.0
        %1979 = vmatprep.subr.mxu0 0.0
        %1980 = vmatpush2.msra.mxu0 0.0
        %1981 = vmatprep.subr.mxu0 0.0
        %1982 = vmatpush2.msra.mxu0 0.0
        %1983 = vmatprep.subr.mxu0 0.0
        %1984 = vmatpush2.msra.mxu0 0.0
        %1985 = vmatprep.subr.mxu0 0.0
        %1986 = vmatpush2.msra.mxu0 0.0
        %1987 = vmatprep.subr.mxu0 0.0
        %1988 = vmatpush2.msra.mxu0 0.0
        %1989 = vmatprep.subr.mxu0 0.0
        %1990 = vmatpush2.msra.mxu0 0.0
        %1991 = vmatprep.subr.mxu0 0.0
        %1992 = vmatpush2.msra.mxu0 0.0
        %1993 = vmatprep.subr.mxu0 0.0
        %1994 = vmatpush2.msra.mxu0 0.0
        %1995 = vmatprep.subr.mxu0 0.0
        %1996 = vmatpush2.msra.mxu0 0.0
        %1997 = vmatprep.subr.mxu0 0.0
        %1998 = vmatpush2.msra.mxu0 0.0
        %1999 = vmatprep.mubr.f32.mxu0 0.0
        %2000 = vmatmul.mubr.f32.gmra.mxu0 %v1927
        %v2001 = vpop.f32.mrf.mxu0
        %v2002 = vadd.f32 0.0, %v2001
        %v2003 = vpop.f32.mrf.mxu0
        %2004 = vmatprep.mubr.f32.mxu0 0.0
        %2005 = vmatmul.mubr.f32.gmra.mxu0 %v1930
        %v2006 = vpop.f32.mrf.mxu0
        %v2007 = vadd.f32 0.0, %v2006
        %v2008 = vpop.f32.mrf.mxu0
        %2009 = vdwg.mxu0
        %v2010 = vadd.f32 %v1922, %v2002
        %v2011 = vadd.f32 %v1923, %v2007
        %s2012 = scalar_lea.vmem %s2, 64
        %v2013 = vld [vmem:[%s2012] sm:$0xff]
        %v2014 = vld [vmem:[%s2012 + $0x8] sm:$0xff]
        %v2015 = vld [vmem:[%s2012 + $0x10] sm:$0xff]
        %v2016 = vld [vmem:[%s2012 + $0x18] sm:$0xff]
        %s2017 = scalar_lea.vmem %s3, 2
        %v2018 = vld [vmem:[%s2017] sm:$0x1]
        %v2020 = vlaneseq
        %v2021 = vshrl.u32 %v2020, 7
        %v2022 = vsub.s32 0, %v2021
        %v2023 = vrot.slane %v2018, %v2022
        %2025 = vmatprep.subr.mxu0 0.0
        %2026 = vmatpush1.msra.mxu0 0.0
        %2027 = vmatprep.subr.mxu0 0.0
        %2028 = vmatpush1.msra.mxu0 0.0
        %2029 = vmatprep.subr.mxu0 0.0
        %2030 = vmatpush1.msra.mxu0 0.0
        %2031 = vmatprep.subr.mxu0 0.0
        %2032 = vmatpush1.msra.mxu0 0.0
        %2033 = vmatprep.subr.mxu0 0.0
        %2034 = vmatpush1.msra.mxu0 0.0
        %2035 = vmatprep.subr.mxu0 0.0
        %2036 = vmatpush1.msra.mxu0 0.0
        %2037 = vmatprep.subr.mxu0 0.0
        %2038 = vmatpush1.msra.mxu0 0.0
        %2039 = vmatprep.subr.mxu0 0.0
        %2040 = vmatpush1.msra.mxu0 0.0
        %2041 = vmatprep.subr.mxu0 0.0
        %2042 = vmatpush1.msra.mxu0 0.0
        %2043 = vmatprep.subr.mxu0 0.0
        %2044 = vmatpush1.msra.mxu0 0.0
        %2045 = vmatprep.subr.mxu0 0.0
        %2046 = vmatpush1.msra.mxu0 0.0
        %2047 = vmatprep.subr.mxu0 0.0
        %2048 = vmatpush1.msra.mxu0 0.0
        %2049 = vmatprep.subr.mxu0 0.0
        %2050 = vmatpush1.msra.mxu0 %v2016
        %2051 = vmatprep.subr.mxu0 0.0
        %2052 = vmatpush1.msra.mxu0 %v2015
        %2053 = vmatprep.subr.mxu0 0.0
        %2054 = vmatpush1.msra.mxu0 %v2014
        %2055 = vmatprep.subr.mxu0 0.0
        %2056 = vmatpush1.msra.mxu0 %v2013
        %2057 = vmatprep.subr.mxu0 0.0
        %2058 = vmatpush2.msra.mxu0 0.0
        %2059 = vmatprep.subr.mxu0 0.0
        %2060 = vmatpush2.msra.mxu0 0.0
        %2061 = vmatprep.subr.mxu0 0.0
        %2062 = vmatpush2.msra.mxu0 0.0
        %2063 = vmatprep.subr.mxu0 0.0
        %2064 = vmatpush2.msra.mxu0 0.0
        %2065 = vmatprep.subr.mxu0 0.0
        %2066 = vmatpush2.msra.mxu0 0.0
        %2067 = vmatprep.subr.mxu0 0.0
        %2068 = vmatpush2.msra.mxu0 0.0
        %2069 = vmatprep.subr.mxu0 0.0
        %2070 = vmatpush2.msra.mxu0 0.0
        %2071 = vmatprep.subr.mxu0 0.0
        %2072 = vmatpush2.msra.mxu0 0.0
        %2073 = vmatprep.subr.mxu0 0.0
        %2074 = vmatpush2.msra.mxu0 0.0
        %2075 = vmatprep.subr.mxu0 0.0
        %2076 = vmatpush2.msra.mxu0 0.0
        %2077 = vmatprep.subr.mxu0 0.0
        %2078 = vmatpush2.msra.mxu0 0.0
        %2079 = vmatprep.subr.mxu0 0.0
        %2080 = vmatpush2.msra.mxu0 0.0
        %2081 = vmatprep.subr.mxu0 0.0
        %2082 = vmatpush2.msra.mxu0 0.0
        %2083 = vmatprep.subr.mxu0 0.0
        %2084 = vmatpush2.msra.mxu0 0.0
        %2085 = vmatprep.subr.mxu0 0.0
        %2086 = vmatpush2.msra.mxu0 0.0
        %2087 = vmatprep.subr.mxu0 0.0
        %2088 = vmatpush2.msra.mxu0 0.0
        %2089 = vmatprep.mubr.f32.mxu0 0.0
        %2090 = vmatmul.mubr.f32.gmra.mxu0 %v334
        %v2091 = vpop.f32.mrf.mxu0
        %v2092 = vadd.f32 %v2023, %v2091
        %v2093 = vpop.f32.mrf.mxu0
        %2094 = vmatprep.mubr.f32.mxu0 0.0
        %2095 = vmatmul.mubr.f32.gmra.mxu0 %v337
        %v2096 = vpop.f32.mrf.mxu0
        %v2097 = vadd.f32 %v2023, %v2096
        %v2098 = vpop.f32.mrf.mxu0
        %2099 = vdwg.mxu0
        %s2100 = scalar_lea.vmem %s1, 32
        %v2101 = vld [vmem:[%s2100] sm:$0xff]
        %v2102 = vld [vmem:[%s2100 + $0x8] sm:$0xff]
        %v2104 = vsel %vm416, %v2101, 0
        %v2107 = vsel %vm416, %v2102, 0
        %2109 = vmatprep.subr.mxu0 0.0
        %2110 = vmatpush1.msra.mxu0 0.0
        %2111 = vmatprep.subr.mxu0 0.0
        %2112 = vmatpush1.msra.mxu0 0.0
        %2113 = vmatprep.subr.mxu0 0.0
        %2114 = vmatpush1.msra.mxu0 0.0
        %2115 = vmatprep.subr.mxu0 0.0
        %2116 = vmatpush1.msra.mxu0 0.0
        %2117 = vmatprep.subr.mxu0 0.0
        %2118 = vmatpush1.msra.mxu0 0.0
        %2119 = vmatprep.subr.mxu0 0.0
        %2120 = vmatpush1.msra.mxu0 0.0
        %2121 = vmatprep.subr.mxu0 0.0
        %2122 = vmatpush1.msra.mxu0 0.0
        %2123 = vmatprep.subr.mxu0 0.0
        %2124 = vmatpush1.msra.mxu0 0.0
        %2125 = vmatprep.subr.mxu0 0.0
        %2126 = vmatpush1.msra.mxu0 0.0
        %2127 = vmatprep.subr.mxu0 0.0
        %2128 = vmatpush1.msra.mxu0 0.0
        %2129 = vmatprep.subr.mxu0 0.0
        %2130 = vmatpush1.msra.mxu0 0.0
        %2131 = vmatprep.subr.mxu0 0.0
        %2132 = vmatpush1.msra.mxu0 0.0
        %2133 = vmatprep.subr.mxu0 0.0
        %2134 = vmatpush1.msra.mxu0 0.0
        %2135 = vmatprep.subr.mxu0 0.0
        %2136 = vmatpush1.msra.mxu0 0.0
        %2137 = vmatprep.subr.mxu0 0.0
        %2138 = vmatpush1.msra.mxu0 %v2097
        %2139 = vmatprep.subr.mxu0 0.0
        %2140 = vmatpush1.msra.mxu0 %v2092
        %2141 = vmatprep.subr.mxu0 0.0
        %2142 = vmatpush2.msra.mxu0 0.0
        %2143 = vmatprep.subr.mxu0 0.0
        %2144 = vmatpush2.msra.mxu0 0.0
        %2145 = vmatprep.subr.mxu0 0.0
        %2146 = vmatpush2.msra.mxu0 0.0
        %2147 = vmatprep.subr.mxu0 0.0
        %2148 = vmatpush2.msra.mxu0 0.0
        %2149 = vmatprep.subr.mxu0 0.0
        %2150 = vmatpush2.msra.mxu0 0.0
        %2151 = vmatprep.subr.mxu0 0.0
        %2152 = vmatpush2.msra.mxu0 0.0
        %2153 = vmatprep.subr.mxu0 0.0
        %2154 = vmatpush2.msra.mxu0 0.0
        %2155 = vmatprep.subr.mxu0 0.0
        %2156 = vmatpush2.msra.mxu0 0.0
        %2157 = vmatprep.subr.mxu0 0.0
        %2158 = vmatpush2.msra.mxu0 0.0
        %2159 = vmatprep.subr.mxu0 0.0
        %2160 = vmatpush2.msra.mxu0 0.0
        %2161 = vmatprep.subr.mxu0 0.0
        %2162 = vmatpush2.msra.mxu0 0.0
        %2163 = vmatprep.subr.mxu0 0.0
        %2164 = vmatpush2.msra.mxu0 0.0
        %2165 = vmatprep.subr.mxu0 0.0
        %2166 = vmatpush2.msra.mxu0 0.0
        %2167 = vmatprep.subr.mxu0 0.0
        %2168 = vmatpush2.msra.mxu0 0.0
        %2169 = vmatprep.subr.mxu0 0.0
        %2170 = vmatpush2.msra.mxu0 0.0
        %2171 = vmatprep.subr.mxu0 0.0
        %2172 = vmatpush2.msra.mxu0 0.0
        %2173 = vmatprep.mubr.f32.mxu0 0.0
        %2174 = vmatmul.mubr.f32.gmra.mxu0 %v2104
        %v2175 = vpop.f32.mrf.mxu0
        %v2176 = vadd.f32 0.0, %v2175
        %v2177 = vpop.f32.mrf.mxu0
        %2178 = vmatprep.mubr.f32.mxu0 0.0
        %2179 = vmatmul.mubr.f32.gmra.mxu0 %v2107
        %v2180 = vpop.f32.mrf.mxu0
        %v2181 = vadd.f32 0.0, %v2180
        %v2182 = vpop.f32.mrf.mxu0
        %2183 = vdwg.mxu0
        %s2184 = scalar_lea.vmem %s4, 16
        %v2185 = vld [vmem:[%s2184] sm:$0xff]
        %s2186 = scalar_lea.vmem [#allocation2], 2
        %v2187 = vld [vmem:[%s2186] sm:$0x1]
        %v2189 = vlaneseq
        %v2190 = vshrl.u32 %v2189, 7
        %v2191 = vsub.s32 0, %v2190
        %v2192 = vrot.slane %v2187, %v2191
        %v2195 = vsel %vm506, %v2176, 0
        %v2198 = vsel %vm506, %v2181, 0
        %2200 = vmatprep.subr.mxu0 0.0
        %2201 = vmatpush1.msra.mxu0 0.0
        %2202 = vmatprep.subr.mxu0 0.0
        %2203 = vmatpush1.msra.mxu0 0.0
        %2204 = vmatprep.subr.mxu0 0.0
        %2205 = vmatpush1.msra.mxu0 0.0
        %2206 = vmatprep.subr.mxu0 0.0
        %2207 = vmatpush1.msra.mxu0 0.0
        %2208 = vmatprep.subr.mxu0 0.0
        %2209 = vmatpush1.msra.mxu0 0.0
        %2210 = vmatprep.subr.mxu0 0.0
        %2211 = vmatpush1.msra.mxu0 0.0
        %2212 = vmatprep.subr.mxu0 0.0
        %2213 = vmatpush1.msra.mxu0 0.0
        %2214 = vmatprep.subr.mxu0 0.0
        %2215 = vmatpush1.msra.mxu0 0.0
        %2216 = vmatprep.subr.mxu0 0.0
        %2217 = vmatpush1.msra.mxu0 0.0
        %2218 = vmatprep.subr.mxu0 0.0
        %2219 = vmatpush1.msra.mxu0 0.0
        %2220 = vmatprep.subr.mxu0 0.0
        %2221 = vmatpush1.msra.mxu0 0.0
        %2222 = vmatprep.subr.mxu0 0.0
        %2223 = vmatpush1.msra.mxu0 0.0
        %2224 = vmatprep.subr.mxu0 0.0
        %2225 = vmatpush1.msra.mxu0 0.0
        %2226 = vmatprep.subr.mxu0 0.0
        %2227 = vmatpush1.msra.mxu0 0.0
        %2228 = vmatprep.subr.mxu0 0.0
        %2229 = vmatpush1.msra.mxu0 0.0
        %2230 = vmatprep.subr.mxu0 0.0
        %2231 = vmatpush1.msra.mxu0 %v2185
        %2232 = vmatprep.subr.mxu0 0.0
        %2233 = vmatpush2.msra.mxu0 0.0
        %2234 = vmatprep.subr.mxu0 0.0
        %2235 = vmatpush2.msra.mxu0 0.0
        %2236 = vmatprep.subr.mxu0 0.0
        %2237 = vmatpush2.msra.mxu0 0.0
        %2238 = vmatprep.subr.mxu0 0.0
        %2239 = vmatpush2.msra.mxu0 0.0
        %2240 = vmatprep.subr.mxu0 0.0
        %2241 = vmatpush2.msra.mxu0 0.0
        %2242 = vmatprep.subr.mxu0 0.0
        %2243 = vmatpush2.msra.mxu0 0.0
        %2244 = vmatprep.subr.mxu0 0.0
        %2245 = vmatpush2.msra.mxu0 0.0
        %2246 = vmatprep.subr.mxu0 0.0
        %2247 = vmatpush2.msra.mxu0 0.0
        %2248 = vmatprep.subr.mxu0 0.0
        %2249 = vmatpush2.msra.mxu0 0.0
        %2250 = vmatprep.subr.mxu0 0.0
        %2251 = vmatpush2.msra.mxu0 0.0
        %2252 = vmatprep.subr.mxu0 0.0
        %2253 = vmatpush2.msra.mxu0 0.0
        %2254 = vmatprep.subr.mxu0 0.0
        %2255 = vmatpush2.msra.mxu0 0.0
        %2256 = vmatprep.subr.mxu0 0.0
        %2257 = vmatpush2.msra.mxu0 0.0
        %2258 = vmatprep.subr.mxu0 0.0
        %2259 = vmatpush2.msra.mxu0 0.0
        %2260 = vmatprep.subr.mxu0 0.0
        %2261 = vmatpush2.msra.mxu0 0.0
        %2262 = vmatprep.subr.mxu0 0.0
        %2263 = vmatpush2.msra.mxu0 0.0
        %2264 = vmatprep.mubr.f32.mxu0 0.0
        %2265 = vmatmul.mubr.f32.gmra.mxu0 %v2195
        %v2266 = vpop.f32.mrf.mxu0
        %v2267 = vadd.f32 %v2192, %v2266
        %v2268 = vpop.f32.mrf.mxu0
        %2269 = vmatprep.mubr.f32.mxu0 0.0
        %2270 = vmatmul.mubr.f32.gmra.mxu0 %v2198
        %v2271 = vpop.f32.mrf.mxu0
        %v2272 = vadd.f32 %v2192, %v2271
        %v2273 = vpop.f32.mrf.mxu0
        %2274 = vdwg.mxu0
        %v2275 = vmul.f32 %v2267, 0.35355338
        %v2276 = vmul.f32 %v2272, 0.35355338
        %2279 = vrot.lane.b32.xlu0 %v2275, 124
        %v2280 = vpop.permute.xlu0 %2279
        %2281 = vrot.lane.b32.xlu0 %v2276, 124
        %v2282 = vpop.permute.xlu0 %2281
        %2285 = vrot.lane.b32.xlu0 %v2267, 124
        %v2286 = vpop.permute.xlu0 %2285
        %2287 = vrot.lane.b32.xlu0 %v2272, 124
        %v2288 = vpop.permute.xlu0 %2287
        %2289 = vrot.lane.b32.xlu0 %v2267, 120
        %v2290 = vpop.permute.xlu0 %2289
        %2291 = vrot.lane.b32.xlu0 %v2272, 120
        %v2292 = vpop.permute.xlu0 %2291
        %v2293 = vsel %vm606, %v2275, 0
        %v2295 = vsel %vm606, %v2276, 0
        %v2297 = vsel %vm606, %v2290, 0
        %v2299 = vsel %vm606, %v2292, 0
        %2301 = vmatprep.subr.mxu0 0.0
        %2302 = vmatpush1.xpose.msra.mxu0 0.0
        %2303 = vmatprep.subr.mxu0 0.0
        %2304 = vmatpush1.xpose.msra.mxu0 0.0
        %2305 = vmatprep.subr.mxu0 0.0
        %2306 = vmatpush1.xpose.msra.mxu0 0.0
        %2307 = vmatprep.subr.mxu0 0.0
        %2308 = vmatpush1.xpose.msra.mxu0 0.0
        %2309 = vmatprep.subr.mxu0 0.0
        %2310 = vmatpush1.xpose.msra.mxu0 0.0
        %2311 = vmatprep.subr.mxu0 0.0
        %2312 = vmatpush1.xpose.msra.mxu0 0.0
        %2313 = vmatprep.subr.mxu0 0.0
        %2314 = vmatpush1.xpose.msra.mxu0 0.0
        %2315 = vmatprep.subr.mxu0 0.0
        %2316 = vmatpush1.xpose.msra.mxu0 0.0
        %2317 = vmatprep.subr.mxu0 0.0
        %2318 = vmatpush1.xpose.msra.mxu0 0.0
        %2319 = vmatprep.subr.mxu0 0.0
        %2320 = vmatpush1.xpose.msra.mxu0 0.0
        %2321 = vmatprep.subr.mxu0 0.0
        %2322 = vmatpush1.xpose.msra.mxu0 0.0
        %2323 = vmatprep.subr.mxu0 0.0
        %2324 = vmatpush1.xpose.msra.mxu0 0.0
        %2325 = vmatprep.subr.mxu0 0.0
        %2326 = vmatpush1.xpose.msra.mxu0 0.0
        %2327 = vmatprep.subr.mxu0 0.0
        %2328 = vmatpush1.xpose.msra.mxu0 0.0
        %2329 = vmatprep.subr.mxu0 0.0
        %2330 = vmatpush1.xpose.msra.mxu0 %v2299
        %2331 = vmatprep.subr.mxu0 0.0
        %2332 = vmatpush1.xpose.msra.mxu0 %v2297
        %2333 = vmatprep.subr.mxu0 0.0
        %2334 = vmatpush2.xpose.msra.mxu0 0.0
        %2335 = vmatprep.subr.mxu0 0.0
        %2336 = vmatpush2.xpose.msra.mxu0 0.0
        %2337 = vmatprep.subr.mxu0 0.0
        %2338 = vmatpush2.xpose.msra.mxu0 0.0
        %2339 = vmatprep.subr.mxu0 0.0
        %2340 = vmatpush2.xpose.msra.mxu0 0.0
        %2341 = vmatprep.subr.mxu0 0.0
        %2342 = vmatpush2.xpose.msra.mxu0 0.0
        %2343 = vmatprep.subr.mxu0 0.0
        %2344 = vmatpush2.xpose.msra.mxu0 0.0
        %2345 = vmatprep.subr.mxu0 0.0
        %2346 = vmatpush2.xpose.msra.mxu0 0.0
        %2347 = vmatprep.subr.mxu0 0.0
        %2348 = vmatpush2.xpose.msra.mxu0 0.0
        %2349 = vmatprep.subr.mxu0 0.0
        %2350 = vmatpush2.xpose.msra.mxu0 0.0
        %2351 = vmatprep.subr.mxu0 0.0
        %2352 = vmatpush2.xpose.msra.mxu0 0.0
        %2353 = vmatprep.subr.mxu0 0.0
        %2354 = vmatpush2.xpose.msra.mxu0 0.0
        %2355 = vmatprep.subr.mxu0 0.0
        %2356 = vmatpush2.xpose.msra.mxu0 0.0
        %2357 = vmatprep.subr.mxu0 0.0
        %2358 = vmatpush2.xpose.msra.mxu0 0.0
        %2359 = vmatprep.subr.mxu0 0.0
        %2360 = vmatpush2.xpose.msra.mxu0 0.0
        %2361 = vmatprep.subr.mxu0 0.0
        %2362 = vmatpush2.xpose.msra.mxu0 0.0
        %2363 = vmatprep.subr.mxu0 0.0
        %2364 = vmatpush2.xpose.msra.mxu0 0.0
        %2365 = vmatprep.mubr.f32.mxu0 0.0
        %2366 = vmatmul.mubr.f32.gmra.mxu0 %v2293
        %v2367 = vpop.f32.mrf.mxu0
        %v2368 = vadd.f32 0.0, %v2367
        %v2369 = vpop.f32.mrf.mxu0
        %2370 = vmatprep.mubr.f32.mxu0 0.0
        %2371 = vmatmul.mubr.f32.gmra.mxu0 %v2295
        %v2372 = vpop.f32.mrf.mxu0
        %v2373 = vadd.f32 0.0, %v2372
        %v2374 = vpop.f32.mrf.mxu0
        %2375 = vdwg.mxu0
        %2376 = vrot.lane.b32.xlu0 %v2286, 120
        %v2377 = vpop.permute.xlu0 %2376
        %2378 = vrot.lane.b32.xlu0 %v2288, 120
        %v2379 = vpop.permute.xlu0 %2378
        %v2380 = vsel %vm606, %v2280, 0
        %v2382 = vsel %vm606, %v2282, 0
        %v2384 = vsel %vm606, %v2377, 0
        %v2386 = vsel %vm606, %v2379, 0
        %2388 = vmatprep.subr.mxu0 0.0
        %2389 = vmatpush1.xpose.msra.mxu0 0.0
        %2390 = vmatprep.subr.mxu0 0.0
        %2391 = vmatpush1.xpose.msra.mxu0 0.0
        %2392 = vmatprep.subr.mxu0 0.0
        %2393 = vmatpush1.xpose.msra.mxu0 0.0
        %2394 = vmatprep.subr.mxu0 0.0
        %2395 = vmatpush1.xpose.msra.mxu0 0.0
        %2396 = vmatprep.subr.mxu0 0.0
        %2397 = vmatpush1.xpose.msra.mxu0 0.0
        %2398 = vmatprep.subr.mxu0 0.0
        %2399 = vmatpush1.xpose.msra.mxu0 0.0
        %2400 = vmatprep.subr.mxu0 0.0
        %2401 = vmatpush1.xpose.msra.mxu0 0.0
        %2402 = vmatprep.subr.mxu0 0.0
        %2403 = vmatpush1.xpose.msra.mxu0 0.0
        %2404 = vmatprep.subr.mxu0 0.0
        %2405 = vmatpush1.xpose.msra.mxu0 0.0
        %2406 = vmatprep.subr.mxu0 0.0
        %2407 = vmatpush1.xpose.msra.mxu0 0.0
        %2408 = vmatprep.subr.mxu0 0.0
        %2409 = vmatpush1.xpose.msra.mxu0 0.0
        %2410 = vmatprep.subr.mxu0 0.0
        %2411 = vmatpush1.xpose.msra.mxu0 0.0
        %2412 = vmatprep.subr.mxu0 0.0
        %2413 = vmatpush1.xpose.msra.mxu0 0.0
        %2414 = vmatprep.subr.mxu0 0.0
        %2415 = vmatpush1.xpose.msra.mxu0 0.0
        %2416 = vmatprep.subr.mxu0 0.0
        %2417 = vmatpush1.xpose.msra.mxu0 %v2386
        %2418 = vmatprep.subr.mxu0 0.0
        %2419 = vmatpush1.xpose.msra.mxu0 %v2384
        %2420 = vmatprep.subr.mxu0 0.0
        %2421 = vmatpush2.xpose.msra.mxu0 0.0
        %2422 = vmatprep.subr.mxu0 0.0
        %2423 = vmatpush2.xpose.msra.mxu0 0.0
        %2424 = vmatprep.subr.mxu0 0.0
        %2425 = vmatpush2.xpose.msra.mxu0 0.0
        %2426 = vmatprep.subr.mxu0 0.0
        %2427 = vmatpush2.xpose.msra.mxu0 0.0
        %2428 = vmatprep.subr.mxu0 0.0
        %2429 = vmatpush2.xpose.msra.mxu0 0.0
        %2430 = vmatprep.subr.mxu0 0.0
        %2431 = vmatpush2.xpose.msra.mxu0 0.0
        %2432 = vmatprep.subr.mxu0 0.0
        %2433 = vmatpush2.xpose.msra.mxu0 0.0
        %2434 = vmatprep.subr.mxu0 0.0
        %2435 = vmatpush2.xpose.msra.mxu0 0.0
        %2436 = vmatprep.subr.mxu0 0.0
        %2437 = vmatpush2.xpose.msra.mxu0 0.0
        %2438 = vmatprep.subr.mxu0 0.0
        %2439 = vmatpush2.xpose.msra.mxu0 0.0
        %2440 = vmatprep.subr.mxu0 0.0
        %2441 = vmatpush2.xpose.msra.mxu0 0.0
        %2442 = vmatprep.subr.mxu0 0.0
        %2443 = vmatpush2.xpose.msra.mxu0 0.0
        %2444 = vmatprep.subr.mxu0 0.0
        %2445 = vmatpush2.xpose.msra.mxu0 0.0
        %2446 = vmatprep.subr.mxu0 0.0
        %2447 = vmatpush2.xpose.msra.mxu0 0.0
        %2448 = vmatprep.subr.mxu0 0.0
        %2449 = vmatpush2.xpose.msra.mxu0 0.0
        %2450 = vmatprep.subr.mxu0 0.0
        %2451 = vmatpush2.xpose.msra.mxu0 0.0
        %2452 = vmatprep.mubr.f32.mxu0 0.0
        %2453 = vmatmul.mubr.f32.gmra.mxu0 %v2380
        %v2454 = vpop.f32.mrf.mxu0
        %v2455 = vadd.f32 0.0, %v2454
        %v2456 = vpop.f32.mrf.mxu0
        %2457 = vmatprep.mubr.f32.mxu0 0.0
        %2458 = vmatmul.mubr.f32.gmra.mxu0 %v2382
        %v2459 = vpop.f32.mrf.mxu0
        %v2460 = vadd.f32 0.0, %v2459
        %v2461 = vpop.f32.mrf.mxu0
        %2462 = vdwg.mxu0
        %v2463 = vsel %vm416, %v2368, -inf
        %2464 = vmax.xlane.f32.xlu0 %v2463
        %v2465 = vpop.xlane.xlu0 %2464
        %v2466 = vsel %vm416, %v2373, -inf
        %2467 = vmax.xlane.f32.xlu0 %v2466
        %v2468 = vpop.xlane.xlu0 %2467
        %v2469 = vsel %vm416, %v2455, -inf
        %2470 = vmax.xlane.f32.xlu0 %v2469
        %v2471 = vpop.xlane.xlu0 %2470
        %v2472 = vsel %vm416, %v2460, -inf
        %2473 = vmax.xlane.f32.xlu0 %v2472
        %v2474 = vpop.xlane.xlu0 %2473
        %v2475 = vsub.f32 %v2368, %v2465
        %v2476 = vsub.f32 %v2373, %v2468
        %v2477 = vsub.f32 %v2455, %v2471
        %v2478 = vsub.f32 %v2460, %v2474
        %v2479 = vmul.f32 %v2475, 1.442695
        %v2480 = vpow.pop %v2479
        %v2481 = vmul.f32 %v2476, 1.442695
        %v2482 = vpow.pop %v2481
        %v2483 = vmul.f32 %v2477, 1.442695
        %v2484 = vpow.pop %v2483
        %v2485 = vmul.f32 %v2478, 1.442695
        %v2486 = vpow.pop %v2485
        %v2487 = vsel %vm416, %v2480, 0.0
        %2488 = vadd.xlane.f32.xlu0 %v2487
        %v2489 = vpop.xlane.xlu0 %2488
        %v2490 = vsel %vm416, %v2482, 0.0
        %2491 = vadd.xlane.f32.xlu0 %v2490
        %v2492 = vpop.xlane.xlu0 %2491
        %v2493 = vsel %vm416, %v2484, 0.0
        %2494 = vadd.xlane.f32.xlu0 %v2493
        %v2495 = vpop.xlane.xlu0 %2494
        %v2496 = vsel %vm416, %v2486, 0.0
        %2497 = vadd.xlane.f32.xlu0 %v2496
        %v2498 = vpop.xlane.xlu0 %2497
        %v2499 = vrcp.pop %v2489
        %v2500 = vmul.f32 %v2480, %v2499
        %v2501 = vrcp.pop %v2492
        %v2502 = vmul.f32 %v2482, %v2501
        %v2503 = vrcp.pop %v2495
        %v2504 = vmul.f32 %v2484, %v2503
        %v2505 = vrcp.pop %v2498
        %v2506 = vmul.f32 %v2486, %v2505
        %2507 = vrot.lane.b32.xlu0 %v2267, 112
        %v2508 = vpop.permute.xlu0 %2507
        %2509 = vrot.lane.b32.xlu0 %v2272, 112
        %v2510 = vpop.permute.xlu0 %2509
        %v2514 = vsel %vm416, %v2500, 0
        %v2517 = vsel %vm416, %v2502, 0
        %2519 = vmatprep.subr.mxu0 0.0
        %2520 = vmatpush1.msra.mxu0 0.0
        %2521 = vmatprep.subr.mxu0 0.0
        %2522 = vmatpush1.msra.mxu0 0.0
        %2523 = vmatprep.subr.mxu0 0.0
        %2524 = vmatpush1.msra.mxu0 0.0
        %2525 = vmatprep.subr.mxu0 0.0
        %2526 = vmatpush1.msra.mxu0 0.0
        %2527 = vmatprep.subr.mxu0 0.0
        %2528 = vmatpush1.msra.mxu0 0.0
        %2529 = vmatprep.subr.mxu0 0.0
        %2530 = vmatpush1.msra.mxu0 0.0
        %2531 = vmatprep.subr.mxu0 0.0
        %2532 = vmatpush1.msra.mxu0 0.0
        %2533 = vmatprep.subr.mxu0 0.0
        %2534 = vmatpush1.msra.mxu0 0.0
        %2535 = vmatprep.subr.mxu0 0.0
        %2536 = vmatpush1.msra.mxu0 0.0
        %2537 = vmatprep.subr.mxu0 0.0
        %2538 = vmatpush1.msra.mxu0 0.0
        %2539 = vmatprep.subr.mxu0 0.0
        %2540 = vmatpush1.msra.mxu0 0.0
        %2541 = vmatprep.subr.mxu0 0.0
        %2542 = vmatpush1.msra.mxu0 0.0
        %2543 = vmatprep.subr.mxu0 0.0
        %2544 = vmatpush1.msra.mxu0 0.0
        %2545 = vmatprep.subr.mxu0 0.0
        %2546 = vmatpush1.msra.mxu0 0.0
        %2547 = vmatprep.subr.mxu0 0.0
        %2548 = vmatpush1.msra.mxu0 %v2510
        %2549 = vmatprep.subr.mxu0 0.0
        %2550 = vmatpush1.msra.mxu0 %v2508
        %2551 = vmatprep.subr.mxu0 0.0
        %2552 = vmatpush2.msra.mxu0 0.0
        %2553 = vmatprep.subr.mxu0 0.0
        %2554 = vmatpush2.msra.mxu0 0.0
        %2555 = vmatprep.subr.mxu0 0.0
        %2556 = vmatpush2.msra.mxu0 0.0
        %2557 = vmatprep.subr.mxu0 0.0
        %2558 = vmatpush2.msra.mxu0 0.0
        %2559 = vmatprep.subr.mxu0 0.0
        %2560 = vmatpush2.msra.mxu0 0.0
        %2561 = vmatprep.subr.mxu0 0.0
        %2562 = vmatpush2.msra.mxu0 0.0
        %2563 = vmatprep.subr.mxu0 0.0
        %2564 = vmatpush2.msra.mxu0 0.0
        %2565 = vmatprep.subr.mxu0 0.0
        %2566 = vmatpush2.msra.mxu0 0.0
        %2567 = vmatprep.subr.mxu0 0.0
        %2568 = vmatpush2.msra.mxu0 0.0
        %2569 = vmatprep.subr.mxu0 0.0
        %2570 = vmatpush2.msra.mxu0 0.0
        %2571 = vmatprep.subr.mxu0 0.0
        %2572 = vmatpush2.msra.mxu0 0.0
        %2573 = vmatprep.subr.mxu0 0.0
        %2574 = vmatpush2.msra.mxu0 0.0
        %2575 = vmatprep.subr.mxu0 0.0
        %2576 = vmatpush2.msra.mxu0 0.0
        %2577 = vmatprep.subr.mxu0 0.0
        %2578 = vmatpush2.msra.mxu0 0.0
        %2579 = vmatprep.subr.mxu0 0.0
        %2580 = vmatpush2.msra.mxu0 0.0
        %2581 = vmatprep.subr.mxu0 0.0
        %2582 = vmatpush2.msra.mxu0 0.0
        %2583 = vmatprep.mubr.f32.mxu0 0.0
        %2584 = vmatmul.mubr.f32.gmra.mxu0 %v2514
        %v2585 = vpop.f32.mrf.mxu0
        %v2586 = vadd.f32 0.0, %v2585
        %v2587 = vpop.f32.mrf.mxu0
        %2588 = vmatprep.mubr.f32.mxu0 0.0
        %2589 = vmatmul.mubr.f32.gmra.mxu0 %v2517
        %v2590 = vpop.f32.mrf.mxu0
        %v2591 = vadd.f32 0.0, %v2590
        %v2592 = vpop.f32.mrf.mxu0
        %2593 = vdwg.mxu0
        %2594 = vrot.lane.b32.xlu0 %v2286, 112
        %v2595 = vpop.permute.xlu0 %2594
        %2596 = vrot.lane.b32.xlu0 %v2288, 112
        %v2597 = vpop.permute.xlu0 %2596
        %v2601 = vsel %vm416, %v2504, 0
        %v2604 = vsel %vm416, %v2506, 0
        %2606 = vmatprep.subr.mxu0 0.0
        %2607 = vmatpush1.msra.mxu0 0.0
        %2608 = vmatprep.subr.mxu0 0.0
        %2609 = vmatpush1.msra.mxu0 0.0
        %2610 = vmatprep.subr.mxu0 0.0
        %2611 = vmatpush1.msra.mxu0 0.0
        %2612 = vmatprep.subr.mxu0 0.0
        %2613 = vmatpush1.msra.mxu0 0.0
        %2614 = vmatprep.subr.mxu0 0.0
        %2615 = vmatpush1.msra.mxu0 0.0
        %2616 = vmatprep.subr.mxu0 0.0
        %2617 = vmatpush1.msra.mxu0 0.0
        %2618 = vmatprep.subr.mxu0 0.0
        %2619 = vmatpush1.msra.mxu0 0.0
        %2620 = vmatprep.subr.mxu0 0.0
        %2621 = vmatpush1.msra.mxu0 0.0
        %2622 = vmatprep.subr.mxu0 0.0
        %2623 = vmatpush1.msra.mxu0 0.0
        %2624 = vmatprep.subr.mxu0 0.0
        %2625 = vmatpush1.msra.mxu0 0.0
        %2626 = vmatprep.subr.mxu0 0.0
        %2627 = vmatpush1.msra.mxu0 0.0
        %2628 = vmatprep.subr.mxu0 0.0
        %2629 = vmatpush1.msra.mxu0 0.0
        %2630 = vmatprep.subr.mxu0 0.0
        %2631 = vmatpush1.msra.mxu0 0.0
        %2632 = vmatprep.subr.mxu0 0.0
        %2633 = vmatpush1.msra.mxu0 0.0
        %2634 = vmatprep.subr.mxu0 0.0
        %2635 = vmatpush1.msra.mxu0 %v2597
        %2636 = vmatprep.subr.mxu0 0.0
        %2637 = vmatpush1.msra.mxu0 %v2595
        %2638 = vmatprep.subr.mxu0 0.0
        %2639 = vmatpush2.msra.mxu0 0.0
        %2640 = vmatprep.subr.mxu0 0.0
        %2641 = vmatpush2.msra.mxu0 0.0
        %2642 = vmatprep.subr.mxu0 0.0
        %2643 = vmatpush2.msra.mxu0 0.0
        %2644 = vmatprep.subr.mxu0 0.0
        %2645 = vmatpush2.msra.mxu0 0.0
        %2646 = vmatprep.subr.mxu0 0.0
        %2647 = vmatpush2.msra.mxu0 0.0
        %2648 = vmatprep.subr.mxu0 0.0
        %2649 = vmatpush2.msra.mxu0 0.0
        %2650 = vmatprep.subr.mxu0 0.0
        %2651 = vmatpush2.msra.mxu0 0.0
        %2652 = vmatprep.subr.mxu0 0.0
        %2653 = vmatpush2.msra.mxu0 0.0
        %2654 = vmatprep.subr.mxu0 0.0
        %2655 = vmatpush2.msra.mxu0 0.0
        %2656 = vmatprep.subr.mxu0 0.0
        %2657 = vmatpush2.msra.mxu0 0.0
        %2658 = vmatprep.subr.mxu0 0.0
        %2659 = vmatpush2.msra.mxu0 0.0
        %2660 = vmatprep.subr.mxu0 0.0
        %2661 = vmatpush2.msra.mxu0 0.0
        %2662 = vmatprep.subr.mxu0 0.0
        %2663 = vmatpush2.msra.mxu0 0.0
        %2664 = vmatprep.subr.mxu0 0.0
        %2665 = vmatpush2.msra.mxu0 0.0
        %2666 = vmatprep.subr.mxu0 0.0
        %2667 = vmatpush2.msra.mxu0 0.0
        %2668 = vmatprep.subr.mxu0 0.0
        %2669 = vmatpush2.msra.mxu0 0.0
        %2670 = vmatprep.mubr.f32.mxu0 0.0
        %2671 = vmatmul.mubr.f32.gmra.mxu0 %v2601
        %v2672 = vpop.f32.mrf.mxu0
        %v2673 = vadd.f32 0.0, %v2672
        %v2674 = vpop.f32.mrf.mxu0
        %2675 = vmatprep.mubr.f32.mxu0 0.0
        %2676 = vmatmul.mubr.f32.gmra.mxu0 %v2604
        %v2677 = vpop.f32.mrf.mxu0
        %v2678 = vadd.f32 0.0, %v2677
        %v2679 = vpop.f32.mrf.mxu0
        %2680 = vdwg.mxu0
        %s2681 = scalar_lea.vmem %s6, 16
        %v2682 = vld [vmem:[%s2681] sm:$0xf]
        %v2684 = vsel %vm606, %v2586, 0
        %v2687 = vsel %vm606, %v2591, 0
        %v2690 = vsel %vm1004, %v2682, 0
        %2692 = vmatprep.subr.mxu0 0.0
        %2693 = vmatpush1.msra.mxu0 0.0
        %2694 = vmatprep.subr.mxu0 0.0
        %2695 = vmatpush1.msra.mxu0 0.0
        %2696 = vmatprep.subr.mxu0 0.0
        %2697 = vmatpush1.msra.mxu0 0.0
        %2698 = vmatprep.subr.mxu0 0.0
        %2699 = vmatpush1.msra.mxu0 0.0
        %2700 = vmatprep.subr.mxu0 0.0
        %2701 = vmatpush1.msra.mxu0 0.0
        %2702 = vmatprep.subr.mxu0 0.0
        %2703 = vmatpush1.msra.mxu0 0.0
        %2704 = vmatprep.subr.mxu0 0.0
        %2705 = vmatpush1.msra.mxu0 0.0
        %2706 = vmatprep.subr.mxu0 0.0
        %2707 = vmatpush1.msra.mxu0 0.0
        %2708 = vmatprep.subr.mxu0 0.0
        %2709 = vmatpush1.msra.mxu0 0.0
        %2710 = vmatprep.subr.mxu0 0.0
        %2711 = vmatpush1.msra.mxu0 0.0
        %2712 = vmatprep.subr.mxu0 0.0
        %2713 = vmatpush1.msra.mxu0 0.0
        %2714 = vmatprep.subr.mxu0 0.0
        %2715 = vmatpush1.msra.mxu0 0.0
        %2716 = vmatprep.subr.mxu0 0.0
        %2717 = vmatpush1.msra.mxu0 0.0
        %2718 = vmatprep.subr.mxu0 0.0
        %2719 = vmatpush1.msra.mxu0 0.0
        %2720 = vmatprep.subr.mxu0 0.0
        %2721 = vmatpush1.msra.mxu0 0.0
        %2722 = vmatprep.subr.mxu0 0.0
        %2723 = vmatpush1.msra.mxu0 %v2690
        %2724 = vmatprep.subr.mxu0 0.0
        %2725 = vmatpush2.msra.mxu0 0.0
        %2726 = vmatprep.subr.mxu0 0.0
        %2727 = vmatpush2.msra.mxu0 0.0
        %2728 = vmatprep.subr.mxu0 0.0
        %2729 = vmatpush2.msra.mxu0 0.0
        %2730 = vmatprep.subr.mxu0 0.0
        %2731 = vmatpush2.msra.mxu0 0.0
        %2732 = vmatprep.subr.mxu0 0.0
        %2733 = vmatpush2.msra.mxu0 0.0
        %2734 = vmatprep.subr.mxu0 0.0
        %2735 = vmatpush2.msra.mxu0 0.0
        %2736 = vmatprep.subr.mxu0 0.0
        %2737 = vmatpush2.msra.mxu0 0.0
        %2738 = vmatprep.subr.mxu0 0.0
        %2739 = vmatpush2.msra.mxu0 0.0
        %2740 = vmatprep.subr.mxu0 0.0
        %2741 = vmatpush2.msra.mxu0 0.0
        %2742 = vmatprep.subr.mxu0 0.0
        %2743 = vmatpush2.msra.mxu0 0.0
        %2744 = vmatprep.subr.mxu0 0.0
        %2745 = vmatpush2.msra.mxu0 0.0
        %2746 = vmatprep.subr.mxu0 0.0
        %2747 = vmatpush2.msra.mxu0 0.0
        %2748 = vmatprep.subr.mxu0 0.0
        %2749 = vmatpush2.msra.mxu0 0.0
        %2750 = vmatprep.subr.mxu0 0.0
        %2751 = vmatpush2.msra.mxu0 0.0
        %2752 = vmatprep.subr.mxu0 0.0
        %2753 = vmatpush2.msra.mxu0 0.0
        %2754 = vmatprep.subr.mxu0 0.0
        %2755 = vmatpush2.msra.mxu0 0.0
        %2756 = vmatprep.mubr.f32.mxu0 0.0
        %2757 = vmatmul.mubr.f32.gmra.mxu0 %v2684
        %v2758 = vpop.f32.mrf.mxu0
        %v2759 = vadd.f32 0.0, %v2758
        %v2760 = vpop.f32.mrf.mxu0
        %2761 = vmatprep.mubr.f32.mxu0 0.0
        %2762 = vmatmul.mubr.f32.gmra.mxu0 %v2687
        %v2763 = vpop.f32.mrf.mxu0
        %v2764 = vadd.f32 0.0, %v2763
        %v2765 = vpop.f32.mrf.mxu0
        %2766 = vdwg.mxu0
        %v2767 = vadd.f32 %v2010, %v2759
        %v2768 = vadd.f32 %v2011, %v2764
        %s2769 = scalar_lea.vmem %s6, 20
        %v2770 = vld [vmem:[%s2769] sm:$0xf]
        %v2772 = vsel %vm606, %v2673, 0
        %v2775 = vsel %vm606, %v2678, 0
        %v2778 = vsel %vm1004, %v2770, 0
        %2780 = vmatprep.subr.mxu0 0.0
        %2781 = vmatpush1.msra.mxu0 0.0
        %2782 = vmatprep.subr.mxu0 0.0
        %2783 = vmatpush1.msra.mxu0 0.0
        %2784 = vmatprep.subr.mxu0 0.0
        %2785 = vmatpush1.msra.mxu0 0.0
        %2786 = vmatprep.subr.mxu0 0.0
        %2787 = vmatpush1.msra.mxu0 0.0
        %2788 = vmatprep.subr.mxu0 0.0
        %2789 = vmatpush1.msra.mxu0 0.0
        %2790 = vmatprep.subr.mxu0 0.0
        %2791 = vmatpush1.msra.mxu0 0.0
        %2792 = vmatprep.subr.mxu0 0.0
        %2793 = vmatpush1.msra.mxu0 0.0
        %2794 = vmatprep.subr.mxu0 0.0
        %2795 = vmatpush1.msra.mxu0 0.0
        %2796 = vmatprep.subr.mxu0 0.0
        %2797 = vmatpush1.msra.mxu0 0.0
        %2798 = vmatprep.subr.mxu0 0.0
        %2799 = vmatpush1.msra.mxu0 0.0
        %2800 = vmatprep.subr.mxu0 0.0
        %2801 = vmatpush1.msra.mxu0 0.0
        %2802 = vmatprep.subr.mxu0 0.0
        %2803 = vmatpush1.msra.mxu0 0.0
        %2804 = vmatprep.subr.mxu0 0.0
        %2805 = vmatpush1.msra.mxu0 0.0
        %2806 = vmatprep.subr.mxu0 0.0
        %2807 = vmatpush1.msra.mxu0 0.0
        %2808 = vmatprep.subr.mxu0 0.0
        %2809 = vmatpush1.msra.mxu0 0.0
        %2810 = vmatprep.subr.mxu0 0.0
        %2811 = vmatpush1.msra.mxu0 %v2778
        %2812 = vmatprep.subr.mxu0 0.0
        %2813 = vmatpush2.msra.mxu0 0.0
        %2814 = vmatprep.subr.mxu0 0.0
        %2815 = vmatpush2.msra.mxu0 0.0
        %2816 = vmatprep.subr.mxu0 0.0
        %2817 = vmatpush2.msra.mxu0 0.0
        %2818 = vmatprep.subr.mxu0 0.0
        %2819 = vmatpush2.msra.mxu0 0.0
        %2820 = vmatprep.subr.mxu0 0.0
        %2821 = vmatpush2.msra.mxu0 0.0
        %2822 = vmatprep.subr.mxu0 0.0
        %2823 = vmatpush2.msra.mxu0 0.0
        %2824 = vmatprep.subr.mxu0 0.0
        %2825 = vmatpush2.msra.mxu0 0.0
        %2826 = vmatprep.subr.mxu0 0.0
        %2827 = vmatpush2.msra.mxu0 0.0
        %2828 = vmatprep.subr.mxu0 0.0
        %2829 = vmatpush2.msra.mxu0 0.0
        %2830 = vmatprep.subr.mxu0 0.0
        %2831 = vmatpush2.msra.mxu0 0.0
        %2832 = vmatprep.subr.mxu0 0.0
        %2833 = vmatpush2.msra.mxu0 0.0
        %2834 = vmatprep.subr.mxu0 0.0
        %2835 = vmatpush2.msra.mxu0 0.0
        %2836 = vmatprep.subr.mxu0 0.0
        %2837 = vmatpush2.msra.mxu0 0.0
        %2838 = vmatprep.subr.mxu0 0.0
        %2839 = vmatpush2.msra.mxu0 0.0
        %2840 = vmatprep.subr.mxu0 0.0
        %2841 = vmatpush2.msra.mxu0 0.0
        %2842 = vmatprep.subr.mxu0 0.0
        %2843 = vmatpush2.msra.mxu0 0.0
        %2844 = vmatprep.mubr.f32.mxu0 0.0
        %2845 = vmatmul.mubr.f32.gmra.mxu0 %v2772
        %v2846 = vpop.f32.mrf.mxu0
        %v2847 = vadd.f32 0.0, %v2846
        %v2848 = vpop.f32.mrf.mxu0
        %2849 = vmatprep.mubr.f32.mxu0 0.0
        %2850 = vmatmul.mubr.f32.gmra.mxu0 %v2775
        %v2851 = vpop.f32.mrf.mxu0
        %v2852 = vadd.f32 0.0, %v2851
        %v2853 = vpop.f32.mrf.mxu0
        %2854 = vdwg.mxu0
        %v2855 = vadd.f32 %v2767, %v2847
        %v2856 = vadd.f32 %v2768, %v2852
        %s2857 = scalar_lea.vmem %s2, 96
        %v2858 = vld [vmem:[%s2857] sm:$0xff]
        %v2859 = vld [vmem:[%s2857 + $0x8] sm:$0xff]
        %v2860 = vld [vmem:[%s2857 + $0x10] sm:$0xff]
        %v2861 = vld [vmem:[%s2857 + $0x18] sm:$0xff]
        %s2862 = scalar_lea.vmem %s3, 3
        %v2863 = vld [vmem:[%s2862] sm:$0x1]
        %v2865 = vlaneseq
        %v2866 = vshrl.u32 %v2865, 7
        %v2867 = vsub.s32 0, %v2866
        %v2868 = vrot.slane %v2863, %v2867
        %2870 = vmatprep.subr.mxu0 0.0
        %2871 = vmatpush1.msra.mxu0 0.0
        %2872 = vmatprep.subr.mxu0 0.0
        %2873 = vmatpush1.msra.mxu0 0.0
        %2874 = vmatprep.subr.mxu0 0.0
        %2875 = vmatpush1.msra.mxu0 0.0
        %2876 = vmatprep.subr.mxu0 0.0
        %2877 = vmatpush1.msra.mxu0 0.0
        %2878 = vmatprep.subr.mxu0 0.0
        %2879 = vmatpush1.msra.mxu0 0.0
        %2880 = vmatprep.subr.mxu0 0.0
        %2881 = vmatpush1.msra.mxu0 0.0
        %2882 = vmatprep.subr.mxu0 0.0
        %2883 = vmatpush1.msra.mxu0 0.0
        %2884 = vmatprep.subr.mxu0 0.0
        %2885 = vmatpush1.msra.mxu0 0.0
        %2886 = vmatprep.subr.mxu0 0.0
        %2887 = vmatpush1.msra.mxu0 0.0
        %2888 = vmatprep.subr.mxu0 0.0
        %2889 = vmatpush1.msra.mxu0 0.0
        %2890 = vmatprep.subr.mxu0 0.0
        %2891 = vmatpush1.msra.mxu0 0.0
        %2892 = vmatprep.subr.mxu0 0.0
        %2893 = vmatpush1.msra.mxu0 0.0
        %2894 = vmatprep.subr.mxu0 0.0
        %2895 = vmatpush1.msra.mxu0 %v2861
        %2896 = vmatprep.subr.mxu0 0.0
        %2897 = vmatpush1.msra.mxu0 %v2860
        %2898 = vmatprep.subr.mxu0 0.0
        %2899 = vmatpush1.msra.mxu0 %v2859
        %2900 = vmatprep.subr.mxu0 0.0
        %2901 = vmatpush1.msra.mxu0 %v2858
        %2902 = vmatprep.subr.mxu0 0.0
        %2903 = vmatpush2.msra.mxu0 0.0
        %2904 = vmatprep.subr.mxu0 0.0
        %2905 = vmatpush2.msra.mxu0 0.0
        %2906 = vmatprep.subr.mxu0 0.0
        %2907 = vmatpush2.msra.mxu0 0.0
        %2908 = vmatprep.subr.mxu0 0.0
        %2909 = vmatpush2.msra.mxu0 0.0
        %2910 = vmatprep.subr.mxu0 0.0
        %2911 = vmatpush2.msra.mxu0 0.0
        %2912 = vmatprep.subr.mxu0 0.0
        %2913 = vmatpush2.msra.mxu0 0.0
        %2914 = vmatprep.subr.mxu0 0.0
        %2915 = vmatpush2.msra.mxu0 0.0
        %2916 = vmatprep.subr.mxu0 0.0
        %2917 = vmatpush2.msra.mxu0 0.0
        %2918 = vmatprep.subr.mxu0 0.0
        %2919 = vmatpush2.msra.mxu0 0.0
        %2920 = vmatprep.subr.mxu0 0.0
        %2921 = vmatpush2.msra.mxu0 0.0
        %2922 = vmatprep.subr.mxu0 0.0
        %2923 = vmatpush2.msra.mxu0 0.0
        %2924 = vmatprep.subr.mxu0 0.0
        %2925 = vmatpush2.msra.mxu0 0.0
        %2926 = vmatprep.subr.mxu0 0.0
        %2927 = vmatpush2.msra.mxu0 0.0
        %2928 = vmatprep.subr.mxu0 0.0
        %2929 = vmatpush2.msra.mxu0 0.0
        %2930 = vmatprep.subr.mxu0 0.0
        %2931 = vmatpush2.msra.mxu0 0.0
        %2932 = vmatprep.subr.mxu0 0.0
        %2933 = vmatpush2.msra.mxu0 0.0
        %2934 = vmatprep.mubr.f32.mxu0 0.0
        %2935 = vmatmul.mubr.f32.gmra.mxu0 %v334
        %v2936 = vpop.f32.mrf.mxu0
        %v2937 = vadd.f32 %v2868, %v2936
        %v2938 = vpop.f32.mrf.mxu0
        %2939 = vmatprep.mubr.f32.mxu0 0.0
        %2940 = vmatmul.mubr.f32.gmra.mxu0 %v337
        %v2941 = vpop.f32.mrf.mxu0
        %v2942 = vadd.f32 %v2868, %v2941
        %v2943 = vpop.f32.mrf.mxu0
        %2944 = vdwg.mxu0
        %s2945 = scalar_lea.vmem %s1, 48
        %v2946 = vld [vmem:[%s2945] sm:$0xff]
        %v2947 = vld [vmem:[%s2945 + $0x8] sm:$0xff]
        %v2949 = vsel %vm416, %v2946, 0
        %v2952 = vsel %vm416, %v2947, 0
        %2954 = vmatprep.subr.mxu0 0.0
        %2955 = vmatpush1.msra.mxu0 0.0
        %2956 = vmatprep.subr.mxu0 0.0
        %2957 = vmatpush1.msra.mxu0 0.0
        %2958 = vmatprep.subr.mxu0 0.0
        %2959 = vmatpush1.msra.mxu0 0.0
        %2960 = vmatprep.subr.mxu0 0.0
        %2961 = vmatpush1.msra.mxu0 0.0
        %2962 = vmatprep.subr.mxu0 0.0
        %2963 = vmatpush1.msra.mxu0 0.0
        %2964 = vmatprep.subr.mxu0 0.0
        %2965 = vmatpush1.msra.mxu0 0.0
        %2966 = vmatprep.subr.mxu0 0.0
        %2967 = vmatpush1.msra.mxu0 0.0
        %2968 = vmatprep.subr.mxu0 0.0
        %2969 = vmatpush1.msra.mxu0 0.0
        %2970 = vmatprep.subr.mxu0 0.0
        %2971 = vmatpush1.msra.mxu0 0.0
        %2972 = vmatprep.subr.mxu0 0.0
        %2973 = vmatpush1.msra.mxu0 0.0
        %2974 = vmatprep.subr.mxu0 0.0
        %2975 = vmatpush1.msra.mxu0 0.0
        %2976 = vmatprep.subr.mxu0 0.0
        %2977 = vmatpush1.msra.mxu0 0.0
        %2978 = vmatprep.subr.mxu0 0.0
        %2979 = vmatpush1.msra.mxu0 0.0
        %2980 = vmatprep.subr.mxu0 0.0
        %2981 = vmatpush1.msra.mxu0 0.0
        %2982 = vmatprep.subr.mxu0 0.0
        %2983 = vmatpush1.msra.mxu0 %v2942
        %2984 = vmatprep.subr.mxu0 0.0
        %2985 = vmatpush1.msra.mxu0 %v2937
        %2986 = vmatprep.subr.mxu0 0.0
        %2987 = vmatpush2.msra.mxu0 0.0
        %2988 = vmatprep.subr.mxu0 0.0
        %2989 = vmatpush2.msra.mxu0 0.0
        %2990 = vmatprep.subr.mxu0 0.0
        %2991 = vmatpush2.msra.mxu0 0.0
        %2992 = vmatprep.subr.mxu0 0.0
        %2993 = vmatpush2.msra.mxu0 0.0
        %2994 = vmatprep.subr.mxu0 0.0
        %2995 = vmatpush2.msra.mxu0 0.0
        %2996 = vmatprep.subr.mxu0 0.0
        %2997 = vmatpush2.msra.mxu0 0.0
        %2998 = vmatprep.subr.mxu0 0.0
        %2999 = vmatpush2.msra.mxu0 0.0
        %3000 = vmatprep.subr.mxu0 0.0
        %3001 = vmatpush2.msra.mxu0 0.0
        %3002 = vmatprep.subr.mxu0 0.0
        %3003 = vmatpush2.msra.mxu0 0.0
        %3004 = vmatprep.subr.mxu0 0.0
        %3005 = vmatpush2.msra.mxu0 0.0
        %3006 = vmatprep.subr.mxu0 0.0
        %3007 = vmatpush2.msra.mxu0 0.0
        %3008 = vmatprep.subr.mxu0 0.0
        %3009 = vmatpush2.msra.mxu0 0.0
        %3010 = vmatprep.subr.mxu0 0.0
        %3011 = vmatpush2.msra.mxu0 0.0
        %3012 = vmatprep.subr.mxu0 0.0
        %3013 = vmatpush2.msra.mxu0 0.0
        %3014 = vmatprep.subr.mxu0 0.0
        %3015 = vmatpush2.msra.mxu0 0.0
        %3016 = vmatprep.subr.mxu0 0.0
        %3017 = vmatpush2.msra.mxu0 0.0
        %3018 = vmatprep.mubr.f32.mxu0 0.0
        %3019 = vmatmul.mubr.f32.gmra.mxu0 %v2949
        %v3020 = vpop.f32.mrf.mxu0
        %v3021 = vadd.f32 0.0, %v3020
        %v3022 = vpop.f32.mrf.mxu0
        %3023 = vmatprep.mubr.f32.mxu0 0.0
        %3024 = vmatmul.mubr.f32.gmra.mxu0 %v2952
        %v3025 = vpop.f32.mrf.mxu0
        %v3026 = vadd.f32 0.0, %v3025
        %v3027 = vpop.f32.mrf.mxu0
        %3028 = vdwg.mxu0
        %s3029 = scalar_lea.vmem %s4, 24
        %v3030 = vld [vmem:[%s3029] sm:$0xff]
        %s3031 = scalar_lea.vmem [#allocation2], 3
        %v3032 = vld [vmem:[%s3031] sm:$0x1]
        %v3034 = vlaneseq
        %v3035 = vshrl.u32 %v3034, 7
        %v3036 = vsub.s32 0, %v3035
        %v3037 = vrot.slane %v3032, %v3036
        %v3040 = vsel %vm506, %v3021, 0
        %v3043 = vsel %vm506, %v3026, 0
        %3045 = vmatprep.subr.mxu0 0.0
        %3046 = vmatpush1.msra.mxu0 0.0
        %3047 = vmatprep.subr.mxu0 0.0
        %3048 = vmatpush1.msra.mxu0 0.0
        %3049 = vmatprep.subr.mxu0 0.0
        %3050 = vmatpush1.msra.mxu0 0.0
        %3051 = vmatprep.subr.mxu0 0.0
        %3052 = vmatpush1.msra.mxu0 0.0
        %3053 = vmatprep.subr.mxu0 0.0
        %3054 = vmatpush1.msra.mxu0 0.0
        %3055 = vmatprep.subr.mxu0 0.0
        %3056 = vmatpush1.msra.mxu0 0.0
        %3057 = vmatprep.subr.mxu0 0.0
        %3058 = vmatpush1.msra.mxu0 0.0
        %3059 = vmatprep.subr.mxu0 0.0
        %3060 = vmatpush1.msra.mxu0 0.0
        %3061 = vmatprep.subr.mxu0 0.0
        %3062 = vmatpush1.msra.mxu0 0.0
        %3063 = vmatprep.subr.mxu0 0.0
        %3064 = vmatpush1.msra.mxu0 0.0
        %3065 = vmatprep.subr.mxu0 0.0
        %3066 = vmatpush1.msra.mxu0 0.0
        %3067 = vmatprep.subr.mxu0 0.0
        %3068 = vmatpush1.msra.mxu0 0.0
        %3069 = vmatprep.subr.mxu0 0.0
        %3070 = vmatpush1.msra.mxu0 0.0
        %3071 = vmatprep.subr.mxu0 0.0
        %3072 = vmatpush1.msra.mxu0 0.0
        %3073 = vmatprep.subr.mxu0 0.0
        %3074 = vmatpush1.msra.mxu0 0.0
        %3075 = vmatprep.subr.mxu0 0.0
        %3076 = vmatpush1.msra.mxu0 %v3030
        %3077 = vmatprep.subr.mxu0 0.0
        %3078 = vmatpush2.msra.mxu0 0.0
        %3079 = vmatprep.subr.mxu0 0.0
        %3080 = vmatpush2.msra.mxu0 0.0
        %3081 = vmatprep.subr.mxu0 0.0
        %3082 = vmatpush2.msra.mxu0 0.0
        %3083 = vmatprep.subr.mxu0 0.0
        %3084 = vmatpush2.msra.mxu0 0.0
        %3085 = vmatprep.subr.mxu0 0.0
        %3086 = vmatpush2.msra.mxu0 0.0
        %3087 = vmatprep.subr.mxu0 0.0
        %3088 = vmatpush2.msra.mxu0 0.0
        %3089 = vmatprep.subr.mxu0 0.0
        %3090 = vmatpush2.msra.mxu0 0.0
        %3091 = vmatprep.subr.mxu0 0.0
        %3092 = vmatpush2.msra.mxu0 0.0
        %3093 = vmatprep.subr.mxu0 0.0
        %3094 = vmatpush2.msra.mxu0 0.0
        %3095 = vmatprep.subr.mxu0 0.0
        %3096 = vmatpush2.msra.mxu0 0.0
        %3097 = vmatprep.subr.mxu0 0.0
        %3098 = vmatpush2.msra.mxu0 0.0
        %3099 = vmatprep.subr.mxu0 0.0
        %3100 = vmatpush2.msra.mxu0 0.0
        %3101 = vmatprep.subr.mxu0 0.0
        %3102 = vmatpush2.msra.mxu0 0.0
        %3103 = vmatprep.subr.mxu0 0.0
        %3104 = vmatpush2.msra.mxu0 0.0
        %3105 = vmatprep.subr.mxu0 0.0
        %3106 = vmatpush2.msra.mxu0 0.0
        %3107 = vmatprep.subr.mxu0 0.0
        %3108 = vmatpush2.msra.mxu0 0.0
        %3109 = vmatprep.mubr.f32.mxu0 0.0
        %3110 = vmatmul.mubr.f32.gmra.mxu0 %v3040
        %v3111 = vpop.f32.mrf.mxu0
        %v3112 = vadd.f32 %v3037, %v3111
        %v3113 = vpop.f32.mrf.mxu0
        %3114 = vmatprep.mubr.f32.mxu0 0.0
        %3115 = vmatmul.mubr.f32.gmra.mxu0 %v3043
        %v3116 = vpop.f32.mrf.mxu0
        %v3117 = vadd.f32 %v3037, %v3116
        %v3118 = vpop.f32.mrf.mxu0
        %3119 = vdwg.mxu0
        %v3120 = vmul.f32 %v3112, 0.35355338
        %v3121 = vmul.f32 %v3117, 0.35355338
        %3124 = vrot.lane.b32.xlu0 %v3120, 124
        %v3125 = vpop.permute.xlu0 %3124
        %3126 = vrot.lane.b32.xlu0 %v3121, 124
        %v3127 = vpop.permute.xlu0 %3126
        %3130 = vrot.lane.b32.xlu0 %v3112, 124
        %v3131 = vpop.permute.xlu0 %3130
        %3132 = vrot.lane.b32.xlu0 %v3117, 124
        %v3133 = vpop.permute.xlu0 %3132
        %3134 = vrot.lane.b32.xlu0 %v3112, 120
        %v3135 = vpop.permute.xlu0 %3134
        %3136 = vrot.lane.b32.xlu0 %v3117, 120
        %v3137 = vpop.permute.xlu0 %3136
        %v3138 = vsel %vm606, %v3120, 0
        %v3140 = vsel %vm606, %v3121, 0
        %v3142 = vsel %vm606, %v3135, 0
        %v3144 = vsel %vm606, %v3137, 0
        %3146 = vmatprep.subr.mxu0 0.0
        %3147 = vmatpush1.xpose.msra.mxu0 0.0
        %3148 = vmatprep.subr.mxu0 0.0
        %3149 = vmatpush1.xpose.msra.mxu0 0.0
        %3150 = vmatprep.subr.mxu0 0.0
        %3151 = vmatpush1.xpose.msra.mxu0 0.0
        %3152 = vmatprep.subr.mxu0 0.0
        %3153 = vmatpush1.xpose.msra.mxu0 0.0
        %3154 = vmatprep.subr.mxu0 0.0
        %3155 = vmatpush1.xpose.msra.mxu0 0.0
        %3156 = vmatprep.subr.mxu0 0.0
        %3157 = vmatpush1.xpose.msra.mxu0 0.0
        %3158 = vmatprep.subr.mxu0 0.0
        %3159 = vmatpush1.xpose.msra.mxu0 0.0
        %3160 = vmatprep.subr.mxu0 0.0
        %3161 = vmatpush1.xpose.msra.mxu0 0.0
        %3162 = vmatprep.subr.mxu0 0.0
        %3163 = vmatpush1.xpose.msra.mxu0 0.0
        %3164 = vmatprep.subr.mxu0 0.0
        %3165 = vmatpush1.xpose.msra.mxu0 0.0
        %3166 = vmatprep.subr.mxu0 0.0
        %3167 = vmatpush1.xpose.msra.mxu0 0.0
        %3168 = vmatprep.subr.mxu0 0.0
        %3169 = vmatpush1.xpose.msra.mxu0 0.0
        %3170 = vmatprep.subr.mxu0 0.0
        %3171 = vmatpush1.xpose.msra.mxu0 0.0
        %3172 = vmatprep.subr.mxu0 0.0
        %3173 = vmatpush1.xpose.msra.mxu0 0.0
        %3174 = vmatprep.subr.mxu0 0.0
        %3175 = vmatpush1.xpose.msra.mxu0 %v3144
        %3176 = vmatprep.subr.mxu0 0.0
        %3177 = vmatpush1.xpose.msra.mxu0 %v3142
        %3178 = vmatprep.subr.mxu0 0.0
        %3179 = vmatpush2.xpose.msra.mxu0 0.0
        %3180 = vmatprep.subr.mxu0 0.0
        %3181 = vmatpush2.xpose.msra.mxu0 0.0
        %3182 = vmatprep.subr.mxu0 0.0
        %3183 = vmatpush2.xpose.msra.mxu0 0.0
        %3184 = vmatprep.subr.mxu0 0.0
        %3185 = vmatpush2.xpose.msra.mxu0 0.0
        %3186 = vmatprep.subr.mxu0 0.0
        %3187 = vmatpush2.xpose.msra.mxu0 0.0
        %3188 = vmatprep.subr.mxu0 0.0
        %3189 = vmatpush2.xpose.msra.mxu0 0.0
        %3190 = vmatprep.subr.mxu0 0.0
        %3191 = vmatpush2.xpose.msra.mxu0 0.0
        %3192 = vmatprep.subr.mxu0 0.0
        %3193 = vmatpush2.xpose.msra.mxu0 0.0
        %3194 = vmatprep.subr.mxu0 0.0
        %3195 = vmatpush2.xpose.msra.mxu0 0.0
        %3196 = vmatprep.subr.mxu0 0.0
        %3197 = vmatpush2.xpose.msra.mxu0 0.0
        %3198 = vmatprep.subr.mxu0 0.0
        %3199 = vmatpush2.xpose.msra.mxu0 0.0
        %3200 = vmatprep.subr.mxu0 0.0
        %3201 = vmatpush2.xpose.msra.mxu0 0.0
        %3202 = vmatprep.subr.mxu0 0.0
        %3203 = vmatpush2.xpose.msra.mxu0 0.0
        %3204 = vmatprep.subr.mxu0 0.0
        %3205 = vmatpush2.xpose.msra.mxu0 0.0
        %3206 = vmatprep.subr.mxu0 0.0
        %3207 = vmatpush2.xpose.msra.mxu0 0.0
        %3208 = vmatprep.subr.mxu0 0.0
        %3209 = vmatpush2.xpose.msra.mxu0 0.0
        %3210 = vmatprep.mubr.f32.mxu0 0.0
        %3211 = vmatmul.mubr.f32.gmra.mxu0 %v3138
        %v3212 = vpop.f32.mrf.mxu0
        %v3213 = vadd.f32 0.0, %v3212
        %v3214 = vpop.f32.mrf.mxu0
        %3215 = vmatprep.mubr.f32.mxu0 0.0
        %3216 = vmatmul.mubr.f32.gmra.mxu0 %v3140
        %v3217 = vpop.f32.mrf.mxu0
        %v3218 = vadd.f32 0.0, %v3217
        %v3219 = vpop.f32.mrf.mxu0
        %3220 = vdwg.mxu0
        %3221 = vrot.lane.b32.xlu0 %v3131, 120
        %v3222 = vpop.permute.xlu0 %3221
        %3223 = vrot.lane.b32.xlu0 %v3133, 120
        %v3224 = vpop.permute.xlu0 %3223
        %v3225 = vsel %vm606, %v3125, 0
        %v3227 = vsel %vm606, %v3127, 0
        %v3229 = vsel %vm606, %v3222, 0
        %v3231 = vsel %vm606, %v3224, 0
        %3233 = vmatprep.subr.mxu0 0.0
        %3234 = vmatpush1.xpose.msra.mxu0 0.0
        %3235 = vmatprep.subr.mxu0 0.0
        %3236 = vmatpush1.xpose.msra.mxu0 0.0
        %3237 = vmatprep.subr.mxu0 0.0
        %3238 = vmatpush1.xpose.msra.mxu0 0.0
        %3239 = vmatprep.subr.mxu0 0.0
        %3240 = vmatpush1.xpose.msra.mxu0 0.0
        %3241 = vmatprep.subr.mxu0 0.0
        %3242 = vmatpush1.xpose.msra.mxu0 0.0
        %3243 = vmatprep.subr.mxu0 0.0
        %3244 = vmatpush1.xpose.msra.mxu0 0.0
        %3245 = vmatprep.subr.mxu0 0.0
        %3246 = vmatpush1.xpose.msra.mxu0 0.0
        %3247 = vmatprep.subr.mxu0 0.0
        %3248 = vmatpush1.xpose.msra.mxu0 0.0
        %3249 = vmatprep.subr.mxu0 0.0
        %3250 = vmatpush1.xpose.msra.mxu0 0.0
        %3251 = vmatprep.subr.mxu0 0.0
        %3252 = vmatpush1.xpose.msra.mxu0 0.0
        %3253 = vmatprep.subr.mxu0 0.0
        %3254 = vmatpush1.xpose.msra.mxu0 0.0
        %3255 = vmatprep.subr.mxu0 0.0
        %3256 = vmatpush1.xpose.msra.mxu0 0.0
        %3257 = vmatprep.subr.mxu0 0.0
        %3258 = vmatpush1.xpose.msra.mxu0 0.0
        %3259 = vmatprep.subr.mxu0 0.0
        %3260 = vmatpush1.xpose.msra.mxu0 0.0
        %3261 = vmatprep.subr.mxu0 0.0
        %3262 = vmatpush1.xpose.msra.mxu0 %v3231
        %3263 = vmatprep.subr.mxu0 0.0
        %3264 = vmatpush1.xpose.msra.mxu0 %v3229
        %3265 = vmatprep.subr.mxu0 0.0
        %3266 = vmatpush2.xpose.msra.mxu0 0.0
        %3267 = vmatprep.subr.mxu0 0.0
        %3268 = vmatpush2.xpose.msra.mxu0 0.0
        %3269 = vmatprep.subr.mxu0 0.0
        %3270 = vmatpush2.xpose.msra.mxu0 0.0
        %3271 = vmatprep.subr.mxu0 0.0
        %3272 = vmatpush2.xpose.msra.mxu0 0.0
        %3273 = vmatprep.subr.mxu0 0.0
        %3274 = vmatpush2.xpose.msra.mxu0 0.0
        %3275 = vmatprep.subr.mxu0 0.0
        %3276 = vmatpush2.xpose.msra.mxu0 0.0
        %3277 = vmatprep.subr.mxu0 0.0
        %3278 = vmatpush2.xpose.msra.mxu0 0.0
        %3279 = vmatprep.subr.mxu0 0.0
        %3280 = vmatpush2.xpose.msra.mxu0 0.0
        %3281 = vmatprep.subr.mxu0 0.0
        %3282 = vmatpush2.xpose.msra.mxu0 0.0
        %3283 = vmatprep.subr.mxu0 0.0
        %3284 = vmatpush2.xpose.msra.mxu0 0.0
        %3285 = vmatprep.subr.mxu0 0.0
        %3286 = vmatpush2.xpose.msra.mxu0 0.0
        %3287 = vmatprep.subr.mxu0 0.0
        %3288 = vmatpush2.xpose.msra.mxu0 0.0
        %3289 = vmatprep.subr.mxu0 0.0
        %3290 = vmatpush2.xpose.msra.mxu0 0.0
        %3291 = vmatprep.subr.mxu0 0.0
        %3292 = vmatpush2.xpose.msra.mxu0 0.0
        %3293 = vmatprep.subr.mxu0 0.0
        %3294 = vmatpush2.xpose.msra.mxu0 0.0
        %3295 = vmatprep.subr.mxu0 0.0
        %3296 = vmatpush2.xpose.msra.mxu0 0.0
        %3297 = vmatprep.mubr.f32.mxu0 0.0
        %3298 = vmatmul.mubr.f32.gmra.mxu0 %v3225
        %v3299 = vpop.f32.mrf.mxu0
        %v3300 = vadd.f32 0.0, %v3299
        %v3301 = vpop.f32.mrf.mxu0
        %3302 = vmatprep.mubr.f32.mxu0 0.0
        %3303 = vmatmul.mubr.f32.gmra.mxu0 %v3227
        %v3304 = vpop.f32.mrf.mxu0
        %v3305 = vadd.f32 0.0, %v3304
        %v3306 = vpop.f32.mrf.mxu0
        %3307 = vdwg.mxu0
        %v3308 = vsel %vm416, %v3213, -inf
        %3309 = vmax.xlane.f32.xlu0 %v3308
        %v3310 = vpop.xlane.xlu0 %3309
        %v3311 = vsel %vm416, %v3218, -inf
        %3312 = vmax.xlane.f32.xlu0 %v3311
        %v3313 = vpop.xlane.xlu0 %3312
        %v3314 = vsel %vm416, %v3300, -inf
        %3315 = vmax.xlane.f32.xlu0 %v3314
        %v3316 = vpop.xlane.xlu0 %3315
        %v3317 = vsel %vm416, %v3305, -inf
        %3318 = vmax.xlane.f32.xlu0 %v3317
        %v3319 = vpop.xlane.xlu0 %3318
        %v3320 = vsub.f32 %v3213, %v3310
        %v3321 = vsub.f32 %v3218, %v3313
        %v3322 = vsub.f32 %v3300, %v3316
        %v3323 = vsub.f32 %v3305, %v3319
        %v3324 = vmul.f32 %v3320, 1.442695
        %v3325 = vpow.pop %v3324
        %v3326 = vmul.f32 %v3321, 1.442695
        %v3327 = vpow.pop %v3326
        %v3328 = vmul.f32 %v3322, 1.442695
        %v3329 = vpow.pop %v3328
        %v3330 = vmul.f32 %v3323, 1.442695
        %v3331 = vpow.pop %v3330
        %v3332 = vsel %vm416, %v3325, 0.0
        %3333 = vadd.xlane.f32.xlu0 %v3332
        %v3334 = vpop.xlane.xlu0 %3333
        %v3335 = vsel %vm416, %v3327, 0.0
        %3336 = vadd.xlane.f32.xlu0 %v3335
        %v3337 = vpop.xlane.xlu0 %3336
        %v3338 = vsel %vm416, %v3329, 0.0
        %3339 = vadd.xlane.f32.xlu0 %v3338
        %v3340 = vpop.xlane.xlu0 %3339
        %v3341 = vsel %vm416, %v3331, 0.0
        %3342 = vadd.xlane.f32.xlu0 %v3341
        %v3343 = vpop.xlane.xlu0 %3342
        %v3344 = vrcp.pop %v3334
        %v3345 = vmul.f32 %v3325, %v3344
        %v3346 = vrcp.pop %v3337
        %v3347 = vmul.f32 %v3327, %v3346
        %v3348 = vrcp.pop %v3340
        %v3349 = vmul.f32 %v3329, %v3348
        %v3350 = vrcp.pop %v3343
        %v3351 = vmul.f32 %v3331, %v3350
        %3352 = vrot.lane.b32.xlu0 %v3112, 112
        %v3353 = vpop.permute.xlu0 %3352
        %3354 = vrot.lane.b32.xlu0 %v3117, 112
        %v3355 = vpop.permute.xlu0 %3354
        %v3359 = vsel %vm416, %v3345, 0
        %v3362 = vsel %vm416, %v3347, 0
        %3364 = vmatprep.subr.mxu0 0.0
        %3365 = vmatpush1.msra.mxu0 0.0
        %3366 = vmatprep.subr.mxu0 0.0
        %3367 = vmatpush1.msra.mxu0 0.0
        %3368 = vmatprep.subr.mxu0 0.0
        %3369 = vmatpush1.msra.mxu0 0.0
        %3370 = vmatprep.subr.mxu0 0.0
        %3371 = vmatpush1.msra.mxu0 0.0
        %3372 = vmatprep.subr.mxu0 0.0
        %3373 = vmatpush1.msra.mxu0 0.0
        %3374 = vmatprep.subr.mxu0 0.0
        %3375 = vmatpush1.msra.mxu0 0.0
        %3376 = vmatprep.subr.mxu0 0.0
        %3377 = vmatpush1.msra.mxu0 0.0
        %3378 = vmatprep.subr.mxu0 0.0
        %3379 = vmatpush1.msra.mxu0 0.0
        %3380 = vmatprep.subr.mxu0 0.0
        %3381 = vmatpush1.msra.mxu0 0.0
        %3382 = vmatprep.subr.mxu0 0.0
        %3383 = vmatpush1.msra.mxu0 0.0
        %3384 = vmatprep.subr.mxu0 0.0
        %3385 = vmatpush1.msra.mxu0 0.0
        %3386 = vmatprep.subr.mxu0 0.0
        %3387 = vmatpush1.msra.mxu0 0.0
        %3388 = vmatprep.subr.mxu0 0.0
        %3389 = vmatpush1.msra.mxu0 0.0
        %3390 = vmatprep.subr.mxu0 0.0
        %3391 = vmatpush1.msra.mxu0 0.0
        %3392 = vmatprep.subr.mxu0 0.0
        %3393 = vmatpush1.msra.mxu0 %v3355
        %3394 = vmatprep.subr.mxu0 0.0
        %3395 = vmatpush1.msra.mxu0 %v3353
        %3396 = vmatprep.subr.mxu0 0.0
        %3397 = vmatpush2.msra.mxu0 0.0
        %3398 = vmatprep.subr.mxu0 0.0
        %3399 = vmatpush2.msra.mxu0 0.0
        %3400 = vmatprep.subr.mxu0 0.0
        %3401 = vmatpush2.msra.mxu0 0.0
        %3402 = vmatprep.subr.mxu0 0.0
        %3403 = vmatpush2.msra.mxu0 0.0
        %3404 = vmatprep.subr.mxu0 0.0
        %3405 = vmatpush2.msra.mxu0 0.0
        %3406 = vmatprep.subr.mxu0 0.0
        %3407 = vmatpush2.msra.mxu0 0.0
        %3408 = vmatprep.subr.mxu0 0.0
        %3409 = vmatpush2.msra.mxu0 0.0
        %3410 = vmatprep.subr.mxu0 0.0
        %3411 = vmatpush2.msra.mxu0 0.0
        %3412 = vmatprep.subr.mxu0 0.0
        %3413 = vmatpush2.msra.mxu0 0.0
        %3414 = vmatprep.subr.mxu0 0.0
        %3415 = vmatpush2.msra.mxu0 0.0
        %3416 = vmatprep.subr.mxu0 0.0
        %3417 = vmatpush2.msra.mxu0 0.0
        %3418 = vmatprep.subr.mxu0 0.0
        %3419 = vmatpush2.msra.mxu0 0.0
        %3420 = vmatprep.subr.mxu0 0.0
        %3421 = vmatpush2.msra.mxu0 0.0
        %3422 = vmatprep.subr.mxu0 0.0
        %3423 = vmatpush2.msra.mxu0 0.0
        %3424 = vmatprep.subr.mxu0 0.0
        %3425 = vmatpush2.msra.mxu0 0.0
        %3426 = vmatprep.subr.mxu0 0.0
        %3427 = vmatpush2.msra.mxu0 0.0
        %3428 = vmatprep.mubr.f32.mxu0 0.0
        %3429 = vmatmul.mubr.f32.gmra.mxu0 %v3359
        %v3430 = vpop.f32.mrf.mxu0
        %v3431 = vadd.f32 0.0, %v3430
        %v3432 = vpop.f32.mrf.mxu0
        %3433 = vmatprep.mubr.f32.mxu0 0.0
        %3434 = vmatmul.mubr.f32.gmra.mxu0 %v3362
        %v3435 = vpop.f32.mrf.mxu0
        %v3436 = vadd.f32 0.0, %v3435
        %v3437 = vpop.f32.mrf.mxu0
        %3438 = vdwg.mxu0
        %3439 = vrot.lane.b32.xlu0 %v3131, 112
        %v3440 = vpop.permute.xlu0 %3439
        %3441 = vrot.lane.b32.xlu0 %v3133, 112
        %v3442 = vpop.permute.xlu0 %3441
        %v3446 = vsel %vm416, %v3349, 0
        %v3449 = vsel %vm416, %v3351, 0
        %3451 = vmatprep.subr.mxu0 0.0
        %3452 = vmatpush1.msra.mxu0 0.0
        %3453 = vmatprep.subr.mxu0 0.0
        %3454 = vmatpush1.msra.mxu0 0.0
        %3455 = vmatprep.subr.mxu0 0.0
        %3456 = vmatpush1.msra.mxu0 0.0
        %3457 = vmatprep.subr.mxu0 0.0
        %3458 = vmatpush1.msra.mxu0 0.0
        %3459 = vmatprep.subr.mxu0 0.0
        %3460 = vmatpush1.msra.mxu0 0.0
        %3461 = vmatprep.subr.mxu0 0.0
        %3462 = vmatpush1.msra.mxu0 0.0
        %3463 = vmatprep.subr.mxu0 0.0
        %3464 = vmatpush1.msra.mxu0 0.0
        %3465 = vmatprep.subr.mxu0 0.0
        %3466 = vmatpush1.msra.mxu0 0.0
        %3467 = vmatprep.subr.mxu0 0.0
        %3468 = vmatpush1.msra.mxu0 0.0
        %3469 = vmatprep.subr.mxu0 0.0
        %3470 = vmatpush1.msra.mxu0 0.0
        %3471 = vmatprep.subr.mxu0 0.0
        %3472 = vmatpush1.msra.mxu0 0.0
        %3473 = vmatprep.subr.mxu0 0.0
        %3474 = vmatpush1.msra.mxu0 0.0
        %3475 = vmatprep.subr.mxu0 0.0
        %3476 = vmatpush1.msra.mxu0 0.0
        %3477 = vmatprep.subr.mxu0 0.0
        %3478 = vmatpush1.msra.mxu0 0.0
        %3479 = vmatprep.subr.mxu0 0.0
        %3480 = vmatpush1.msra.mxu0 %v3442
        %3481 = vmatprep.subr.mxu0 0.0
        %3482 = vmatpush1.msra.mxu0 %v3440
        %3483 = vmatprep.subr.mxu0 0.0
        %3484 = vmatpush2.msra.mxu0 0.0
        %3485 = vmatprep.subr.mxu0 0.0
        %3486 = vmatpush2.msra.mxu0 0.0
        %3487 = vmatprep.subr.mxu0 0.0
        %3488 = vmatpush2.msra.mxu0 0.0
        %3489 = vmatprep.subr.mxu0 0.0
        %3490 = vmatpush2.msra.mxu0 0.0
        %3491 = vmatprep.subr.mxu0 0.0
        %3492 = vmatpush2.msra.mxu0 0.0
        %3493 = vmatprep.subr.mxu0 0.0
        %3494 = vmatpush2.msra.mxu0 0.0
        %3495 = vmatprep.subr.mxu0 0.0
        %3496 = vmatpush2.msra.mxu0 0.0
        %3497 = vmatprep.subr.mxu0 0.0
        %3498 = vmatpush2.msra.mxu0 0.0
        %3499 = vmatprep.subr.mxu0 0.0
        %3500 = vmatpush2.msra.mxu0 0.0
        %3501 = vmatprep.subr.mxu0 0.0
        %3502 = vmatpush2.msra.mxu0 0.0
        %3503 = vmatprep.subr.mxu0 0.0
        %3504 = vmatpush2.msra.mxu0 0.0
        %3505 = vmatprep.subr.mxu0 0.0
        %3506 = vmatpush2.msra.mxu0 0.0
        %3507 = vmatprep.subr.mxu0 0.0
        %3508 = vmatpush2.msra.mxu0 0.0
        %3509 = vmatprep.subr.mxu0 0.0
        %3510 = vmatpush2.msra.mxu0 0.0
        %3511 = vmatprep.subr.mxu0 0.0
        %3512 = vmatpush2.msra.mxu0 0.0
        %3513 = vmatprep.subr.mxu0 0.0
        %3514 = vmatpush2.msra.mxu0 0.0
        %3515 = vmatprep.mubr.f32.mxu0 0.0
        %3516 = vmatmul.mubr.f32.gmra.mxu0 %v3446
        %v3517 = vpop.f32.mrf.mxu0
        %v3518 = vadd.f32 0.0, %v3517
        %v3519 = vpop.f32.mrf.mxu0
        %3520 = vmatprep.mubr.f32.mxu0 0.0
        %3521 = vmatmul.mubr.f32.gmra.mxu0 %v3449
        %v3522 = vpop.f32.mrf.mxu0
        %v3523 = vadd.f32 0.0, %v3522
        %v3524 = vpop.f32.mrf.mxu0
        %3525 = vdwg.mxu0
        %s3526 = scalar_lea.vmem %s6, 24
        %v3527 = vld [vmem:[%s3526] sm:$0xf]
        %v3529 = vsel %vm606, %v3431, 0
        %v3532 = vsel %vm606, %v3436, 0
        %v3535 = vsel %vm1004, %v3527, 0
        %3537 = vmatprep.subr.mxu0 0.0
        %3538 = vmatpush1.msra.mxu0 0.0
        %3539 = vmatprep.subr.mxu0 0.0
        %3540 = vmatpush1.msra.mxu0 0.0
        %3541 = vmatprep.subr.mxu0 0.0
        %3542 = vmatpush1.msra.mxu0 0.0
        %3543 = vmatprep.subr.mxu0 0.0
        %3544 = vmatpush1.msra.mxu0 0.0
        %3545 = vmatprep.subr.mxu0 0.0
        %3546 = vmatpush1.msra.mxu0 0.0
        %3547 = vmatprep.subr.mxu0 0.0
        %3548 = vmatpush1.msra.mxu0 0.0
        %3549 = vmatprep.subr.mxu0 0.0
        %3550 = vmatpush1.msra.mxu0 0.0
        %3551 = vmatprep.subr.mxu0 0.0
        %3552 = vmatpush1.msra.mxu0 0.0
        %3553 = vmatprep.subr.mxu0 0.0
        %3554 = vmatpush1.msra.mxu0 0.0
        %3555 = vmatprep.subr.mxu0 0.0
        %3556 = vmatpush1.msra.mxu0 0.0
        %3557 = vmatprep.subr.mxu0 0.0
        %3558 = vmatpush1.msra.mxu0 0.0
        %3559 = vmatprep.subr.mxu0 0.0
        %3560 = vmatpush1.msra.mxu0 0.0
        %3561 = vmatprep.subr.mxu0 0.0
        %3562 = vmatpush1.msra.mxu0 0.0
        %3563 = vmatprep.subr.mxu0 0.0
        %3564 = vmatpush1.msra.mxu0 0.0
        %3565 = vmatprep.subr.mxu0 0.0
        %3566 = vmatpush1.msra.mxu0 0.0
        %3567 = vmatprep.subr.mxu0 0.0
        %3568 = vmatpush1.msra.mxu0 %v3535
        %3569 = vmatprep.subr.mxu0 0.0
        %3570 = vmatpush2.msra.mxu0 0.0
        %3571 = vmatprep.subr.mxu0 0.0
        %3572 = vmatpush2.msra.mxu0 0.0
        %3573 = vmatprep.subr.mxu0 0.0
        %3574 = vmatpush2.msra.mxu0 0.0
        %3575 = vmatprep.subr.mxu0 0.0
        %3576 = vmatpush2.msra.mxu0 0.0
        %3577 = vmatprep.subr.mxu0 0.0
        %3578 = vmatpush2.msra.mxu0 0.0
        %3579 = vmatprep.subr.mxu0 0.0
        %3580 = vmatpush2.msra.mxu0 0.0
        %3581 = vmatprep.subr.mxu0 0.0
        %3582 = vmatpush2.msra.mxu0 0.0
        %3583 = vmatprep.subr.mxu0 0.0
        %3584 = vmatpush2.msra.mxu0 0.0
        %3585 = vmatprep.subr.mxu0 0.0
        %3586 = vmatpush2.msra.mxu0 0.0
        %3587 = vmatprep.subr.mxu0 0.0
        %3588 = vmatpush2.msra.mxu0 0.0
        %3589 = vmatprep.subr.mxu0 0.0
        %3590 = vmatpush2.msra.mxu0 0.0
        %3591 = vmatprep.subr.mxu0 0.0
        %3592 = vmatpush2.msra.mxu0 0.0
        %3593 = vmatprep.subr.mxu0 0.0
        %3594 = vmatpush2.msra.mxu0 0.0
        %3595 = vmatprep.subr.mxu0 0.0
        %3596 = vmatpush2.msra.mxu0 0.0
        %3597 = vmatprep.subr.mxu0 0.0
        %3598 = vmatpush2.msra.mxu0 0.0
        %3599 = vmatprep.subr.mxu0 0.0
        %3600 = vmatpush2.msra.mxu0 0.0
        %3601 = vmatprep.mubr.f32.mxu0 0.0
        %3602 = vmatmul.mubr.f32.gmra.mxu0 %v3529
        %v3603 = vpop.f32.mrf.mxu0
        %v3604 = vadd.f32 0.0, %v3603
        %v3605 = vpop.f32.mrf.mxu0
        %3606 = vmatprep.mubr.f32.mxu0 0.0
        %3607 = vmatmul.mubr.f32.gmra.mxu0 %v3532
        %v3608 = vpop.f32.mrf.mxu0
        %v3609 = vadd.f32 0.0, %v3608
        %v3610 = vpop.f32.mrf.mxu0
        %3611 = vdwg.mxu0
        %v3612 = vadd.f32 %v2855, %v3604
        %v3613 = vadd.f32 %v2856, %v3609
        %s3614 = scalar_lea.vmem %s6, 28
        %v3615 = vld [vmem:[%s3614] sm:$0xf]
        %v3617 = vsel %vm606, %v3518, 0
        %v3620 = vsel %vm606, %v3523, 0
        %v3623 = vsel %vm1004, %v3615, 0
        %3625 = vmatprep.subr.mxu0 0.0
        %3626 = vmatpush1.msra.mxu0 0.0
        %3627 = vmatprep.subr.mxu0 0.0
        %3628 = vmatpush1.msra.mxu0 0.0
        %3629 = vmatprep.subr.mxu0 0.0
        %3630 = vmatpush1.msra.mxu0 0.0
        %3631 = vmatprep.subr.mxu0 0.0
        %3632 = vmatpush1.msra.mxu0 0.0
        %3633 = vmatprep.subr.mxu0 0.0
        %3634 = vmatpush1.msra.mxu0 0.0
        %3635 = vmatprep.subr.mxu0 0.0
        %3636 = vmatpush1.msra.mxu0 0.0
        %3637 = vmatprep.subr.mxu0 0.0
        %3638 = vmatpush1.msra.mxu0 0.0
        %3639 = vmatprep.subr.mxu0 0.0
        %3640 = vmatpush1.msra.mxu0 0.0
        %3641 = vmatprep.subr.mxu0 0.0
        %3642 = vmatpush1.msra.mxu0 0.0
        %3643 = vmatprep.subr.mxu0 0.0
        %3644 = vmatpush1.msra.mxu0 0.0
        %3645 = vmatprep.subr.mxu0 0.0
        %3646 = vmatpush1.msra.mxu0 0.0
        %3647 = vmatprep.subr.mxu0 0.0
        %3648 = vmatpush1.msra.mxu0 0.0
        %3649 = vmatprep.subr.mxu0 0.0
        %3650 = vmatpush1.msra.mxu0 0.0
        %3651 = vmatprep.subr.mxu0 0.0
        %3652 = vmatpush1.msra.mxu0 0.0
        %3653 = vmatprep.subr.mxu0 0.0
        %3654 = vmatpush1.msra.mxu0 0.0
        %3655 = vmatprep.subr.mxu0 0.0
        %3656 = vmatpush1.msra.mxu0 %v3623
        %3657 = vmatprep.subr.mxu0 0.0
        %3658 = vmatpush2.msra.mxu0 0.0
        %3659 = vmatprep.subr.mxu0 0.0
        %3660 = vmatpush2.msra.mxu0 0.0
        %3661 = vmatprep.subr.mxu0 0.0
        %3662 = vmatpush2.msra.mxu0 0.0
        %3663 = vmatprep.subr.mxu0 0.0
        %3664 = vmatpush2.msra.mxu0 0.0
        %3665 = vmatprep.subr.mxu0 0.0
        %3666 = vmatpush2.msra.mxu0 0.0
        %3667 = vmatprep.subr.mxu0 0.0
        %3668 = vmatpush2.msra.mxu0 0.0
        %3669 = vmatprep.subr.mxu0 0.0
        %3670 = vmatpush2.msra.mxu0 0.0
        %3671 = vmatprep.subr.mxu0 0.0
        %3672 = vmatpush2.msra.mxu0 0.0
        %3673 = vmatprep.subr.mxu0 0.0
        %3674 = vmatpush2.msra.mxu0 0.0
        %3675 = vmatprep.subr.mxu0 0.0
        %3676 = vmatpush2.msra.mxu0 0.0
        %3677 = vmatprep.subr.mxu0 0.0
        %3678 = vmatpush2.msra.mxu0 0.0
        %3679 = vmatprep.subr.mxu0 0.0
        %3680 = vmatpush2.msra.mxu0 0.0
        %3681 = vmatprep.subr.mxu0 0.0
        %3682 = vmatpush2.msra.mxu0 0.0
        %3683 = vmatprep.subr.mxu0 0.0
        %3684 = vmatpush2.msra.mxu0 0.0
        %3685 = vmatprep.subr.mxu0 0.0
        %3686 = vmatpush2.msra.mxu0 0.0
        %3687 = vmatprep.subr.mxu0 0.0
        %3688 = vmatpush2.msra.mxu0 0.0
        %3689 = vmatprep.mubr.f32.mxu0 0.0
        %3690 = vmatmul.mubr.f32.gmra.mxu0 %v3617
        %v3691 = vpop.f32.mrf.mxu0
        %v3692 = vadd.f32 0.0, %v3691
        %v3693 = vpop.f32.mrf.mxu0
        %3694 = vmatprep.mubr.f32.mxu0 0.0
        %3695 = vmatmul.mubr.f32.gmra.mxu0 %v3620
        %v3696 = vpop.f32.mrf.mxu0
        %v3697 = vadd.f32 0.0, %v3696
        %v3698 = vpop.f32.mrf.mxu0
        %3699 = vdwg.mxu0
        %v3700 = vadd.f32 %v3612, %v3692
        %v3701 = vadd.f32 %v3613, %v3697
        %v3702 = vld [vmem:[%s7] sm:$0x1]
        %v3704 = vlaneseq
        %v3705 = vshrl.u32 %v3704, 7
        %v3706 = vsub.s32 0, %v3705
        %v3707 = vrot.slane %v3702, %v3706
        %v3709 = vadd.f32 %v3700, %v3707
        %v3710 = vadd.f32 %v3701, %v3707
        %3711 = vst.msk [vmem:[%s313] sm:$0xff] %vm332, %v3709
        %3712 = vst.msk [vmem:[%s313 + $0x8] sm:$0xff] %vm332, %v3710
        %s3713 = sand.u32 %s204, 1
        %s3714 = scalar_lea.sflag [#allocation4], %s3713
        %s3715 = sand.u32 %s204, 1
        %s3716 = smul.addr %s3715, 16
        %s3717 = scalar_lea.vmem [#allocation5], %s3716
        // Predicated region
        $region57: #{mosa_forward.1} parent=51 // pred_check
          %p3718 = pneg %p214
        $region58: #{mosa_forward.1} parent=51 // pred_check_branch
          %3720 = sbr.rel (%p3718) target = $region60
        $region59: #{mosa_forward.1} parent=51 // pred_region
          %s3722 = ssub.s32 256, 256
          %3723 = vsyncadd %s3714, %s3722
          %s3724 = smul.addr %s23, 2
          %s3725 = smul.addr %s3724, 128
          %s3726 = scalar_lea.hbm %s8, %s3725
          %s3727 = sshll.u32 %s3717, 4
          %s3728 = int_to_ptr.vmem [resolvable:$true] %s3727
          %3733 = dma.vmem_to_hbm [thread:$0]  %s3728, 256, %s3726, %s3714, 128, 128, 8
        $region60: #{mosa_forward.1} parent=51 // pred_fallthru
          _
      $region52: #{mosa_forward.1} parent=5 // pred_fallthru
        _
      %p3734 = scmp.le.s32.totalorder 2, %s18
      // Predicated region
      $region61: #{mosa_forward.1} parent=5 // pred_check
        %p3735 = pneg %p3734
      $region62: #{mosa_forward.1} parent=5 // pred_check_branch
        %3737 = sbr.rel (%p3735) target = $region64
      $region63: #{mosa_forward.1} parent=5 // pred_region
        %s3738 = ssub.s32 %s18, 2
        // Predicated region
        $region65: #{mosa_forward.1} parent=63 // pred_check
          %p3739 = pneg %p220
        $region66: #{mosa_forward.1} parent=63 // pred_check_branch
          %3741 = sbr.rel (%p3739) target = $region68
        $region67: #{mosa_forward.1} parent=63 // pred_region
          %s3742 = sand.u32 %s205, 1
          %s3743 = scalar_lea.sflag [#allocation4], %s3742
          %s3744 = sand.u32 %s205, 1
          %s3745 = smul.addr %s3744, 16
          %s3746 = scalar_lea.vmem [#allocation5], %s3745
          %3747 = dma.done %s3743, 256
        $region68: #{mosa_forward.1} parent=63 // pred_fallthru
          _
      $region64: #{mosa_forward.1} parent=5 // pred_fallthru
        _
    $region6: #{mosa_forward.1} parent=1 // loop_footer
      %s22 = sadd.s32 1, %s18
    $region7: #{mosa_forward.1} parent=1 // loop_footer_branch
      %17 = sbr.rel target = $region3
    $region8: #{mosa_forward.1} parent=1 // loop_exit
      _
    %3748 = vsyncpa [#allocation3], 1
    %s3749 = scalar_lea.sflag [#allocation3], 1
    %3750 = vsyncpa %s3749, 1
    %3751 = vsyncpa [#allocation4], 1
    %s3752 = scalar_lea.sflag [#allocation4], 1
    %3753 = vsyncpa %s3752, 1

</llo_original>
